<compile_context>
chip_gen: v7x
topology: tpu7x:2x2x1
jax: 0.10.0
libtpu: 0.0.40
codegen_flags: <defaults>
</compile_context>

<pallas_src>
import jax
import jax.numpy as jnp
from jax import lax
from jax.experimental import pallas as pl
from jax.experimental.pallas import tpu as pltpu

VOCAB_SIZE = 65          # stand-in for len(set(text)) (synthetic, deterministic)
N_EMBD = 128
BLOCK_SIZE = 32
N_HEAD = 4
N_LAYER = 4
HEAD_SIZE = N_EMBD // N_HEAD
HALF = HEAD_SIZE // 2
LN_EPS = 1e-5
VOCAB_PAD = 128          # lane-dense LM-head output; sliced back to VOCAB_SIZE in glue


def _layernorm(x, g, b):
    mu = jnp.mean(x, axis=-1, keepdims=True)
    var = jnp.mean((x - mu) ** 2, axis=-1, keepdims=True)
    return (x - mu) * lax.rsqrt(var + LN_EPS) * g + b


def _erf(x):
    # Abramowitz & Stegun 7.1.26 polynomial (|err| < 1.5e-7); avoids relying on a
    # native erf lowering inside Mosaic while matching torch.nn.GELU() (exact erf).
    a1, a2, a3, a4, a5 = 0.254829592, -0.284496736, 1.421413741, -1.453152027, 1.061405429
    p = 0.3275911
    sgn = jnp.where(x >= 0.0, 1.0, -1.0)
    z = jnp.abs(x)
    t = 1.0 / (1.0 + p * z)
    poly = ((((a5 * t + a4) * t + a3) * t + a2) * t + a1) * t
    return sgn * (1.0 - poly * jnp.exp(-z * z))


def _gelu_exact(x):
    return 0.5 * x * (1.0 + _erf(x * 0.7071067811865476))


def _fused_forward_kernel(x0_ref, cos_ref, sin_ref, mask_ref,
                          wqkv_ref, wp_ref, bp_ref,
                          ln1g_ref, ln1b_ref, ln2g_ref, ln2b_ref,
                          w1_ref, b1_ref, w2_ref, b2_ref,
                          lnfg_ref, lnfb_ref, wh_ref, bh_ref,
                          out_ref):
    """Whole forward for one batch-block: (Bblk,T,C) embeddings -> 4 blocks -> LN -> head."""
    bblk, T, C = x0_ref.shape
    M = bblk * T

    x = x0_ref[...].reshape(M, C)                                    # residual stream, f32

    # Hoisted, shared by all layers (computed once per grid step).
    cos_m = jnp.broadcast_to(cos_ref[...][None], (bblk, T, C)).reshape(M, C)
    sin_m = jnp.broadcast_to(sin_ref[...][None], (bblk, T, C)).reshape(M, C)
    mask_b = jnp.broadcast_to(mask_ref[...][None], (bblk, T, T))     # additive 0 / -1e30

    def layer_body(l, x):
        # ---------------- self-attention branch ----------------
        xl = _layernorm(x, ln1g_ref[l], ln1b_ref[l])                 # (M, C) f32
        # One lane-dense fused projection: [q | rot(q) | k | rot(k) | v], width 5*128.
        proj = jnp.dot(xl.astype(jnp.bfloat16), wqkv_ref[l],
                       preferred_element_type=jnp.float32)           # (M, 5C) f32
        q = proj[:, 0 * C:1 * C]
        qp = proj[:, 1 * C:2 * C]
        k = proj[:, 2 * C:3 * C]
        kp = proj[:, 3 * C:4 * C]
        v = proj[:, 4 * C:5 * C]

        # Full-width RoPE (rotate-half + 1/sqrt(hs) already folded into the weights).
        q_rot = (q * cos_m + qp * sin_m).astype(jnp.bfloat16)        # (M, C)
        k_rot = (k * cos_m + kp * sin_m).astype(jnp.bfloat16)
        v_bf = v.astype(jnp.bfloat16)

        # Per-head scores / softmax / PV (static lane slices; no minor-dim transposes).
        heads = []
        for h in range(N_HEAD):
            sl = slice(h * HEAD_SIZE, (h + 1) * HEAD_SIZE)
            qh = q_rot[:, sl].reshape(bblk, T, HEAD_SIZE)
            kh = k_rot[:, sl].reshape(bblk, T, HEAD_SIZE)
            vh = v_bf[:, sl].reshape(bblk, T, HEAD_SIZE)
            s = jnp.einsum('bqd,bkd->bqk', qh, kh,
                           preferred_element_type=jnp.float32) + mask_b
            s = s - jnp.max(s, axis=-1, keepdims=True)
            p = jnp.exp(s)
            p = p * pl.reciprocal(jnp.sum(p, axis=-1, keepdims=True), approx=True)
            oh = jnp.einsum('bqk,bkd->bqd', p.astype(jnp.bfloat16), vh,
                            preferred_element_type=jnp.float32)      # (bblk, T, hs)
            heads.append(oh.reshape(M, HEAD_SIZE))
        o_cat = jnp.concatenate(heads, axis=-1)                      # (M, C) head-concat

        attn = jnp.dot(o_cat.astype(jnp.bfloat16), wp_ref[l],
                       preferred_element_type=jnp.float32) + bp_ref[l]
        x = x + attn

        # ---------------- feed-forward branch ----------------
        xl2 = _layernorm(x, ln2g_ref[l], ln2b_ref[l])
        h1 = jnp.dot(xl2.astype(jnp.bfloat16), w1_ref[l],
                     preferred_element_type=jnp.float32) + b1_ref[l]
        h1 = _gelu_exact(h1)
        h2 = jnp.dot(h1.astype(jnp.bfloat16), w2_ref[l],
                     preferred_element_type=jnp.float32) + b2_ref[l]
        return x + h2

    x = lax.fori_loop(0, N_LAYER, layer_body, x)

    # ---- final LayerNorm + LM head (vocab padded to 128 lanes) ----
    xf = _layernorm(x, lnfg_ref[...], lnfb_ref[...])
    logits = jnp.dot(xf.astype(jnp.bfloat16), wh_ref[...],
                     preferred_element_type=jnp.float32) + bh_ref[...]
    out_ref[...] = logits.reshape(bblk, T, VOCAB_PAD).astype(out_ref.dtype)


def precompute_rope_tables(T, theta=10000.0):
    """cos/sin tables in the permuted (real-half | imag-half) layout, tiled per head to (T, C)."""
    inv = 1.0 / (theta ** (jnp.arange(0, HEAD_SIZE, 2)[:HALF].astype(jnp.float32) / HEAD_SIZE))
    t = jnp.arange(T, dtype=jnp.float32)
    freqs = jnp.outer(t, inv)                                         # (T, hs/2)
    cos = jnp.concatenate([jnp.cos(freqs), jnp.cos(freqs)], axis=-1)  # (T, hs)
    sin = jnp.concatenate([jnp.sin(freqs), jnp.sin(freqs)], axis=-1)
    return jnp.tile(cos, (1, N_HEAD)), jnp.tile(sin, (1, N_HEAD))     # (T, C)


def init_params(key):
    """Deterministic synthetic parameters matching the PyTorch module's shapes,
    pre-transformed into the kernel-ready layout (fused, stacked over layers, bf16)."""
    def nrm(k, shape, scale=0.02):
        return scale * jax.random.normal(k, shape, dtype=jnp.float32)

    C, Hd, NH, hs, half = N_EMBD, 4 * N_EMBD, N_HEAD, HEAD_SIZE, HALF
    keys = iter(jax.random.split(key, 4 + 9 * N_LAYER))

    # per-head even/odd -> (real-half | imag-half) permutation of Q/K output columns
    perm_head = jnp.concatenate([jnp.arange(0, hs, 2), jnp.arange(1, hs, 2)])
    perm = (jnp.arange(NH)[:, None] * hs + perm_head[None, :]).reshape(-1)

    def rot_partner(w_io):
        # partner: out[:half] = -in[half:], out[half:] = +in[:half]  (per head)
        w4 = w_io.reshape(C, NH, hs)
        r = jnp.concatenate([-w4[:, :, half:], w4[:, :, :half]], axis=-1)
        return r.reshape(C, C)

    tok = nrm(next(keys), (VOCAB_SIZE, C))
    pos = nrm(next(keys), (BLOCK_SIZE, C))
    wh = nrm(next(keys), (VOCAB_SIZE, C))        # torch Linear (out, in)
    bh = nrm(next(keys), (VOCAB_SIZE,))

    wqkv_l, wp_l, bp_l, w1_l, b1_l, w2_l, b2_l = [], [], [], [], [], [], []
    for _ in range(N_LAYER):
        wq = nrm(next(keys), (C, C)); wk = nrm(next(keys), (C, C)); wv = nrm(next(keys), (C, C))
        wp = nrm(next(keys), (C, C)); bp = nrm(next(keys), (C,))
        w1 = nrm(next(keys), (Hd, C)); b1 = nrm(next(keys), (Hd,))
        w2 = nrm(next(keys), (C, Hd)); b2 = nrm(next(keys), (C,))

        wq_io = wq.T[:, perm] * (hs ** -0.5)     # (in,out), permuted, scale folded into Q
        wk_io = wk.T[:, perm]
        wv_io = wv.T
        wqkv_l.append(jnp.concatenate(
            [wq_io, rot_partner(wq_io), wk_io, rot_partner(wk_io), wv_io], axis=1))  # (C, 5C)
        wp_l.append(wp.T)                        # (H*hs, C)
        bp_l.append(bp.reshape(1, C))
        w1_l.append(w1.T); b1_l.append(b1.reshape(1, Hd))
        w2_l.append(w2.T); b2_l.append(b2.reshape(1, C))

    params = {
        'tok': tok,
        'pos': pos,
        'wqkv': jnp.stack(wqkv_l).astype(jnp.bfloat16),
        'wp': jnp.stack(wp_l).astype(jnp.bfloat16),
        'bp': jnp.stack(bp_l),
        'ln1g': jnp.ones((N_LAYER, 1, C), jnp.float32),
        'ln1b': jnp.zeros((N_LAYER, 1, C), jnp.float32),
        'ln2g': jnp.ones((N_LAYER, 1, C), jnp.float32),
        'ln2b': jnp.zeros((N_LAYER, 1, C), jnp.float32),
        'w1': jnp.stack(w1_l).astype(jnp.bfloat16), 'b1': jnp.stack(b1_l),
        'w2': jnp.stack(w2_l).astype(jnp.bfloat16), 'b2': jnp.stack(b2_l),
        'lnfg': jnp.ones((1, C), jnp.float32),
        'lnfb': jnp.zeros((1, C), jnp.float32),
        'wh': jnp.zeros((C, VOCAB_PAD), jnp.float32).at[:, :VOCAB_SIZE].set(wh.T).astype(jnp.bfloat16),
        'bh': jnp.zeros((1, VOCAB_PAD), jnp.float32).at[0, :VOCAB_SIZE].set(bh),
    }
    return params


def transformer_lm_forward(idx, params, targets=None):
    B, T = idx.shape
    C = N_EMBD

    # token + position embedding in plain JAX (cheap gather; ~T*C f32 per batch element)
    x0 = jnp.take(params['tok'], idx, axis=0) + params['pos'][:T][None, :, :]    # (B,T,C) f32

    cosf, sinf = precompute_rope_tables(T)
    row = jnp.arange(T)[:, None]
    col = jnp.arange(T)[None, :]
    mask = jnp.where(col <= row, 0.0, -1e30).astype(jnp.float32)                 # (T,T)

    # Fold several batch elements per grid step, but keep >= 2 grid steps when B >= 2
    # so the batch axis can shard across TensorCores (v7x).
    bblk = max(1, min(8, (B + 1) // 2))
    grid_b = pl.cdiv(B, bblk)
    B_pad = grid_b * bblk
    if B_pad != B:
        x0 = jnp.pad(x0, ((0, B_pad - B), (0, 0), (0, 0)))

    weight_args = (cosf, sinf, mask,
                   params['wqkv'], params['wp'], params['bp'],
                   params['ln1g'], params['ln1b'], params['ln2g'], params['ln2b'],
                   params['w1'], params['b1'], params['w2'], params['b2'],
                   params['lnfg'], params['lnfb'], params['wh'], params['bh'])

    def full_spec(a):
        n = a.ndim
        return pl.BlockSpec(a.shape, lambda b, n=n: (0,) * n)   # whole array, resident in VMEM

    in_specs = [pl.BlockSpec((bblk, T, C), lambda b: (b, 0, 0))] + [full_spec(a) for a in weight_args]

    logits_pad = pl.pallas_call(
        _fused_forward_kernel,
        grid=(grid_b,),
        out_shape=jax.ShapeDtypeStruct((B_pad, T, VOCAB_PAD), jnp.float32),
        in_specs=in_specs,
        out_specs=pl.BlockSpec((bblk, T, VOCAB_PAD), lambda b: (b, 0, 0)),
        compiler_params=pltpu.CompilerParams(dimension_semantics=("parallel",)),
    )(x0, *weight_args)

    logits = logits_pad[:B, :, :VOCAB_SIZE]                           # (B, T, V)

    loss = None
    if targets is not None:
        # cross-entropy glue (only when targets supplied), matches F.cross_entropy
        lp = jax.nn.log_softmax(logits.reshape(B * T, VOCAB_SIZE), axis=-1)
        loss = -jnp.mean(jnp.take_along_axis(lp, targets.reshape(B * T, 1), axis=-1))
    return logits, loss


if __name__ == "__main__":
    key = jax.random.PRNGKey(0)
    pkey, ikey, tkey = jax.random.split(key, 3)
    params = init_params(pkey)

    B, T = 2, 8
    idx = jax.random.randint(ikey, (B, T), 0, VOCAB_SIZE, dtype=jnp.int32)
    targets = jax.random.randint(tkey, (B, T), 0, VOCAB_SIZE, dtype=jnp.int32)

    fwd = jax.jit(transformer_lm_forward)

    logits, _ = fwd(idx, params)
    logits = jax.block_until_ready(logits)
    assert logits.shape == (B, T, VOCAB_SIZE)
    assert bool(jnp.all(jnp.isfinite(logits)))

    _, loss = fwd(idx, params, targets)
    jax.block_until_ready(loss)

    # TODO(synk): autoregressive `generate` (torch.multinomial sampling loop) is host-side
    # control flow and is intentionally not implemented as a kernel.
    print("KERNEL_OK")
</pallas_src>

<mosaic_0001>
module attributes {stable_mosaic.version = 11 : i64} {
  func.func @_fused_forward_kernel(%arg0: i32, %arg1: memref<1x8x128xf32, #tpu.memory_space<vmem>>, %arg2: memref<8x128xf32, #tpu.memory_space<vmem>>, %arg3: memref<8x128xf32, #tpu.memory_space<vmem>>, %arg4: memref<8x8xf32, #tpu.memory_space<vmem>>, %arg5: memref<4x128x640xbf16, #tpu.memory_space<vmem>>, %arg6: memref<4x128x128xbf16, #tpu.memory_space<vmem>>, %arg7: memref<4x1x128xf32, #tpu.memory_space<vmem>>, %arg8: memref<4x1x128xf32, #tpu.memory_space<vmem>>, %arg9: memref<4x1x128xf32, #tpu.memory_space<vmem>>, %arg10: memref<4x1x128xf32, #tpu.memory_space<vmem>>, %arg11: memref<4x1x128xf32, #tpu.memory_space<vmem>>, %arg12: memref<4x128x512xbf16, #tpu.memory_space<vmem>>, %arg13: memref<4x1x512xf32, #tpu.memory_space<vmem>>, %arg14: memref<4x512x128xbf16, #tpu.memory_space<vmem>>, %arg15: memref<4x1x128xf32, #tpu.memory_space<vmem>>, %arg16: memref<1x128xf32, #tpu.memory_space<vmem>>, %arg17: memref<1x128xf32, #tpu.memory_space<vmem>>, %arg18: memref<128x128xbf16, #tpu.memory_space<vmem>>, %arg19: memref<1x128xf32, #tpu.memory_space<vmem>>, %arg20: memref<1x8x128xf32, #tpu.memory_space<vmem>>) attributes {dimension_semantics = [#tpu.dimension_semantics<parallel>], iteration_bounds = array<i64: 2>, scalar_prefetch = 0 : i64, scratch_operands = 0 : i64, tpu.core_type = #tpu.core_type<tc>, window_params = [{transform_indices = @transform_0, window_bounds = array<i64: 1, 8, 128>}, {pipeline_mode = #tpu.pipeline_mode<synchronous>, transform_indices = @transform_1, window_bounds = array<i64: 8, 128>}, {pipeline_mode = #tpu.pipeline_mode<synchronous>, transform_indices = @transform_2, window_bounds = array<i64: 8, 128>}, {pipeline_mode = #tpu.pipeline_mode<synchronous>, transform_indices = @transform_3, window_bounds = array<i64: 8, 8>}, {pipeline_mode = #tpu.pipeline_mode<synchronous>, transform_indices = @transform_4, window_bounds = array<i64: 4, 128, 640>}, {pipeline_mode = #tpu.pipeline_mode<synchronous>, transform_indices = @transform_5, window_bounds = array<i64: 4, 128, 128>}, {pipeline_mode = #tpu.pipeline_mode<synchronous>, transform_indices = @transform_6, window_bounds = array<i64: 4, 1, 128>}, {pipeline_mode = #tpu.pipeline_mode<synchronous>, transform_indices = @transform_7, window_bounds = array<i64: 4, 1, 128>}, {pipeline_mode = #tpu.pipeline_mode<synchronous>, transform_indices = @transform_8, window_bounds = array<i64: 4, 1, 128>}, {pipeline_mode = #tpu.pipeline_mode<synchronous>, transform_indices = @transform_9, window_bounds = array<i64: 4, 1, 128>}, {pipeline_mode = #tpu.pipeline_mode<synchronous>, transform_indices = @transform_10, window_bounds = array<i64: 4, 1, 128>}, {pipeline_mode = #tpu.pipeline_mode<synchronous>, transform_indices = @transform_11, window_bounds = array<i64: 4, 128, 512>}, {pipeline_mode = #tpu.pipeline_mode<synchronous>, transform_indices = @transform_12, window_bounds = array<i64: 4, 1, 512>}, {pipeline_mode = #tpu.pipeline_mode<synchronous>, transform_indices = @transform_13, window_bounds = array<i64: 4, 512, 128>}, {pipeline_mode = #tpu.pipeline_mode<synchronous>, transform_indices = @transform_14, window_bounds = array<i64: 4, 1, 128>}, {pipeline_mode = #tpu.pipeline_mode<synchronous>, transform_indices = @transform_15, window_bounds = array<i64: 1, 128>}, {pipeline_mode = #tpu.pipeline_mode<synchronous>, transform_indices = @transform_16, window_bounds = array<i64: 1, 128>}, {pipeline_mode = #tpu.pipeline_mode<synchronous>, transform_indices = @transform_17, window_bounds = array<i64: 128, 128>}, {pipeline_mode = #tpu.pipeline_mode<synchronous>, transform_indices = @transform_18, window_bounds = array<i64: 1, 128>}, {transform_indices = @transform_19, window_bounds = array<i64: 1, 8, 128>}]} {
    %c0 = arith.constant 0 : index
    %c0_0 = arith.constant 0 : index
    %c0_1 = arith.constant 0 : index
    %0 = vector.load %arg1[%c0, %c0_0, %c0_1] : memref<1x8x128xf32, #tpu.memory_space<vmem>>, vector<1x8x128xf32>
    %1 = vector.shape_cast %0 : vector<1x8x128xf32> to vector<8x128xf32>
    %c0_2 = arith.constant 0 : index
    %c0_3 = arith.constant 0 : index
    %2 = vector.load %arg2[%c0_2, %c0_3] : memref<8x128xf32, #tpu.memory_space<vmem>>, vector<8x128xf32>
    %3 = vector.shape_cast %2 : vector<8x128xf32> to vector<1x8x128xf32>
    %4 = vector.shape_cast %3 : vector<1x8x128xf32> to vector<8x128xf32>
    %c0_4 = arith.constant 0 : index
    %c0_5 = arith.constant 0 : index
    %5 = vector.load %arg3[%c0_4, %c0_5] : memref<8x128xf32, #tpu.memory_space<vmem>>, vector<8x128xf32>
    %6 = vector.shape_cast %5 : vector<8x128xf32> to vector<1x8x128xf32>
    %7 = vector.shape_cast %6 : vector<1x8x128xf32> to vector<8x128xf32>
    %c0_6 = arith.constant 0 : index
    %c0_7 = arith.constant 0 : index
    %8 = vector.load %arg4[%c0_6, %c0_7] : memref<8x8xf32, #tpu.memory_space<vmem>>, vector<8x8xf32>
    %9 = vector.shape_cast %8 : vector<8x8xf32> to vector<1x8x8xf32>
    %c0_i32 = arith.constant 0 : i32
    %c4_i32 = arith.constant 4 : i32
    %10 = arith.addi %c0_i32, %c4_i32 : i32
    %c1_i32 = arith.constant 1 : i32
    %11 = scf.for %arg21 = %c0_i32 to %10 step %c1_i32 iter_args(%arg22 = %1) -> (vector<8x128xf32>)  : i32 {
      %44 = arith.index_cast %arg21 : i32 to index
      %c0_25 = arith.constant 0 : index
      %c0_26 = arith.constant 0 : index
      %45 = vector.load %arg8[%44, %c0_25, %c0_26] : memref<4x1x128xf32, #tpu.memory_space<vmem>>, vector<1x1x128xf32>
      %46 = vector.shape_cast %45 : vector<1x1x128xf32> to vector<1x128xf32>
      %47 = arith.index_cast %arg21 : i32 to index
      %c0_27 = arith.constant 0 : index
      %c0_28 = arith.constant 0 : index
      %48 = vector.load %arg9[%47, %c0_27, %c0_28] : memref<4x1x128xf32, #tpu.memory_space<vmem>>, vector<1x1x128xf32>
      %49 = vector.shape_cast %48 : vector<1x1x128xf32> to vector<1x128xf32>
      %cst_29 = arith.constant dense<0.000000e+00> : vector<8xf32>
      %50 = vector.multi_reduction <add>, %arg22, %cst_29 [1] : vector<8x128xf32> to vector<8xf32>
      %51 = vector.shape_cast %50 : vector<8xf32> to vector<8x1xf32>
      %cst_30 = arith.constant 1.280000e+02 : f32
      %52 = vector.broadcast %cst_30 : f32 to vector<8x1xf32>
      %53 = arith.divf %51, %52 : vector<8x1xf32>
      %54 = vector.broadcast %53 : vector<8x1xf32> to vector<8x128xf32>
      %55 = arith.subf %arg22, %54 : vector<8x128xf32>
      %56 = arith.mulf %55, %55 : vector<8x128xf32>
      %cst_31 = arith.constant dense<0.000000e+00> : vector<8xf32>
      %57 = vector.multi_reduction <add>, %56, %cst_31 [1] : vector<8x128xf32> to vector<8xf32>
      %58 = vector.shape_cast %57 : vector<8xf32> to vector<8x1xf32>
      %cst_32 = arith.constant 1.280000e+02 : f32
      %59 = vector.broadcast %cst_32 : f32 to vector<8x1xf32>
      %60 = arith.divf %58, %59 : vector<8x1xf32>
      %61 = vector.broadcast %53 : vector<8x1xf32> to vector<8x128xf32>
      %62 = arith.subf %arg22, %61 : vector<8x128xf32>
      %cst_33 = arith.constant 9.99999974E-6 : f32
      %63 = vector.broadcast %cst_33 : f32 to vector<8x1xf32>
      %64 = arith.addf %60, %63 : vector<8x1xf32>
      %65 = math.rsqrt %64 : vector<8x1xf32>
      %66 = vector.broadcast %65 : vector<8x1xf32> to vector<8x128xf32>
      %67 = arith.mulf %62, %66 : vector<8x128xf32>
      %68 = vector.broadcast %46 : vector<1x128xf32> to vector<8x128xf32>
      %69 = arith.mulf %67, %68 : vector<8x128xf32>
      %70 = vector.broadcast %49 : vector<1x128xf32> to vector<8x128xf32>
      %71 = arith.addf %69, %70 : vector<8x128xf32>
      %72 = arith.truncf %71 : vector<8x128xf32> to vector<8x128xbf16>
      %73 = arith.index_cast %arg21 : i32 to index
      %c0_34 = arith.constant 0 : index
      %c0_35 = arith.constant 0 : index
      %74 = vector.load %arg5[%73, %c0_34, %c0_35] : memref<4x128x640xbf16, #tpu.memory_space<vmem>>, vector<1x128x640xbf16>
      %75 = vector.shape_cast %74 : vector<1x128x640xbf16> to vector<128x640xbf16>
      %cst_36 = arith.constant dense<0.000000e+00> : vector<8x640xf32>
      %76 = tpu.matmul %72, %75, %cst_36 {dimension_numbers = #tpu.dot_dimension_numbers<[1], [0], [0], [1], [0, 0, 1, 1], [], []>} : vector<8x128xbf16>, vector<128x640xbf16>, vector<8x640xf32> -> vector<8x640xf32>
      %77 = vector.extract_strided_slice %76 {offsets = [0, 0], sizes = [8, 128], strides = [1, 1]} : vector<8x640xf32> to vector<8x128xf32>
      %78 = vector.extract_strided_slice %76 {offsets = [0, 128], sizes = [8, 128], strides = [1, 1]} : vector<8x640xf32> to vector<8x128xf32>
      %79 = vector.extract_strided_slice %76 {offsets = [0, 256], sizes = [8, 128], strides = [1, 1]} : vector<8x640xf32> to vector<8x128xf32>
      %80 = vector.extract_strided_slice %76 {offsets = [0, 384], sizes = [8, 128], strides = [1, 1]} : vector<8x640xf32> to vector<8x128xf32>
      %81 = vector.extract_strided_slice %76 {offsets = [0, 512], sizes = [8, 128], strides = [1, 1]} : vector<8x640xf32> to vector<8x128xf32>
      %82 = arith.mulf %77, %4 : vector<8x128xf32>
      %83 = arith.mulf %78, %7 : vector<8x128xf32>
      %84 = arith.addf %82, %83 : vector<8x128xf32>
      %85 = arith.truncf %84 : vector<8x128xf32> to vector<8x128xbf16>
      %86 = arith.mulf %79, %4 : vector<8x128xf32>
      %87 = arith.mulf %80, %7 : vector<8x128xf32>
      %88 = arith.addf %86, %87 : vector<8x128xf32>
      %89 = arith.truncf %88 : vector<8x128xf32> to vector<8x128xbf16>
      %90 = arith.truncf %81 : vector<8x128xf32> to vector<8x128xbf16>
      %91 = vector.extract_strided_slice %85 {offsets = [0, 0], sizes = [8, 32], strides = [1, 1]} : vector<8x128xbf16> to vector<8x32xbf16>
      %92 = vector.shape_cast %91 : vector<8x32xbf16> to vector<1x8x32xbf16>
      %93 = vector.extract_strided_slice %89 {offsets = [0, 0], sizes = [8, 32], strides = [1, 1]} : vector<8x128xbf16> to vector<8x32xbf16>
      %94 = vector.shape_cast %93 : vector<8x32xbf16> to vector<1x8x32xbf16>
      %95 = vector.extract_strided_slice %90 {offsets = [0, 0], sizes = [8, 32], strides = [1, 1]} : vector<8x128xbf16> to vector<8x32xbf16>
      %96 = vector.shape_cast %95 : vector<8x32xbf16> to vector<1x8x32xbf16>
      "tpu.trace_start"() <{level = 10 : i32, message = "bqd,bkd->bqk"}> : () -> ()
      %cst_37 = arith.constant dense<0.000000e+00> : vector<1x8x8xf32>
      %97 = tpu.matmul %92, %94, %cst_37 {dimension_numbers = #tpu.dot_dimension_numbers<[2], [2], [1], [1], [0, 0, 0, 1, 1, 1], [0], [0]>} : vector<1x8x32xbf16>, vector<1x8x32xbf16>, vector<1x8x8xf32> -> vector<1x8x8xf32>
      "tpu.trace_stop"() : () -> ()
      %98 = arith.addf %97, %9 : vector<1x8x8xf32>
      %cst_38 = arith.constant dense<0xFF800000> : vector<1x8xf32>
      %99 = vector.multi_reduction <maximumf>, %98, %cst_38 [2] : vector<1x8x8xf32> to vector<1x8xf32>
      %100 = vector.shape_cast %99 : vector<1x8xf32> to vector<1x8x1xf32>
      %101 = vector.broadcast %100 : vector<1x8x1xf32> to vector<1x8x8xf32>
      %102 = arith.subf %98, %101 : vector<1x8x8xf32>
      %103 = math.exp %102 : vector<1x8x8xf32>
      %cst_39 = arith.constant dense<0.000000e+00> : vector<1x8xf32>
      %104 = vector.multi_reduction <add>, %103, %cst_39 [2] : vector<1x8x8xf32> to vector<1x8xf32>
      %105 = vector.shape_cast %104 : vector<1x8xf32> to vector<1x8x1xf32>
      %106 = tpu.reciprocal %105 {approx = true} : vector<1x8x1xf32> -> vector<1x8x1xf32>
      %107 = vector.broadcast %106 : vector<1x8x1xf32> to vector<1x8x8xf32>
      %108 = arith.mulf %103, %107 : vector<1x8x8xf32>
      %109 = arith.truncf %108 : vector<1x8x8xf32> to vector<1x8x8xbf16>
      "tpu.trace_start"() <{level = 10 : i32, message = "bqk,bkd->bqd"}> : () -> ()
      %cst_40 = arith.constant dense<0.000000e+00> : vector<1x8x32xf32>
      %110 = tpu.matmul %109, %96, %cst_40 {dimension_numbers = #tpu.dot_dimension_numbers<[2], [1], [1], [2], [0, 0, 0, 1, 1, 2], [0], [0]>} : vector<1x8x8xbf16>, vector<1x8x32xbf16>, vector<1x8x32xf32> -> vector<1x8x32xf32>
      "tpu.trace_stop"() : () -> ()
      %111 = vector.shape_cast %110 : vector<1x8x32xf32> to vector<8x32xf32>
      %112 = vector.extract_strided_slice %85 {offsets = [0, 32], sizes = [8, 32], strides = [1, 1]} : vector<8x128xbf16> to vector<8x32xbf16>
      %113 = vector.shape_cast %112 : vector<8x32xbf16> to vector<1x8x32xbf16>
      %114 = vector.extract_strided_slice %89 {offsets = [0, 32], sizes = [8, 32], strides = [1, 1]} : vector<8x128xbf16> to vector<8x32xbf16>
      %115 = vector.shape_cast %114 : vector<8x32xbf16> to vector<1x8x32xbf16>
      %116 = vector.extract_strided_slice %90 {offsets = [0, 32], sizes = [8, 32], strides = [1, 1]} : vector<8x128xbf16> to vector<8x32xbf16>
      %117 = vector.shape_cast %116 : vector<8x32xbf16> to vector<1x8x32xbf16>
      "tpu.trace_start"() <{level = 10 : i32, message = "bqd,bkd->bqk"}> : () -> ()
      %cst_41 = arith.constant dense<0.000000e+00> : vector<1x8x8xf32>
      %118 = tpu.matmul %113, %115, %cst_41 {dimension_numbers = #tpu.dot_dimension_numbers<[2], [2], [1], [1], [0, 0, 0, 1, 1, 1], [0], [0]>} : vector<1x8x32xbf16>, vector<1x8x32xbf16>, vector<1x8x8xf32> -> vector<1x8x8xf32>
      "tpu.trace_stop"() : () -> ()
      %119 = arith.addf %118, %9 : vector<1x8x8xf32>
      %cst_42 = arith.constant dense<0xFF800000> : vector<1x8xf32>
      %120 = vector.multi_reduction <maximumf>, %119, %cst_42 [2] : vector<1x8x8xf32> to vector<1x8xf32>
      %121 = vector.shape_cast %120 : vector<1x8xf32> to vector<1x8x1xf32>
      %122 = vector.broadcast %121 : vector<1x8x1xf32> to vector<1x8x8xf32>
      %123 = arith.subf %119, %122 : vector<1x8x8xf32>
      %124 = math.exp %123 : vector<1x8x8xf32>
      %cst_43 = arith.constant dense<0.000000e+00> : vector<1x8xf32>
      %125 = vector.multi_reduction <add>, %124, %cst_43 [2] : vector<1x8x8xf32> to vector<1x8xf32>
      %126 = vector.shape_cast %125 : vector<1x8xf32> to vector<1x8x1xf32>
      %127 = tpu.reciprocal %126 {approx = true} : vector<1x8x1xf32> -> vector<1x8x1xf32>
      %128 = vector.broadcast %127 : vector<1x8x1xf32> to vector<1x8x8xf32>
      %129 = arith.mulf %124, %128 : vector<1x8x8xf32>
      %130 = arith.truncf %129 : vector<1x8x8xf32> to vector<1x8x8xbf16>
      "tpu.trace_start"() <{level = 10 : i32, message = "bqk,bkd->bqd"}> : () -> ()
      %cst_44 = arith.constant dense<0.000000e+00> : vector<1x8x32xf32>
      %131 = tpu.matmul %130, %117, %cst_44 {dimension_numbers = #tpu.dot_dimension_numbers<[2], [1], [1], [2], [0, 0, 0, 1, 1, 2], [0], [0]>} : vector<1x8x8xbf16>, vector<1x8x32xbf16>, vector<1x8x32xf32> -> vector<1x8x32xf32>
      "tpu.trace_stop"() : () -> ()
      %132 = vector.shape_cast %131 : vector<1x8x32xf32> to vector<8x32xf32>
      %133 = vector.extract_strided_slice %85 {offsets = [0, 64], sizes = [8, 32], strides = [1, 1]} : vector<8x128xbf16> to vector<8x32xbf16>
      %134 = vector.shape_cast %133 : vector<8x32xbf16> to vector<1x8x32xbf16>
      %135 = vector.extract_strided_slice %89 {offsets = [0, 64], sizes = [8, 32], strides = [1, 1]} : vector<8x128xbf16> to vector<8x32xbf16>
      %136 = vector.shape_cast %135 : vector<8x32xbf16> to vector<1x8x32xbf16>
      %137 = vector.extract_strided_slice %90 {offsets = [0, 64], sizes = [8, 32], strides = [1, 1]} : vector<8x128xbf16> to vector<8x32xbf16>
      %138 = vector.shape_cast %137 : vector<8x32xbf16> to vector<1x8x32xbf16>
      "tpu.trace_start"() <{level = 10 : i32, message = "bqd,bkd->bqk"}> : () -> ()
      %cst_45 = arith.constant dense<0.000000e+00> : vector<1x8x8xf32>
      %139 = tpu.matmul %134, %136, %cst_45 {dimension_numbers = #tpu.dot_dimension_numbers<[2], [2], [1], [1], [0, 0, 0, 1, 1, 1], [0], [0]>} : vector<1x8x32xbf16>, vector<1x8x32xbf16>, vector<1x8x8xf32> -> vector<1x8x8xf32>
      "tpu.trace_stop"() : () -> ()
      %140 = arith.addf %139, %9 : vector<1x8x8xf32>
      %cst_46 = arith.constant dense<0xFF800000> : vector<1x8xf32>
      %141 = vector.multi_reduction <maximumf>, %140, %cst_46 [2] : vector<1x8x8xf32> to vector<1x8xf32>
      %142 = vector.shape_cast %141 : vector<1x8xf32> to vector<1x8x1xf32>
      %143 = vector.broadcast %142 : vector<1x8x1xf32> to vector<1x8x8xf32>
      %144 = arith.subf %140, %143 : vector<1x8x8xf32>
      %145 = math.exp %144 : vector<1x8x8xf32>
      %cst_47 = arith.constant dense<0.000000e+00> : vector<1x8xf32>
      %146 = vector.multi_reduction <add>, %145, %cst_47 [2] : vector<1x8x8xf32> to vector<1x8xf32>
      %147 = vector.shape_cast %146 : vector<1x8xf32> to vector<1x8x1xf32>
      %148 = tpu.reciprocal %147 {approx = true} : vector<1x8x1xf32> -> vector<1x8x1xf32>
      %149 = vector.broadcast %148 : vector<1x8x1xf32> to vector<1x8x8xf32>
      %150 = arith.mulf %145, %149 : vector<1x8x8xf32>
      %151 = arith.truncf %150 : vector<1x8x8xf32> to vector<1x8x8xbf16>
      "tpu.trace_start"() <{level = 10 : i32, message = "bqk,bkd->bqd"}> : () -> ()
      %cst_48 = arith.constant dense<0.000000e+00> : vector<1x8x32xf32>
      %152 = tpu.matmul %151, %138, %cst_48 {dimension_numbers = #tpu.dot_dimension_numbers<[2], [1], [1], [2], [0, 0, 0, 1, 1, 2], [0], [0]>} : vector<1x8x8xbf16>, vector<1x8x32xbf16>, vector<1x8x32xf32> -> vector<1x8x32xf32>
      "tpu.trace_stop"() : () -> ()
      %153 = vector.shape_cast %152 : vector<1x8x32xf32> to vector<8x32xf32>
      %154 = vector.extract_strided_slice %85 {offsets = [0, 96], sizes = [8, 32], strides = [1, 1]} : vector<8x128xbf16> to vector<8x32xbf16>
      %155 = vector.shape_cast %154 : vector<8x32xbf16> to vector<1x8x32xbf16>
      %156 = vector.extract_strided_slice %89 {offsets = [0, 96], sizes = [8, 32], strides = [1, 1]} : vector<8x128xbf16> to vector<8x32xbf16>
      %157 = vector.shape_cast %156 : vector<8x32xbf16> to vector<1x8x32xbf16>
      %158 = vector.extract_strided_slice %90 {offsets = [0, 96], sizes = [8, 32], strides = [1, 1]} : vector<8x128xbf16> to vector<8x32xbf16>
      %159 = vector.shape_cast %158 : vector<8x32xbf16> to vector<1x8x32xbf16>
      "tpu.trace_start"() <{level = 10 : i32, message = "bqd,bkd->bqk"}> : () -> ()
      %cst_49 = arith.constant dense<0.000000e+00> : vector<1x8x8xf32>
      %160 = tpu.matmul %155, %157, %cst_49 {dimension_numbers = #tpu.dot_dimension_numbers<[2], [2], [1], [1], [0, 0, 0, 1, 1, 1], [0], [0]>} : vector<1x8x32xbf16>, vector<1x8x32xbf16>, vector<1x8x8xf32> -> vector<1x8x8xf32>
      "tpu.trace_stop"() : () -> ()
      %161 = arith.addf %160, %9 : vector<1x8x8xf32>
      %cst_50 = arith.constant dense<0xFF800000> : vector<1x8xf32>
      %162 = vector.multi_reduction <maximumf>, %161, %cst_50 [2] : vector<1x8x8xf32> to vector<1x8xf32>
      %163 = vector.shape_cast %162 : vector<1x8xf32> to vector<1x8x1xf32>
      %164 = vector.broadcast %163 : vector<1x8x1xf32> to vector<1x8x8xf32>
      %165 = arith.subf %161, %164 : vector<1x8x8xf32>
      %166 = math.exp %165 : vector<1x8x8xf32>
      %cst_51 = arith.constant dense<0.000000e+00> : vector<1x8xf32>
      %167 = vector.multi_reduction <add>, %166, %cst_51 [2] : vector<1x8x8xf32> to vector<1x8xf32>
      %168 = vector.shape_cast %167 : vector<1x8xf32> to vector<1x8x1xf32>
      %169 = tpu.reciprocal %168 {approx = true} : vector<1x8x1xf32> -> vector<1x8x1xf32>
      %170 = vector.broadcast %169 : vector<1x8x1xf32> to vector<1x8x8xf32>
      %171 = arith.mulf %166, %170 : vector<1x8x8xf32>
      %172 = arith.truncf %171 : vector<1x8x8xf32> to vector<1x8x8xbf16>
      "tpu.trace_start"() <{level = 10 : i32, message = "bqk,bkd->bqd"}> : () -> ()
      %cst_52 = arith.constant dense<0.000000e+00> : vector<1x8x32xf32>
      %173 = tpu.matmul %172, %159, %cst_52 {dimension_numbers = #tpu.dot_dimension_numbers<[2], [1], [1], [2], [0, 0, 0, 1, 1, 2], [0], [0]>} : vector<1x8x8xbf16>, vector<1x8x32xbf16>, vector<1x8x32xf32> -> vector<1x8x32xf32>
      "tpu.trace_stop"() : () -> ()
      %174 = vector.shape_cast %173 : vector<1x8x32xf32> to vector<8x32xf32>
      %175 = tpu.concatenate %111, %132, %153, %174 in 1 : vector<8x32xf32>, vector<8x32xf32>, vector<8x32xf32>, vector<8x32xf32> -> vector<8x128xf32>
      %176 = arith.truncf %175 : vector<8x128xf32> to vector<8x128xbf16>
      %177 = arith.index_cast %arg21 : i32 to index
      %c0_53 = arith.constant 0 : index
      %c0_54 = arith.constant 0 : index
      %178 = vector.load %arg6[%177, %c0_53, %c0_54] : memref<4x128x128xbf16, #tpu.memory_space<vmem>>, vector<1x128x128xbf16>
      %179 = vector.shape_cast %178 : vector<1x128x128xbf16> to vector<128x128xbf16>
      %cst_55 = arith.constant dense<0.000000e+00> : vector<8x128xf32>
      %180 = tpu.matmul %176, %179, %cst_55 {dimension_numbers = #tpu.dot_dimension_numbers<[1], [0], [0], [1], [0, 0, 1, 1], [], []>} : vector<8x128xbf16>, vector<128x128xbf16>, vector<8x128xf32> -> vector<8x128xf32>
      %181 = arith.index_cast %arg21 : i32 to index
      %c0_56 = arith.constant 0 : index
      %c0_57 = arith.constant 0 : index
      %182 = vector.load %arg7[%181, %c0_56, %c0_57] : memref<4x1x128xf32, #tpu.memory_space<vmem>>, vector<1x1x128xf32>
      %183 = vector.shape_cast %182 : vector<1x1x128xf32> to vector<1x128xf32>
      %184 = vector.broadcast %183 : vector<1x128xf32> to vector<8x128xf32>
      %185 = arith.addf %180, %184 : vector<8x128xf32>
      %186 = arith.addf %arg22, %185 : vector<8x128xf32>
      %187 = arith.index_cast %arg21 : i32 to index
      %c0_58 = arith.constant 0 : index
      %c0_59 = arith.constant 0 : index
      %188 = vector.load %arg10[%187, %c0_58, %c0_59] : memref<4x1x128xf32, #tpu.memory_space<vmem>>, vector<1x1x128xf32>
      %189 = vector.shape_cast %188 : vector<1x1x128xf32> to vector<1x128xf32>
      %190 = arith.index_cast %arg21 : i32 to index
      %c0_60 = arith.constant 0 : index
      %c0_61 = arith.constant 0 : index
      %191 = vector.load %arg11[%190, %c0_60, %c0_61] : memref<4x1x128xf32, #tpu.memory_space<vmem>>, vector<1x1x128xf32>
      %192 = vector.shape_cast %191 : vector<1x1x128xf32> to vector<1x128xf32>
      %cst_62 = arith.constant dense<0.000000e+00> : vector<8xf32>
      %193 = vector.multi_reduction <add>, %186, %cst_62 [1] : vector<8x128xf32> to vector<8xf32>
      %194 = vector.shape_cast %193 : vector<8xf32> to vector<8x1xf32>
      %cst_63 = arith.constant 1.280000e+02 : f32
      %195 = vector.broadcast %cst_63 : f32 to vector<8x1xf32>
      %196 = arith.divf %194, %195 : vector<8x1xf32>
      %197 = vector.broadcast %196 : vector<8x1xf32> to vector<8x128xf32>
      %198 = arith.subf %186, %197 : vector<8x128xf32>
      %199 = arith.mulf %198, %198 : vector<8x128xf32>
      %cst_64 = arith.constant dense<0.000000e+00> : vector<8xf32>
      %200 = vector.multi_reduction <add>, %199, %cst_64 [1] : vector<8x128xf32> to vector<8xf32>
      %201 = vector.shape_cast %200 : vector<8xf32> to vector<8x1xf32>
      %cst_65 = arith.constant 1.280000e+02 : f32
      %202 = vector.broadcast %cst_65 : f32 to vector<8x1xf32>
      %203 = arith.divf %201, %202 : vector<8x1xf32>
      %204 = vector.broadcast %196 : vector<8x1xf32> to vector<8x128xf32>
      %205 = arith.subf %186, %204 : vector<8x128xf32>
      %cst_66 = arith.constant 9.99999974E-6 : f32
      %206 = vector.broadcast %cst_66 : f32 to vector<8x1xf32>
      %207 = arith.addf %203, %206 : vector<8x1xf32>
      %208 = math.rsqrt %207 : vector<8x1xf32>
      %209 = vector.broadcast %208 : vector<8x1xf32> to vector<8x128xf32>
      %210 = arith.mulf %205, %209 : vector<8x128xf32>
      %211 = vector.broadcast %189 : vector<1x128xf32> to vector<8x128xf32>
      %212 = arith.mulf %210, %211 : vector<8x128xf32>
      %213 = vector.broadcast %192 : vector<1x128xf32> to vector<8x128xf32>
      %214 = arith.addf %212, %213 : vector<8x128xf32>
      %215 = arith.truncf %214 : vector<8x128xf32> to vector<8x128xbf16>
      %216 = arith.index_cast %arg21 : i32 to index
      %c0_67 = arith.constant 0 : index
      %c0_68 = arith.constant 0 : index
      %217 = vector.load %arg12[%216, %c0_67, %c0_68] : memref<4x128x512xbf16, #tpu.memory_space<vmem>>, vector<1x128x512xbf16>
      %218 = vector.shape_cast %217 : vector<1x128x512xbf16> to vector<128x512xbf16>
      %cst_69 = arith.constant dense<0.000000e+00> : vector<8x512xf32>
      %219 = tpu.matmul %215, %218, %cst_69 {dimension_numbers = #tpu.dot_dimension_numbers<[1], [0], [0], [1], [0, 0, 1, 1], [], []>} : vector<8x128xbf16>, vector<128x512xbf16>, vector<8x512xf32> -> vector<8x512xf32>
      %220 = arith.index_cast %arg21 : i32 to index
      %c0_70 = arith.constant 0 : index
      %c0_71 = arith.constant 0 : index
      %221 = vector.load %arg13[%220, %c0_70, %c0_71] : memref<4x1x512xf32, #tpu.memory_space<vmem>>, vector<1x1x512xf32>
      %222 = vector.shape_cast %221 : vector<1x1x512xf32> to vector<1x512xf32>
      %223 = vector.broadcast %222 : vector<1x512xf32> to vector<8x512xf32>
      %224 = arith.addf %219, %223 : vector<8x512xf32>
      %cst_72 = arith.constant 5.000000e-01 : f32
      %225 = vector.broadcast %cst_72 : f32 to vector<8x512xf32>
      %226 = arith.mulf %225, %224 : vector<8x512xf32>
      %cst_73 = arith.constant 0.707106769 : f32
      %227 = vector.broadcast %cst_73 : f32 to vector<8x512xf32>
      %228 = arith.mulf %224, %227 : vector<8x512xf32>
      %cst_74 = arith.constant 0.000000e+00 : f32
      %229 = vector.broadcast %cst_74 : f32 to vector<8x512xf32>
      %230 = arith.cmpf oge, %228, %229 : vector<8x512xf32>
      %cst_75 = arith.constant 1.000000e+00 : f32
      %cst_76 = arith.constant -1.000000e+00 : f32
      %231 = vector.broadcast %cst_75 : f32 to vector<8x512xf32>
      %232 = vector.broadcast %cst_76 : f32 to vector<8x512xf32>
      %233 = arith.select %230, %231, %232 : vector<8x512xi1>, vector<8x512xf32>
      %234 = math.absf %228 : vector<8x512xf32>
      %cst_77 = arith.constant 0.327591091 : f32
      %235 = vector.broadcast %cst_77 : f32 to vector<8x512xf32>
      %236 = arith.mulf %235, %234 : vector<8x512xf32>
      %cst_78 = arith.constant 1.000000e+00 : f32
      %237 = vector.broadcast %cst_78 : f32 to vector<8x512xf32>
      %238 = arith.addf %237, %236 : vector<8x512xf32>
      %cst_79 = arith.constant 1.000000e+00 : f32
      %239 = vector.broadcast %cst_79 : f32 to vector<8x512xf32>
      %240 = arith.divf %239, %238 : vector<8x512xf32>
      %cst_80 = arith.constant 1.06140542 : f32
      %241 = vector.broadcast %cst_80 : f32 to vector<8x512xf32>
      %242 = arith.mulf %241, %240 : vector<8x512xf32>
      %cst_81 = arith.constant -1.45315206 : f32
      %243 = vector.broadcast %cst_81 : f32 to vector<8x512xf32>
      %244 = arith.addf %242, %243 : vector<8x512xf32>
      %245 = arith.mulf %244, %240 : vector<8x512xf32>
      %cst_82 = arith.constant 1.42141378 : f32
      %246 = vector.broadcast %cst_82 : f32 to vector<8x512xf32>
      %247 = arith.addf %245, %246 : vector<8x512xf32>
      %248 = arith.mulf %247, %240 : vector<8x512xf32>
      %cst_83 = arith.constant -0.284496725 : f32
      %249 = vector.broadcast %cst_83 : f32 to vector<8x512xf32>
      %250 = arith.addf %248, %249 : vector<8x512xf32>
      %251 = arith.mulf %250, %240 : vector<8x512xf32>
      %cst_84 = arith.constant 0.254829586 : f32
      %252 = vector.broadcast %cst_84 : f32 to vector<8x512xf32>
      %253 = arith.addf %251, %252 : vector<8x512xf32>
      %254 = arith.mulf %253, %240 : vector<8x512xf32>
      %cst_85 = arith.constant 0.000000e+00 : f32
      %255 = vector.broadcast %cst_85 : f32 to vector<8x512xf32>
      %256 = arith.subf %255, %234 : vector<8x512xf32>
      %257 = arith.mulf %256, %234 : vector<8x512xf32>
      %258 = math.exp %257 : vector<8x512xf32>
      %259 = arith.mulf %254, %258 : vector<8x512xf32>
      %cst_86 = arith.constant 1.000000e+00 : f32
      %260 = vector.broadcast %cst_86 : f32 to vector<8x512xf32>
      %261 = arith.subf %260, %259 : vector<8x512xf32>
      %262 = arith.mulf %233, %261 : vector<8x512xf32>
      %cst_87 = arith.constant 1.000000e+00 : f32
      %263 = vector.broadcast %cst_87 : f32 to vector<8x512xf32>
      %264 = arith.addf %263, %262 : vector<8x512xf32>
      %265 = arith.mulf %226, %264 : vector<8x512xf32>
      %266 = arith.truncf %265 : vector<8x512xf32> to vector<8x512xbf16>
      %267 = arith.index_cast %arg21 : i32 to index
      %c0_88 = arith.constant 0 : index
      %c0_89 = arith.constant 0 : index
      %268 = vector.load %arg14[%267, %c0_88, %c0_89] : memref<4x512x128xbf16, #tpu.memory_space<vmem>>, vector<1x512x128xbf16>
      %269 = vector.shape_cast %268 : vector<1x512x128xbf16> to vector<512x128xbf16>
      %cst_90 = arith.constant dense<0.000000e+00> : vector<8x128xf32>
      %270 = tpu.matmul %266, %269, %cst_90 {dimension_numbers = #tpu.dot_dimension_numbers<[1], [0], [0], [1], [0, 0, 1, 1], [], []>} : vector<8x512xbf16>, vector<512x128xbf16>, vector<8x128xf32> -> vector<8x128xf32>
      %271 = arith.index_cast %arg21 : i32 to index
      %c0_91 = arith.constant 0 : index
      %c0_92 = arith.constant 0 : index
      %272 = vector.load %arg15[%271, %c0_91, %c0_92] : memref<4x1x128xf32, #tpu.memory_space<vmem>>, vector<1x1x128xf32>
      %273 = vector.shape_cast %272 : vector<1x1x128xf32> to vector<1x128xf32>
      %274 = vector.broadcast %273 : vector<1x128xf32> to vector<8x128xf32>
      %275 = arith.addf %270, %274 : vector<8x128xf32>
      %276 = arith.addf %186, %275 : vector<8x128xf32>
      scf.yield %276 : vector<8x128xf32>
    }
    %c4_i32_8 = arith.constant 4 : i32
    %c0_9 = arith.constant 0 : index
    %c0_10 = arith.constant 0 : index
    %12 = vector.load %arg16[%c0_9, %c0_10] : memref<1x128xf32, #tpu.memory_space<vmem>>, vector<1x128xf32>
    %c0_11 = arith.constant 0 : index
    %c0_12 = arith.constant 0 : index
    %13 = vector.load %arg17[%c0_11, %c0_12] : memref<1x128xf32, #tpu.memory_space<vmem>>, vector<1x128xf32>
    %cst = arith.constant dense<0.000000e+00> : vector<8xf32>
    %14 = vector.multi_reduction <add>, %11, %cst [1] : vector<8x128xf32> to vector<8xf32>
    %15 = vector.shape_cast %14 : vector<8xf32> to vector<8x1xf32>
    %cst_13 = arith.constant 1.280000e+02 : f32
    %16 = vector.broadcast %cst_13 : f32 to vector<8x1xf32>
    %17 = arith.divf %15, %16 : vector<8x1xf32>
    %18 = vector.broadcast %17 : vector<8x1xf32> to vector<8x128xf32>
    %19 = arith.subf %11, %18 : vector<8x128xf32>
    %20 = arith.mulf %19, %19 : vector<8x128xf32>
    %cst_14 = arith.constant dense<0.000000e+00> : vector<8xf32>
    %21 = vector.multi_reduction <add>, %20, %cst_14 [1] : vector<8x128xf32> to vector<8xf32>
    %22 = vector.shape_cast %21 : vector<8xf32> to vector<8x1xf32>
    %cst_15 = arith.constant 1.280000e+02 : f32
    %23 = vector.broadcast %cst_15 : f32 to vector<8x1xf32>
    %24 = arith.divf %22, %23 : vector<8x1xf32>
    %25 = vector.broadcast %17 : vector<8x1xf32> to vector<8x128xf32>
    %26 = arith.subf %11, %25 : vector<8x128xf32>
    %cst_16 = arith.constant 9.99999974E-6 : f32
    %27 = vector.broadcast %cst_16 : f32 to vector<8x1xf32>
    %28 = arith.addf %24, %27 : vector<8x1xf32>
    %29 = math.rsqrt %28 : vector<8x1xf32>
    %30 = vector.broadcast %29 : vector<8x1xf32> to vector<8x128xf32>
    %31 = arith.mulf %26, %30 : vector<8x128xf32>
    %32 = vector.broadcast %12 : vector<1x128xf32> to vector<8x128xf32>
    %33 = arith.mulf %31, %32 : vector<8x128xf32>
    %34 = vector.broadcast %13 : vector<1x128xf32> to vector<8x128xf32>
    %35 = arith.addf %33, %34 : vector<8x128xf32>
    %36 = arith.truncf %35 : vector<8x128xf32> to vector<8x128xbf16>
    %c0_17 = arith.constant 0 : index
    %c0_18 = arith.constant 0 : index
    %37 = vector.load %arg18[%c0_17, %c0_18] : memref<128x128xbf16, #tpu.memory_space<vmem>>, vector<128x128xbf16>
    %cst_19 = arith.constant dense<0.000000e+00> : vector<8x128xf32>
    %38 = tpu.matmul %36, %37, %cst_19 {dimension_numbers = #tpu.dot_dimension_numbers<[1], [0], [0], [1], [0, 0, 1, 1], [], []>} : vector<8x128xbf16>, vector<128x128xbf16>, vector<8x128xf32> -> vector<8x128xf32>
    %c0_20 = arith.constant 0 : index
    %c0_21 = arith.constant 0 : index
    %39 = vector.load %arg19[%c0_20, %c0_21] : memref<1x128xf32, #tpu.memory_space<vmem>>, vector<1x128xf32>
    %40 = vector.broadcast %39 : vector<1x128xf32> to vector<8x128xf32>
    %41 = arith.addf %38, %40 : vector<8x128xf32>
    %42 = vector.shape_cast %41 : vector<8x128xf32> to vector<1x8x128xf32>
    %c0_22 = arith.constant 0 : index
    %c0_23 = arith.constant 0 : index
    %c0_24 = arith.constant 0 : index
    %43 = vector.load %arg20[%c0_22, %c0_23, %c0_24] : memref<1x8x128xf32, #tpu.memory_space<vmem>>, vector<1x8x128xf32>
    tpu.vector_store %arg20[%c0_22, %c0_23, %c0_24], %42 {strides = array<i32>} : memref<1x8x128xf32, #tpu.memory_space<vmem>>, vector<1x8x128xf32>,
    return
  }
  func.func @transform_0(%arg0: i32) -> (i32, i32, i32) {
    %c0_i32 = arith.constant 0 : i32
    %c0_i32_0 = arith.constant 0 : i32
    %c0_i32_1 = arith.constant 0 : i32
    return %arg0, %c0_i32, %c0_i32_0 : i32, i32, i32
  }
  func.func @transform_1(%arg0: i32) -> (i32, i32) {
    %c0_i32 = arith.constant 0 : i32
    %c0_i32_0 = arith.constant 0 : i32
    %c0_i32_1 = arith.constant 0 : i32
    return %c0_i32, %c0_i32_0 : i32, i32
  }
  func.func @transform_2(%arg0: i32) -> (i32, i32) {
    %c0_i32 = arith.constant 0 : i32
    %c0_i32_0 = arith.constant 0 : i32
    %c0_i32_1 = arith.constant 0 : i32
    return %c0_i32, %c0_i32_0 : i32, i32
  }
  func.func @transform_3(%arg0: i32) -> (i32, i32) {
    %c0_i32 = arith.constant 0 : i32
    %c0_i32_0 = arith.constant 0 : i32
    %c0_i32_1 = arith.constant 0 : i32
    return %c0_i32, %c0_i32_0 : i32, i32
  }
  func.func @transform_4(%arg0: i32) -> (i32, i32, i32) {
    %c0_i32 = arith.constant 0 : i32
    %c0_i32_0 = arith.constant 0 : i32
    %c0_i32_1 = arith.constant 0 : i32
    %c0_i32_2 = arith.constant 0 : i32
    return %c0_i32, %c0_i32_0, %c0_i32_1 : i32, i32, i32
  }
  func.func @transform_5(%arg0: i32) -> (i32, i32, i32) {
    %c0_i32 = arith.constant 0 : i32
    %c0_i32_0 = arith.constant 0 : i32
    %c0_i32_1 = arith.constant 0 : i32
    %c0_i32_2 = arith.constant 0 : i32
    return %c0_i32, %c0_i32_0, %c0_i32_1 : i32, i32, i32
  }
  func.func @transform_6(%arg0: i32) -> (i32, i32, i32) {
    %c0_i32 = arith.constant 0 : i32
    %c0_i32_0 = arith.constant 0 : i32
    %c0_i32_1 = arith.constant 0 : i32
    %c0_i32_2 = arith.constant 0 : i32
    return %c0_i32, %c0_i32_0, %c0_i32_1 : i32, i32, i32
  }
  func.func @transform_7(%arg0: i32) -> (i32, i32, i32) {
    %c0_i32 = arith.constant 0 : i32
    %c0_i32_0 = arith.constant 0 : i32
    %c0_i32_1 = arith.constant 0 : i32
    %c0_i32_2 = arith.constant 0 : i32
    return %c0_i32, %c0_i32_0, %c0_i32_1 : i32, i32, i32
  }
  func.func @transform_8(%arg0: i32) -> (i32, i32, i32) {
    %c0_i32 = arith.constant 0 : i32
    %c0_i32_0 = arith.constant 0 : i32
    %c0_i32_1 = arith.constant 0 : i32
    %c0_i32_2 = arith.constant 0 : i32
    return %c0_i32, %c0_i32_0, %c0_i32_1 : i32, i32, i32
  }
  func.func @transform_9(%arg0: i32) -> (i32, i32, i32) {
    %c0_i32 = arith.constant 0 : i32
    %c0_i32_0 = arith.constant 0 : i32
    %c0_i32_1 = arith.constant 0 : i32
    %c0_i32_2 = arith.constant 0 : i32
    return %c0_i32, %c0_i32_0, %c0_i32_1 : i32, i32, i32
  }
  func.func @transform_10(%arg0: i32) -> (i32, i32, i32) {
    %c0_i32 = arith.constant 0 : i32
    %c0_i32_0 = arith.constant 0 : i32
    %c0_i32_1 = arith.constant 0 : i32
    %c0_i32_2 = arith.constant 0 : i32
    return %c0_i32, %c0_i32_0, %c0_i32_1 : i32, i32, i32
  }
  func.func @transform_11(%arg0: i32) -> (i32, i32, i32) {
    %c0_i32 = arith.constant 0 : i32
    %c0_i32_0 = arith.constant 0 : i32
    %c0_i32_1 = arith.constant 0 : i32
    %c0_i32_2 = arith.constant 0 : i32
    return %c0_i32, %c0_i32_0, %c0_i32_1 : i32, i32, i32
  }
  func.func @transform_12(%arg0: i32) -> (i32, i32, i32) {
    %c0_i32 = arith.constant 0 : i32
    %c0_i32_0 = arith.constant 0 : i32
    %c0_i32_1 = arith.constant 0 : i32
    %c0_i32_2 = arith.constant 0 : i32
    return %c0_i32, %c0_i32_0, %c0_i32_1 : i32, i32, i32
  }
  func.func @transform_13(%arg0: i32) -> (i32, i32, i32) {
    %c0_i32 = arith.constant 0 : i32
    %c0_i32_0 = arith.constant 0 : i32
    %c0_i32_1 = arith.constant 0 : i32
    %c0_i32_2 = arith.constant 0 : i32
    return %c0_i32, %c0_i32_0, %c0_i32_1 : i32, i32, i32
  }
  func.func @transform_14(%arg0: i32) -> (i32, i32, i32) {
    %c0_i32 = arith.constant 0 : i32
    %c0_i32_0 = arith.constant 0 : i32
    %c0_i32_1 = arith.constant 0 : i32
    %c0_i32_2 = arith.constant 0 : i32
    return %c0_i32, %c0_i32_0, %c0_i32_1 : i32, i32, i32
  }
  func.func @transform_15(%arg0: i32) -> (i32, i32) {
    %c0_i32 = arith.constant 0 : i32
    %c0_i32_0 = arith.constant 0 : i32
    %c0_i32_1 = arith.constant 0 : i32
    return %c0_i32, %c0_i32_0 : i32, i32
  }
  func.func @transform_16(%arg0: i32) -> (i32, i32) {
    %c0_i32 = arith.constant 0 : i32
    %c0_i32_0 = arith.constant 0 : i32
    %c0_i32_1 = arith.constant 0 : i32
    return %c0_i32, %c0_i32_0 : i32, i32
  }
  func.func @transform_17(%arg0: i32) -> (i32, i32) {
    %c0_i32 = arith.constant 0 : i32
    %c0_i32_0 = arith.constant 0 : i32
    %c0_i32_1 = arith.constant 0 : i32
    return %c0_i32, %c0_i32_0 : i32, i32
  }
  func.func @transform_18(%arg0: i32) -> (i32, i32) {
    %c0_i32 = arith.constant 0 : i32
    %c0_i32_0 = arith.constant 0 : i32
    %c0_i32_1 = arith.constant 0 : i32
    return %c0_i32, %c0_i32_0 : i32, i32
  }
  func.func @transform_19(%arg0: i32) -> (i32, i32, i32) {
    %c0_i32 = arith.constant 0 : i32
    %c0_i32_0 = arith.constant 0 : i32
    %c0_i32_1 = arith.constant 0 : i32
    return %arg0, %c0_i32, %c0_i32_0 : i32, i32, i32
  }
}

</mosaic_0001>

<llo_original>
// kernel: tile.14
$region0: #{tile.14}
  %s0 = inlined_call_operand.vmem [shape: f32[8,4,32], index: 0, kind: input, shape index: {}]
  %s1 = inlined_call_operand.vmem [shape: f32[8,128], index: 1, kind: output, shape index: {}]
  $region1: #{tile.14} parent=0
    #allocation0 [shape = 'u8[32768]{0}', space=vmem, size = 0x8000, scoped, tag = 'scoped mem for input reshape']
    %s3 = sshllo.u32 0, 4
    %s4 = smul.addr 4, 7
    %s5 = scalar_lea.vmem %s0, %s4
    %v6 = vld [vmem:[%s5] sm:%s3]
    %s7 = scalar_lea.vmem [#allocation0], 56
    %8 = vst [vmem:[%s7] sm:%s3] %v6
    %s9 = smul.addr 4, 6
    %s10 = scalar_lea.vmem %s0, %s9
    %v11 = vld [vmem:[%s10] sm:%s3]
    %s12 = scalar_lea.vmem [#allocation0], 48
    %13 = vst [vmem:[%s12] sm:%s3] %v11
    %s14 = smul.addr 4, 5
    %s15 = scalar_lea.vmem %s0, %s14
    %v16 = vld [vmem:[%s15] sm:%s3]
    %s17 = scalar_lea.vmem [#allocation0], 40
    %18 = vst [vmem:[%s17] sm:%s3] %v16
    %s19 = smul.addr 4, 4
    %s20 = scalar_lea.vmem %s0, %s19
    %v21 = vld [vmem:[%s20] sm:%s3]
    %s22 = scalar_lea.vmem [#allocation0], 32
    %23 = vst [vmem:[%s22] sm:%s3] %v21
    %s24 = smul.addr 4, 3
    %s25 = scalar_lea.vmem %s0, %s24
    %v26 = vld [vmem:[%s25] sm:%s3]
    %s27 = scalar_lea.vmem [#allocation0], 24
    %28 = vst [vmem:[%s27] sm:%s3] %v26
    %s29 = smul.addr 4, 2
    %s30 = scalar_lea.vmem %s0, %s29
    %v31 = vld [vmem:[%s30] sm:%s3]
    %s32 = scalar_lea.vmem [#allocation0], 16
    %33 = vst [vmem:[%s32] sm:%s3] %v31
    %s34 = scalar_lea.vmem %s0, 4
    %v35 = vld [vmem:[%s34] sm:%s3]
    %s36 = scalar_lea.vmem [#allocation0], 8
    %37 = vst [vmem:[%s36] sm:%s3] %v35
    %v38 = vld [vmem:[%s0] sm:%s3]
    %39 = vst [vmem:[#allocation0] sm:%s3] %v38
    %v40 = vld [vmem:[#allocation0] ss:$8 sm:$0xf]
    %v41 = vld [vmem:[#allocation0] ss:$8 sm:$0xf0]
    %vm42 = vcmask 1047556
    %v43 = vsel %vm42, %v41, %v40
    %vm44 = vcmask 261120
    %45 = vst.msk [vmem:[%s1] sm:$0xff] %vm44, %v43
    %s46 = scalar_lea.vmem [#allocation0], 3
    %v47 = vld [vmem:[%s46] ss:$8 sm:$0xf]
    %s48 = scalar_lea.vmem [#allocation0], 3
    %v49 = vld [vmem:[%s48] ss:$8 sm:$0xf0]
    %vm50 = vcmask 1047556
    %v51 = vsel %vm50, %v49, %v47
    %52 = vrot.lane.b32.xlu0 %v51, 96
    %v53 = vpop.permute.xlu0 %52
    %vm54 = vcmask 1048320
    %55 = vst.msk [vmem:[%s1] sm:$0xff] %vm54, %v53
    %s56 = scalar_lea.vmem [#allocation0], 2
    %v57 = vld [vmem:[%s56] ss:$8 sm:$0xf]
    %s58 = scalar_lea.vmem [#allocation0], 2
    %v59 = vld [vmem:[%s58] ss:$8 sm:$0xf0]
    %vm60 = vcmask 1047556
    %v61 = vsel %vm60, %v59, %v57
    %62 = vrot.lane.b32.xlu0 %v61, 64
    %v63 = vpop.permute.xlu0 %62
    %vm64 = vcmask 785920
    %65 = vst.msk [vmem:[%s1] sm:$0xff] %vm64, %v63
    %s66 = scalar_lea.vmem [#allocation0], 1
    %v67 = vld [vmem:[%s66] ss:$8 sm:$0xf]
    %s68 = scalar_lea.vmem [#allocation0], 1
    %v69 = vld [vmem:[%s68] ss:$8 sm:$0xf0]
    %vm70 = vcmask 1047556
    %v71 = vsel %vm70, %v69, %v67
    %72 = vrot.lane.b32.xlu0 %v71, 32
    %v73 = vpop.permute.xlu0 %72
    %vm74 = vcmask 523520
    %75 = vst.msk [vmem:[%s1] sm:$0xff] %vm74, %v73

// kernel: transformer_lm_forward.1
$region0: #{transformer_lm_forward.1}
  #allocation0 [shape = 'u32[]', space=smem, size = 0x4, offset = 0x4, fixed_abs, tag = 'smem constant byte address 0x4 - core index']
  #allocation1 [shape = 'u32[144,128]{1,0:T(1,128)}', space=vmem, size = 0x12000, scoped, tag = 'internal scratch']
  %s0 = inlined_call_operand.vmem [shape: f32[2,8,128], index: 0, kind: input, shape index: {}]
  %s1 = inlined_call_operand.vmem [shape: f32[8,128], index: 1, kind: input, shape index: {}]
  %s2 = inlined_call_operand.vmem [shape: f32[8,128], index: 2, kind: input, shape index: {}]
  %s3 = inlined_call_operand.vmem [shape: f32[8,8], index: 3, kind: input, shape index: {}]
  %s4 = inlined_call_operand.hbm [shape: bf16[4,128,640], index: 4, kind: input, shape index: {}]
  %s5 = inlined_call_operand.vmem [shape: bf16[4,128,128], index: 5, kind: input, shape index: {}]
  %s6 = inlined_call_operand.vmem [shape: f32[4,1,128], index: 6, kind: input, shape index: {}]
  %s7 = inlined_call_operand.vmem [shape: f32[4,1,128], index: 7, kind: input, shape index: {}]
  %s8 = inlined_call_operand.vmem [shape: f32[4,1,128], index: 8, kind: input, shape index: {}]
  %s9 = inlined_call_operand.vmem [shape: f32[4,1,128], index: 9, kind: input, shape index: {}]
  %s10 = inlined_call_operand.vmem [shape: f32[4,1,128], index: 10, kind: input, shape index: {}]
  %s11 = inlined_call_operand.hbm [shape: bf16[4,128,512], index: 11, kind: input, shape index: {}]
  %s12 = inlined_call_operand.vmem [shape: f32[4,1,512], index: 12, kind: input, shape index: {}]
  %s13 = inlined_call_operand.hbm [shape: bf16[4,512,128], index: 13, kind: input, shape index: {}]
  %s14 = inlined_call_operand.vmem [shape: f32[4,1,128], index: 14, kind: input, shape index: {}]
  %s15 = inlined_call_operand.vmem [shape: f32[1,128], index: 15, kind: input, shape index: {}]
  %s16 = inlined_call_operand.vmem [shape: f32[1,128], index: 16, kind: input, shape index: {}]
  %s17 = inlined_call_operand.vmem [shape: bf16[128,128], index: 17, kind: input, shape index: {}]
  %s18 = inlined_call_operand.vmem [shape: f32[1,128], index: 18, kind: input, shape index: {}]
  %s19 = inlined_call_operand.hbm [shape: f32[2,8,128], index: 19, kind: output, shape index: {}]
  %s20 = sld [smem:[#allocation0]]
  $region128: #{transformer_lm_forward.1} parent=0
    _
  %s22 = ssub.s32 1, %s20
  %s23 = scalar_select 0, %s22, %s20
  $region1: #{transformer_lm_forward.1} parent=0
    #allocation2 [shape = 'u8[655360]{0}', space=vmem, size = 0xa0000, scoped, tag = 'input window, operand 4, single buffered']
    #allocation3 [shape = 's32[2]{0}', space=sflag, size = 0x8, scoped, tag = 'scoped memory for transformer_lm_forward.1']
    #allocation4 [shape = 's32[2]{0}', space=sflag, size = 0x8, scoped, tag = 'scoped memory for transformer_lm_forward.1']
    #allocation5 [shape = 'u8[524288]{0}', space=vmem, size = 0x80000, scoped, tag = 'input window, operand 11, single buffered']
    #allocation6 [shape = 's32[1]{0}', space=sflag, size = 0x4, scoped, tag = 'scoped memory for transformer_lm_forward.1']
    #allocation7 [shape = 'u8[524288]{0}', space=vmem, size = 0x80000, scoped, tag = 'input window, operand 13, single buffered']
    #allocation8 [shape = 'u8[8192]{0}', space=vmem, size = 0x2000, scoped, tag = 'output window, operand 0']
    %24 = vsyncpa [#allocation3], 0
    %25 = vsyncpa [#allocation6], 0
    %26 = vsyncpa [#allocation4], 0
    %s27 = scalar_lea.sflag [#allocation4], 1
    %28 = vsyncpa %s27, 0
    loop: start=0, step=1, limit=4
    $region2: #{transformer_lm_forward.1} parent=1 // loop_pre_header
      _
    $region3: #{transformer_lm_forward.1} parent=1 // loop_header
      %s30 = sphi 0, %s34
      %p31 = scmp.ge.s32.totalorder %s30, 4
      %s40 = sphi 0, %s42
      %s43 = sphi 0, %s40
      %s44 = sphi 0, %s43
      %s60 = sphi 0, %s44
      %s64 = sphi 0, %s64
      %s66 = sphi 0, %s64
      %s67 = sphi 0, %s66
      %s81 = sphi 0, %s67
      %s85 = sphi 0, %s85
      %s87 = sphi 0, %s85
      %s88 = sphi 0, %s87
      %s102 = sphi 0, %s88
      %s106 = sphi 0, %s106
      %s108 = sphi 0, %s106
      %s109 = sphi 0, %s108
      %s123 = sphi 0, %s109
      %s127 = sphi 0, %s127
      %s129 = sphi 0, %s127
      %s130 = sphi 0, %s129
      %s144 = sphi 0, %s130
      %s148 = sphi 0, %s148
      %s150 = sphi 0, %s148
      %s151 = sphi 0, %s150
      %s165 = sphi 0, %s151
      %s169 = sphi 0, %s169
      %s171 = sphi 0, %s169
      %s172 = sphi 0, %s171
      %s186 = sphi 0, %s172
      %s190 = sphi 0, %s190
      %s192 = sphi 0, %s190
      %s193 = sphi 0, %s192
      %s207 = sphi 0, %s193
      %s211 = sphi 0, %s211
      %s213 = sphi 0, %s211
      %s214 = sphi 0, %s213
      %s228 = sphi 0, %s214
      %s232 = sphi 0, %s232
      %s234 = sphi 0, %s232
      %s235 = sphi 0, %s234
      %s249 = sphi 0, %s235
      %s253 = sphi 0, %s253
      %s255 = sphi 0, %s253
      %s256 = sphi 0, %s255
      %s270 = sphi 0, %s256
      %s274 = sphi 0, %s274
      %s276 = sphi 0, %s274
      %s277 = sphi 0, %s276
      %s291 = sphi 0, %s277
      %s295 = sphi 0, %s295
      %s297 = sphi 0, %s295
      %s298 = sphi 0, %s297
      %s312 = sphi 0, %s298
      %s316 = sphi 0, %s316
      %s318 = sphi 0, %s316
      %s319 = sphi 0, %s318
      %s333 = sphi 0, %s319
      %s337 = sphi 0, %s337
      %s339 = sphi 0, %s337
      %s340 = sphi 0, %s339
      %s354 = sphi 0, %s340
      %s358 = sphi 0, %s358
      %s360 = sphi 0, %s358
      %s361 = sphi 0, %s360
      %s375 = sphi 0, %s361
      %s379 = sphi 0, %s379
      %s381 = sphi 0, %s379
      %s382 = sphi 0, %s381
      %s396 = sphi 0, %s382
      %s400 = sphi 0, %s400
      %s402 = sphi 0, %s400
      %s403 = sphi 0, %s402
      %s417 = sphi 0, %s403
      %s421 = sphi 0, %s421
      %s423 = sphi 0, %s421
      %s424 = sphi 0, %s423
      %s438 = sphi 0, %s424
      %s444 = sphi 0, %s446
      %s447 = sphi 0, %s444
      %s448 = sphi 0, %s447
      %s464 = sphi 0, %s448
    $region4: #{transformer_lm_forward.1} parent=1 // loop_header_branch
      %33 = sbr.rel (%p31) target = $region8
    $region5: #{transformer_lm_forward.1} parent=1 // loop_body
      %s35 = ssub.s32 %s30, 1
      %s36 = ssub.s32 %s30, 2
      %s37 = sadd.s32 %s30, 1
      %s38 = ssub.s32 %s30, %s37
      %p39 = scmp.eq.s32.totalorder %s38, 0
      %s41 = sadd.s32 %s40, 1
      %s42 = scalar_select %p39, %s40, %s41
      %p45 = pneg %p39
      %p46 = scmp.eq.s32.totalorder %s30, 1
      %p47 = por %p45, %p46
      %p48 = scmp.ne.s32.totalorder %s40, %s43
      %p49 = scmp.eq.s32.totalorder %s30, 0
      %p50 = por %p48, %p49
      %p51 = scmp.ne.s32.totalorder %s40, %s43
      %p52 = scmp.eq.s32.totalorder %s35, 1
      %p53 = por %p51, %p52
      %p54 = scmp.ne.s32.totalorder %s43, %s44
      %p55 = scmp.eq.s32.totalorder %s35, 0
      %p56 = por %p54, %p55
      %p57 = scmp.ne.s32.totalorder %s43, %s44
      %p58 = scmp.eq.s32.totalorder %s36, 1
      %p59 = por %p57, %p58
      %p61 = scmp.ne.s32.totalorder %s44, %s60
      %p62 = scmp.eq.s32.totalorder %s36, 0
      %p63 = por %p61, %p62
      %s65 = sadd.s32 %s64, 1
      %p68 = scmp.eq.s32.totalorder %s30, 1
      %p69 = scmp.ne.s32.totalorder %s64, %s66
      %p70 = scmp.eq.s32.totalorder %s30, 0
      %p71 = por %p69, %p70
      %p72 = scmp.ne.s32.totalorder %s64, %s66
      %p73 = scmp.eq.s32.totalorder %s35, 1
      %p74 = por %p72, %p73
      %p75 = scmp.ne.s32.totalorder %s66, %s67
      %p76 = scmp.eq.s32.totalorder %s35, 0
      %p77 = por %p75, %p76
      %p78 = scmp.ne.s32.totalorder %s66, %s67
      %p79 = scmp.eq.s32.totalorder %s36, 1
      %p80 = por %p78, %p79
      %p82 = scmp.ne.s32.totalorder %s67, %s81
      %p83 = scmp.eq.s32.totalorder %s36, 0
      %p84 = por %p82, %p83
      %s86 = sadd.s32 %s85, 1
      %p89 = scmp.eq.s32.totalorder %s30, 1
      %p90 = scmp.ne.s32.totalorder %s85, %s87
      %p91 = scmp.eq.s32.totalorder %s30, 0
      %p92 = por %p90, %p91
      %p93 = scmp.ne.s32.totalorder %s85, %s87
      %p94 = scmp.eq.s32.totalorder %s35, 1
      %p95 = por %p93, %p94
      %p96 = scmp.ne.s32.totalorder %s87, %s88
      %p97 = scmp.eq.s32.totalorder %s35, 0
      %p98 = por %p96, %p97
      %p99 = scmp.ne.s32.totalorder %s87, %s88
      %p100 = scmp.eq.s32.totalorder %s36, 1
      %p101 = por %p99, %p100
      %p103 = scmp.ne.s32.totalorder %s88, %s102
      %p104 = scmp.eq.s32.totalorder %s36, 0
      %p105 = por %p103, %p104
      %s107 = sadd.s32 %s106, 1
      %p110 = scmp.eq.s32.totalorder %s30, 1
      %p111 = scmp.ne.s32.totalorder %s106, %s108
      %p112 = scmp.eq.s32.totalorder %s30, 0
      %p113 = por %p111, %p112
      %p114 = scmp.ne.s32.totalorder %s106, %s108
      %p115 = scmp.eq.s32.totalorder %s35, 1
      %p116 = por %p114, %p115
      %p117 = scmp.ne.s32.totalorder %s108, %s109
      %p118 = scmp.eq.s32.totalorder %s35, 0
      %p119 = por %p117, %p118
      %p120 = scmp.ne.s32.totalorder %s108, %s109
      %p121 = scmp.eq.s32.totalorder %s36, 1
      %p122 = por %p120, %p121
      %p124 = scmp.ne.s32.totalorder %s109, %s123
      %p125 = scmp.eq.s32.totalorder %s36, 0
      %p126 = por %p124, %p125
      %s128 = sadd.s32 %s127, 1
      %p131 = scmp.eq.s32.totalorder %s30, 1
      %p132 = scmp.ne.s32.totalorder %s127, %s129
      %p133 = scmp.eq.s32.totalorder %s30, 0
      %p134 = por %p132, %p133
      %p135 = scmp.ne.s32.totalorder %s127, %s129
      %p136 = scmp.eq.s32.totalorder %s35, 1
      %p137 = por %p135, %p136
      %p138 = scmp.ne.s32.totalorder %s129, %s130
      %p139 = scmp.eq.s32.totalorder %s35, 0
      %p140 = por %p138, %p139
      %p141 = scmp.ne.s32.totalorder %s129, %s130
      %p142 = scmp.eq.s32.totalorder %s36, 1
      %p143 = por %p141, %p142
      %p145 = scmp.ne.s32.totalorder %s130, %s144
      %p146 = scmp.eq.s32.totalorder %s36, 0
      %p147 = por %p145, %p146
      %s149 = sadd.s32 %s148, 1
      %p152 = scmp.eq.s32.totalorder %s30, 1
      %p153 = scmp.ne.s32.totalorder %s148, %s150
      %p154 = scmp.eq.s32.totalorder %s30, 0
      %p155 = por %p153, %p154
      %p156 = scmp.ne.s32.totalorder %s148, %s150
      %p157 = scmp.eq.s32.totalorder %s35, 1
      %p158 = por %p156, %p157
      %p159 = scmp.ne.s32.totalorder %s150, %s151
      %p160 = scmp.eq.s32.totalorder %s35, 0
      %p161 = por %p159, %p160
      %p162 = scmp.ne.s32.totalorder %s150, %s151
      %p163 = scmp.eq.s32.totalorder %s36, 1
      %p164 = por %p162, %p163
      %p166 = scmp.ne.s32.totalorder %s151, %s165
      %p167 = scmp.eq.s32.totalorder %s36, 0
      %p168 = por %p166, %p167
      %s170 = sadd.s32 %s169, 1
      %p173 = scmp.eq.s32.totalorder %s30, 1
      %p174 = scmp.ne.s32.totalorder %s169, %s171
      %p175 = scmp.eq.s32.totalorder %s30, 0
      %p176 = por %p174, %p175
      %p177 = scmp.ne.s32.totalorder %s169, %s171
      %p178 = scmp.eq.s32.totalorder %s35, 1
      %p179 = por %p177, %p178
      %p180 = scmp.ne.s32.totalorder %s171, %s172
      %p181 = scmp.eq.s32.totalorder %s35, 0
      %p182 = por %p180, %p181
      %p183 = scmp.ne.s32.totalorder %s171, %s172
      %p184 = scmp.eq.s32.totalorder %s36, 1
      %p185 = por %p183, %p184
      %p187 = scmp.ne.s32.totalorder %s172, %s186
      %p188 = scmp.eq.s32.totalorder %s36, 0
      %p189 = por %p187, %p188
      %s191 = sadd.s32 %s190, 1
      %p194 = scmp.eq.s32.totalorder %s30, 1
      %p195 = scmp.ne.s32.totalorder %s190, %s192
      %p196 = scmp.eq.s32.totalorder %s30, 0
      %p197 = por %p195, %p196
      %p198 = scmp.ne.s32.totalorder %s190, %s192
      %p199 = scmp.eq.s32.totalorder %s35, 1
      %p200 = por %p198, %p199
      %p201 = scmp.ne.s32.totalorder %s192, %s193
      %p202 = scmp.eq.s32.totalorder %s35, 0
      %p203 = por %p201, %p202
      %p204 = scmp.ne.s32.totalorder %s192, %s193
      %p205 = scmp.eq.s32.totalorder %s36, 1
      %p206 = por %p204, %p205
      %p208 = scmp.ne.s32.totalorder %s193, %s207
      %p209 = scmp.eq.s32.totalorder %s36, 0
      %p210 = por %p208, %p209
      %s212 = sadd.s32 %s211, 1
      %p215 = scmp.eq.s32.totalorder %s30, 1
      %p216 = scmp.ne.s32.totalorder %s211, %s213
      %p217 = scmp.eq.s32.totalorder %s30, 0
      %p218 = por %p216, %p217
      %p219 = scmp.ne.s32.totalorder %s211, %s213
      %p220 = scmp.eq.s32.totalorder %s35, 1
      %p221 = por %p219, %p220
      %p222 = scmp.ne.s32.totalorder %s213, %s214
      %p223 = scmp.eq.s32.totalorder %s35, 0
      %p224 = por %p222, %p223
      %p225 = scmp.ne.s32.totalorder %s213, %s214
      %p226 = scmp.eq.s32.totalorder %s36, 1
      %p227 = por %p225, %p226
      %p229 = scmp.ne.s32.totalorder %s214, %s228
      %p230 = scmp.eq.s32.totalorder %s36, 0
      %p231 = por %p229, %p230
      %s233 = sadd.s32 %s232, 1
      %p236 = scmp.eq.s32.totalorder %s30, 1
      %p237 = scmp.ne.s32.totalorder %s232, %s234
      %p238 = scmp.eq.s32.totalorder %s30, 0
      %p239 = por %p237, %p238
      %p240 = scmp.ne.s32.totalorder %s232, %s234
      %p241 = scmp.eq.s32.totalorder %s35, 1
      %p242 = por %p240, %p241
      %p243 = scmp.ne.s32.totalorder %s234, %s235
      %p244 = scmp.eq.s32.totalorder %s35, 0
      %p245 = por %p243, %p244
      %p246 = scmp.ne.s32.totalorder %s234, %s235
      %p247 = scmp.eq.s32.totalorder %s36, 1
      %p248 = por %p246, %p247
      %p250 = scmp.ne.s32.totalorder %s235, %s249
      %p251 = scmp.eq.s32.totalorder %s36, 0
      %p252 = por %p250, %p251
      %s254 = sadd.s32 %s253, 1
      %p257 = scmp.eq.s32.totalorder %s30, 1
      %p258 = scmp.ne.s32.totalorder %s253, %s255
      %p259 = scmp.eq.s32.totalorder %s30, 0
      %p260 = por %p258, %p259
      %p261 = scmp.ne.s32.totalorder %s253, %s255
      %p262 = scmp.eq.s32.totalorder %s35, 1
      %p263 = por %p261, %p262
      %p264 = scmp.ne.s32.totalorder %s255, %s256
      %p265 = scmp.eq.s32.totalorder %s35, 0
      %p266 = por %p264, %p265
      %p267 = scmp.ne.s32.totalorder %s255, %s256
      %p268 = scmp.eq.s32.totalorder %s36, 1
      %p269 = por %p267, %p268
      %p271 = scmp.ne.s32.totalorder %s256, %s270
      %p272 = scmp.eq.s32.totalorder %s36, 0
      %p273 = por %p271, %p272
      %s275 = sadd.s32 %s274, 1
      %p278 = scmp.eq.s32.totalorder %s30, 1
      %p279 = scmp.ne.s32.totalorder %s274, %s276
      %p280 = scmp.eq.s32.totalorder %s30, 0
      %p281 = por %p279, %p280
      %p282 = scmp.ne.s32.totalorder %s274, %s276
      %p283 = scmp.eq.s32.totalorder %s35, 1
      %p284 = por %p282, %p283
      %p285 = scmp.ne.s32.totalorder %s276, %s277
      %p286 = scmp.eq.s32.totalorder %s35, 0
      %p287 = por %p285, %p286
      %p288 = scmp.ne.s32.totalorder %s276, %s277
      %p289 = scmp.eq.s32.totalorder %s36, 1
      %p290 = por %p288, %p289
      %p292 = scmp.ne.s32.totalorder %s277, %s291
      %p293 = scmp.eq.s32.totalorder %s36, 0
      %p294 = por %p292, %p293
      %s296 = sadd.s32 %s295, 1
      %p299 = scmp.eq.s32.totalorder %s30, 1
      %p300 = scmp.ne.s32.totalorder %s295, %s297
      %p301 = scmp.eq.s32.totalorder %s30, 0
      %p302 = por %p300, %p301
      %p303 = scmp.ne.s32.totalorder %s295, %s297
      %p304 = scmp.eq.s32.totalorder %s35, 1
      %p305 = por %p303, %p304
      %p306 = scmp.ne.s32.totalorder %s297, %s298
      %p307 = scmp.eq.s32.totalorder %s35, 0
      %p308 = por %p306, %p307
      %p309 = scmp.ne.s32.totalorder %s297, %s298
      %p310 = scmp.eq.s32.totalorder %s36, 1
      %p311 = por %p309, %p310
      %p313 = scmp.ne.s32.totalorder %s298, %s312
      %p314 = scmp.eq.s32.totalorder %s36, 0
      %p315 = por %p313, %p314
      %s317 = sadd.s32 %s316, 1
      %p320 = scmp.eq.s32.totalorder %s30, 1
      %p321 = scmp.ne.s32.totalorder %s316, %s318
      %p322 = scmp.eq.s32.totalorder %s30, 0
      %p323 = por %p321, %p322
      %p324 = scmp.ne.s32.totalorder %s316, %s318
      %p325 = scmp.eq.s32.totalorder %s35, 1
      %p326 = por %p324, %p325
      %p327 = scmp.ne.s32.totalorder %s318, %s319
      %p328 = scmp.eq.s32.totalorder %s35, 0
      %p329 = por %p327, %p328
      %p330 = scmp.ne.s32.totalorder %s318, %s319
      %p331 = scmp.eq.s32.totalorder %s36, 1
      %p332 = por %p330, %p331
      %p334 = scmp.ne.s32.totalorder %s319, %s333
      %p335 = scmp.eq.s32.totalorder %s36, 0
      %p336 = por %p334, %p335
      %s338 = sadd.s32 %s337, 1
      %p341 = scmp.eq.s32.totalorder %s30, 1
      %p342 = scmp.ne.s32.totalorder %s337, %s339
      %p343 = scmp.eq.s32.totalorder %s30, 0
      %p344 = por %p342, %p343
      %p345 = scmp.ne.s32.totalorder %s337, %s339
      %p346 = scmp.eq.s32.totalorder %s35, 1
      %p347 = por %p345, %p346
      %p348 = scmp.ne.s32.totalorder %s339, %s340
      %p349 = scmp.eq.s32.totalorder %s35, 0
      %p350 = por %p348, %p349
      %p351 = scmp.ne.s32.totalorder %s339, %s340
      %p352 = scmp.eq.s32.totalorder %s36, 1
      %p353 = por %p351, %p352
      %p355 = scmp.ne.s32.totalorder %s340, %s354
      %p356 = scmp.eq.s32.totalorder %s36, 0
      %p357 = por %p355, %p356
      %s359 = sadd.s32 %s358, 1
      %p362 = scmp.eq.s32.totalorder %s30, 1
      %p363 = scmp.ne.s32.totalorder %s358, %s360
      %p364 = scmp.eq.s32.totalorder %s30, 0
      %p365 = por %p363, %p364
      %p366 = scmp.ne.s32.totalorder %s358, %s360
      %p367 = scmp.eq.s32.totalorder %s35, 1
      %p368 = por %p366, %p367
      %p369 = scmp.ne.s32.totalorder %s360, %s361
      %p370 = scmp.eq.s32.totalorder %s35, 0
      %p371 = por %p369, %p370
      %p372 = scmp.ne.s32.totalorder %s360, %s361
      %p373 = scmp.eq.s32.totalorder %s36, 1
      %p374 = por %p372, %p373
      %p376 = scmp.ne.s32.totalorder %s361, %s375
      %p377 = scmp.eq.s32.totalorder %s36, 0
      %p378 = por %p376, %p377
      %s380 = sadd.s32 %s379, 1
      %p383 = scmp.eq.s32.totalorder %s30, 1
      %p384 = scmp.ne.s32.totalorder %s379, %s381
      %p385 = scmp.eq.s32.totalorder %s30, 0
      %p386 = por %p384, %p385
      %p387 = scmp.ne.s32.totalorder %s379, %s381
      %p388 = scmp.eq.s32.totalorder %s35, 1
      %p389 = por %p387, %p388
      %p390 = scmp.ne.s32.totalorder %s381, %s382
      %p391 = scmp.eq.s32.totalorder %s35, 0
      %p392 = por %p390, %p391
      %p393 = scmp.ne.s32.totalorder %s381, %s382
      %p394 = scmp.eq.s32.totalorder %s36, 1
      %p395 = por %p393, %p394
      %p397 = scmp.ne.s32.totalorder %s382, %s396
      %p398 = scmp.eq.s32.totalorder %s36, 0
      %p399 = por %p397, %p398
      %s401 = sadd.s32 %s400, 1
      %p404 = scmp.eq.s32.totalorder %s30, 1
      %p405 = scmp.ne.s32.totalorder %s400, %s402
      %p406 = scmp.eq.s32.totalorder %s30, 0
      %p407 = por %p405, %p406
      %p408 = scmp.ne.s32.totalorder %s400, %s402
      %p409 = scmp.eq.s32.totalorder %s35, 1
      %p410 = por %p408, %p409
      %p411 = scmp.ne.s32.totalorder %s402, %s403
      %p412 = scmp.eq.s32.totalorder %s35, 0
      %p413 = por %p411, %p412
      %p414 = scmp.ne.s32.totalorder %s402, %s403
      %p415 = scmp.eq.s32.totalorder %s36, 1
      %p416 = por %p414, %p415
      %p418 = scmp.ne.s32.totalorder %s403, %s417
      %p419 = scmp.eq.s32.totalorder %s36, 0
      %p420 = por %p418, %p419
      %s422 = sadd.s32 %s421, 1
      %p425 = scmp.eq.s32.totalorder %s30, 1
      %p426 = scmp.ne.s32.totalorder %s421, %s423
      %p427 = scmp.eq.s32.totalorder %s30, 0
      %p428 = por %p426, %p427
      %p429 = scmp.ne.s32.totalorder %s421, %s423
      %p430 = scmp.eq.s32.totalorder %s35, 1
      %p431 = por %p429, %p430
      %p432 = scmp.ne.s32.totalorder %s423, %s424
      %p433 = scmp.eq.s32.totalorder %s35, 0
      %p434 = por %p432, %p433
      %p435 = scmp.ne.s32.totalorder %s423, %s424
      %p436 = scmp.eq.s32.totalorder %s36, 1
      %p437 = por %p435, %p436
      %p439 = scmp.ne.s32.totalorder %s424, %s438
      %p440 = scmp.eq.s32.totalorder %s36, 0
      %p441 = por %p439, %p440
      %s442 = ssub.s32 %s30, %s37
      %p443 = scmp.eq.s32.totalorder %s442, 0
      %s445 = sadd.s32 %s444, 1
      %s446 = scalar_select %p443, %s444, %s445
      %p449 = pneg %p443
      %p450 = scmp.eq.s32.totalorder %s30, 1
      %p451 = por %p449, %p450
      %p452 = scmp.ne.s32.totalorder %s444, %s447
      %p453 = scmp.eq.s32.totalorder %s30, 0
      %p454 = por %p452, %p453
      %p455 = scmp.ne.s32.totalorder %s444, %s447
      %p456 = scmp.eq.s32.totalorder %s35, 1
      %p457 = por %p455, %p456
      %p458 = scmp.ne.s32.totalorder %s447, %s448
      %p459 = scmp.eq.s32.totalorder %s35, 0
      %p460 = por %p458, %p459
      %p461 = scmp.ne.s32.totalorder %s447, %s448
      %p462 = scmp.eq.s32.totalorder %s36, 1
      %p463 = por %p461, %p462
      %p465 = scmp.ne.s32.totalorder %s448, %s464
      %p466 = scmp.eq.s32.totalorder %s36, 0
      %p467 = por %p465, %p466
      %p468 = scmp.le.s32.totalorder 1, %s30
      %p469 = scmp.lt.s32.totalorder %s30, 3
      %p470 = pnand %p468, %p469
      %p471 = pneg %p470
      // Predicated region
      $region9: #{transformer_lm_forward.1} parent=5 // pred_check
        _
      $region10: #{transformer_lm_forward.1} parent=5 // pred_check_branch
        %473 = sbr.rel (%p470) target = $region12
      $region11: #{transformer_lm_forward.1} parent=5 // pred_region
        %s474 = ssub.s32 %s30, 1
        // Predicated region
        $region13: #{transformer_lm_forward.1} parent=11 // pred_check
          %p475 = pneg %p77
        $region14: #{transformer_lm_forward.1} parent=11 // pred_check_branch
          %477 = sbr.rel (%p475) target = $region16
        $region15: #{transformer_lm_forward.1} parent=11 // pred_region
          _
        $region16: #{transformer_lm_forward.1} parent=11 // pred_fallthru
          _
        // Predicated region
        $region17: #{transformer_lm_forward.1} parent=11 // pred_check
          %p478 = pneg %p98
        $region18: #{transformer_lm_forward.1} parent=11 // pred_check_branch
          %480 = sbr.rel (%p478) target = $region20
        $region19: #{transformer_lm_forward.1} parent=11 // pred_region
          _
        $region20: #{transformer_lm_forward.1} parent=11 // pred_fallthru
          _
        // Predicated region
        $region21: #{transformer_lm_forward.1} parent=11 // pred_check
          %p481 = pneg %p119
        $region22: #{transformer_lm_forward.1} parent=11 // pred_check_branch
          %483 = sbr.rel (%p481) target = $region24
        $region23: #{transformer_lm_forward.1} parent=11 // pred_region
          _
        $region24: #{transformer_lm_forward.1} parent=11 // pred_fallthru
          _
        // Predicated region
        $region25: #{transformer_lm_forward.1} parent=11 // pred_check
          %p484 = pneg %p140
        $region26: #{transformer_lm_forward.1} parent=11 // pred_check_branch
          %486 = sbr.rel (%p484) target = $region28
        $region27: #{transformer_lm_forward.1} parent=11 // pred_region
          %s488 = ssub.s32 20480, 20480
          %489 = vsyncadd [#allocation3], %s488
          %s490 = sshll.u32 [#allocation2], 4
          %s491 = int_to_ptr.vmem [resolvable:$true] %s490
          %496 = dma.hbm_to_vmem [thread:$0]  %s4, 20480, %s491, [#allocation3], 320, 320, 20
        $region28: #{transformer_lm_forward.1} parent=11 // pred_fallthru
          _
        // Predicated region
        $region29: #{transformer_lm_forward.1} parent=11 // pred_check
          %p497 = pneg %p161
        $region30: #{transformer_lm_forward.1} parent=11 // pred_check_branch
          %499 = sbr.rel (%p497) target = $region32
        $region31: #{transformer_lm_forward.1} parent=11 // pred_region
          _
        $region32: #{transformer_lm_forward.1} parent=11 // pred_fallthru
          _
        // Predicated region
        $region33: #{transformer_lm_forward.1} parent=11 // pred_check
          %p500 = pneg %p182
        $region34: #{transformer_lm_forward.1} parent=11 // pred_check_branch
          %502 = sbr.rel (%p500) target = $region36
        $region35: #{transformer_lm_forward.1} parent=11 // pred_region
          _
        $region36: #{transformer_lm_forward.1} parent=11 // pred_fallthru
          _
        // Predicated region
        $region37: #{transformer_lm_forward.1} parent=11 // pred_check
          %p503 = pneg %p203
        $region38: #{transformer_lm_forward.1} parent=11 // pred_check_branch
          %505 = sbr.rel (%p503) target = $region40
        $region39: #{transformer_lm_forward.1} parent=11 // pred_region
          _
        $region40: #{transformer_lm_forward.1} parent=11 // pred_fallthru
          _
        // Predicated region
        $region41: #{transformer_lm_forward.1} parent=11 // pred_check
          %p506 = pneg %p224
        $region42: #{transformer_lm_forward.1} parent=11 // pred_check_branch
          %508 = sbr.rel (%p506) target = $region44
        $region43: #{transformer_lm_forward.1} parent=11 // pred_region
          _
        $region44: #{transformer_lm_forward.1} parent=11 // pred_fallthru
          _
        // Predicated region
        $region45: #{transformer_lm_forward.1} parent=11 // pred_check
          %p509 = pneg %p245
        $region46: #{transformer_lm_forward.1} parent=11 // pred_check_branch
          %511 = sbr.rel (%p509) target = $region48
        $region47: #{transformer_lm_forward.1} parent=11 // pred_region
          _
        $region48: #{transformer_lm_forward.1} parent=11 // pred_fallthru
          _
        // Predicated region
        $region49: #{transformer_lm_forward.1} parent=11 // pred_check
          %p512 = pneg %p266
        $region50: #{transformer_lm_forward.1} parent=11 // pred_check_branch
          %514 = sbr.rel (%p512) target = $region52
        $region51: #{transformer_lm_forward.1} parent=11 // pred_region
          _
        $region52: #{transformer_lm_forward.1} parent=11 // pred_fallthru
          _
        // Predicated region
        $region53: #{transformer_lm_forward.1} parent=11 // pred_check
          %p515 = pneg %p287
        $region54: #{transformer_lm_forward.1} parent=11 // pred_check_branch
          %517 = sbr.rel (%p515) target = $region56
        $region55: #{transformer_lm_forward.1} parent=11 // pred_region
          %s519 = ssub.s32 16384, 16384
          %520 = vsyncadd [#allocation6], %s519
          %s521 = sshll.u32 [#allocation5], 4
          %s522 = int_to_ptr.vmem [resolvable:$true] %s521
          %527 = dma.hbm_to_vmem [thread:$0]  %s11, 16384, %s522, [#allocation6], 256, 256, 16
        $region56: #{transformer_lm_forward.1} parent=11 // pred_fallthru
          _
        // Predicated region
        $region57: #{transformer_lm_forward.1} parent=11 // pred_check
          %p528 = pneg %p308
        $region58: #{transformer_lm_forward.1} parent=11 // pred_check_branch
          %530 = sbr.rel (%p528) target = $region60
        $region59: #{transformer_lm_forward.1} parent=11 // pred_region
          _
        $region60: #{transformer_lm_forward.1} parent=11 // pred_fallthru
          _
        // Predicated region
        $region61: #{transformer_lm_forward.1} parent=11 // pred_check
          %p531 = pneg %p329
        $region62: #{transformer_lm_forward.1} parent=11 // pred_check_branch
          %533 = sbr.rel (%p531) target = $region64
        $region63: #{transformer_lm_forward.1} parent=11 // pred_region
          %s535 = ssub.s32 16384, 16384
          %536 = vsyncadd [#allocation6], %s535
          %s537 = sshll.u32 [#allocation7], 4
          %s538 = int_to_ptr.vmem [resolvable:$true] %s537
          %543 = dma.hbm_to_vmem [thread:$0]  %s13, 16384, %s538, [#allocation6], 64, 64, 4
        $region64: #{transformer_lm_forward.1} parent=11 // pred_fallthru
          _
        // Predicated region
        $region65: #{transformer_lm_forward.1} parent=11 // pred_check
          %p544 = pneg %p350
        $region66: #{transformer_lm_forward.1} parent=11 // pred_check_branch
          %546 = sbr.rel (%p544) target = $region68
        $region67: #{transformer_lm_forward.1} parent=11 // pred_region
          _
        $region68: #{transformer_lm_forward.1} parent=11 // pred_fallthru
          _
        // Predicated region
        $region69: #{transformer_lm_forward.1} parent=11 // pred_check
          %p547 = pneg %p371
        $region70: #{transformer_lm_forward.1} parent=11 // pred_check_branch
          %549 = sbr.rel (%p547) target = $region72
        $region71: #{transformer_lm_forward.1} parent=11 // pred_region
          _
        $region72: #{transformer_lm_forward.1} parent=11 // pred_fallthru
          _
        // Predicated region
        $region73: #{transformer_lm_forward.1} parent=11 // pred_check
          %p550 = pneg %p392
        $region74: #{transformer_lm_forward.1} parent=11 // pred_check_branch
          %552 = sbr.rel (%p550) target = $region76
        $region75: #{transformer_lm_forward.1} parent=11 // pred_region
          _
        $region76: #{transformer_lm_forward.1} parent=11 // pred_fallthru
          _
        // Predicated region
        $region77: #{transformer_lm_forward.1} parent=11 // pred_check
          %p553 = pneg %p413
        $region78: #{transformer_lm_forward.1} parent=11 // pred_check_branch
          %555 = sbr.rel (%p553) target = $region80
        $region79: #{transformer_lm_forward.1} parent=11 // pred_region
          _
        $region80: #{transformer_lm_forward.1} parent=11 // pred_fallthru
          _
        // Predicated region
        $region81: #{transformer_lm_forward.1} parent=11 // pred_check
          %p556 = pneg %p434
        $region82: #{transformer_lm_forward.1} parent=11 // pred_check_branch
          %558 = sbr.rel (%p556) target = $region84
        $region83: #{transformer_lm_forward.1} parent=11 // pred_region
          _
        $region84: #{transformer_lm_forward.1} parent=11 // pred_fallthru
          _
      $region12: #{transformer_lm_forward.1} parent=5 // pred_fallthru
        _
      %p559 = scmp.lt.s32.totalorder %s30, 2
      // Predicated region
      $region85: #{transformer_lm_forward.1} parent=5 // pred_check
        %p560 = pneg %p559
      $region86: #{transformer_lm_forward.1} parent=5 // pred_check_branch
        %562 = sbr.rel (%p560) target = $region88
      $region87: #{transformer_lm_forward.1} parent=5 // pred_region
        // Predicated region
        $region89: #{transformer_lm_forward.1} parent=87 // pred_check
          %p563 = pneg %p50
        $region90: #{transformer_lm_forward.1} parent=87 // pred_check_branch
          %565 = sbr.rel (%p563) target = $region92
        $region91: #{transformer_lm_forward.1} parent=87 // pred_region
          %p566 = scmp.lt.s32.totalorder %s30, 1
          %s567 = scalar_select %p566, %s30, 1
          %s568 = smul.addr %s567, 8
          %s569 = scalar_lea.vmem %s0, %s568
        $region92: #{transformer_lm_forward.1} parent=87 // pred_fallthru
          _
      $region88: #{transformer_lm_forward.1} parent=5 // pred_fallthru
        _
      %p570 = scmp.le.s32.totalorder 1, %s30
      %p571 = scmp.lt.s32.totalorder %s30, 3
      %p572 = pnand %p570, %p571
      %p573 = pneg %p572
      // Predicated region
      $region93: #{transformer_lm_forward.1} parent=5 // pred_check
        _
      $region94: #{transformer_lm_forward.1} parent=5 // pred_check_branch
        %575 = sbr.rel (%p572) target = $region96
      $region95: #{transformer_lm_forward.1} parent=5 // pred_region
        %s576 = ssub.s32 %s30, 1
        // Predicated region
        $region97: #{transformer_lm_forward.1} parent=95 // pred_check
          %p577 = pneg %p140
        $region98: #{transformer_lm_forward.1} parent=95 // pred_check_branch
          %579 = sbr.rel (%p577) target = $region100
        $region99: #{transformer_lm_forward.1} parent=95 // pred_region
          %580 = dma.done [#allocation3], 20480
        $region100: #{transformer_lm_forward.1} parent=95 // pred_fallthru
          _
        // Predicated region
        $region101: #{transformer_lm_forward.1} parent=95 // pred_check
          %p581 = pneg %p287
        $region102: #{transformer_lm_forward.1} parent=95 // pred_check_branch
          %583 = sbr.rel (%p581) target = $region104
        $region103: #{transformer_lm_forward.1} parent=95 // pred_region
          %584 = dma.done [#allocation6], 16384
        $region104: #{transformer_lm_forward.1} parent=95 // pred_fallthru
          _
        // Predicated region
        $region105: #{transformer_lm_forward.1} parent=95 // pred_check
          %p585 = pneg %p329
        $region106: #{transformer_lm_forward.1} parent=95 // pred_check_branch
          %587 = sbr.rel (%p585) target = $region108
        $region107: #{transformer_lm_forward.1} parent=95 // pred_region
          %588 = dma.done [#allocation6], 16384
        $region108: #{transformer_lm_forward.1} parent=95 // pred_fallthru
          _
        %p589 = scmp.lt.s32.totalorder %s35, 1
        %s590 = scalar_select %p589, %s35, 1
        %s591 = smul.addr %s590, 8
        %s592 = scalar_lea.vmem %s0, %s591
        %p593 = pneg %p56
        %p594 = pneg %p53
        %p595 = pneg %p77
        %p596 = pneg %p74
        %p597 = pneg %p98
        %p598 = pneg %p95
        %p599 = pneg %p119
        %p600 = pneg %p116
        %p601 = pneg %p140
        %p602 = pneg %p137
        %p603 = pneg %p161
        %p604 = pneg %p158
        %p605 = pneg %p182
        %p606 = pneg %p179
        %p607 = pneg %p203
        %p608 = pneg %p200
        %p609 = pneg %p224
        %p610 = pneg %p221
        %p611 = pneg %p245
        %p612 = pneg %p242
        %p613 = pneg %p266
        %p614 = pneg %p263
        %p615 = pneg %p287
        %p616 = pneg %p284
        %p617 = pneg %p308
        %p618 = pneg %p305
        %p619 = pneg %p329
        %p620 = pneg %p326
        %p621 = pneg %p350
        %p622 = pneg %p347
        %p623 = pneg %p371
        %p624 = pneg %p368
        %p625 = pneg %p392
        %p626 = pneg %p389
        %p627 = pneg %p413
        %p628 = pneg %p410
        %p629 = pneg %p434
        %p630 = pneg %p431
        %p631 = pneg %p460
        %p632 = pneg %p457
        %s633 = sand.u32 %s447, 1
        %s634 = scalar_lea.sflag [#allocation4], %s633
        %s635 = sand.u32 %s447, 1
        %s636 = smul.addr %s635, 8
        %s637 = scalar_lea.vmem [#allocation8], %s636
        %p638 = scmp.lt.s32.totalorder %s35, 1
        %s639 = scalar_select %p638, %s35, 1
        %s640 = smul.addr %s639, 8
        %s641 = scalar_lea.vmem %s0, %s640
        %v643 = vld [vmem:[%s641] sm:$0xff]
        %v644 = vld [vmem:[%s1] sm:$0xff]
        %v645 = vld [vmem:[%s2] sm:$0xff]
        %v646 = vld [vmem:[%s3] sm:$0xff]
        loop: start=0, step=1, limit=4
        $region109: #{transformer_lm_forward.1} parent=95 // loop_pre_header
          _
        $region110: #{transformer_lm_forward.1} parent=95 // loop_header
          %s648 = sphi 0, %s652
          %p649 = scmp.ge.s32.totalorder %s648, 4
          %v653 = vphi %v643, %v2438
        $region111: #{transformer_lm_forward.1} parent=95 // loop_header_branch
          %651 = sbr.rel (%p649) target = $region115
        $region112: #{transformer_lm_forward.1} parent=95 // loop_body
          %s654 = scalar_lea.vmem %s7, %s648
          %v655 = vld [vmem:[%s654] sm:$0x1]
          %s656 = scalar_lea.vmem %s8, %s648
          %v657 = vld [vmem:[%s656] sm:$0x1]
          %658 = vadd.xlane.f32.xlu0 %v653
          %v659 = vpop.xlane.xlu0 %658
          %v660 = vrcp.pop 128.0
          %v661 = vmul.f32 %v659, %v660
          %v662 = vsub.f32 %v653, %v661
          %v663 = vmul.f32 %v662, %v662
          %664 = vadd.xlane.f32.xlu0 %v663
          %v665 = vpop.xlane.xlu0 %664
          %v666 = vmul.f32 %v665, %v660
          %v667 = vadd.f32 %v666, 1e-05
          %v668 = vrsqrt.pop %v667
          %v669 = vmul.f32 %v662, %v668
          %v671 = vlaneseq
          %v672 = vshrl.u32 %v671, 7
          %v673 = vsub.s32 0, %v672
          %v674 = vrot.slane %v655, %v673
          %v676 = vmul.f32 %v669, %v674
          %v678 = vlaneseq
          %v679 = vshrl.u32 %v678, 7
          %v680 = vsub.s32 0, %v679
          %v681 = vrot.slane %v657, %v680
          %v683 = vadd.f32 %v676, %v681
          %v684 = vpack.c.bf16 %v683, %v683
          %s685 = smul.u32 %s648, 80
          %s686 = smul.addr %s685, 4
          %s687 = scalar_lea.vmem [#allocation2], %s686
          %v688 = vld [vmem:[%s687] sm:$0xff]
          %v689 = vld [vmem:[%s687 + $0x8] sm:$0xff]
          %v690 = vld [vmem:[%s687 + $0x10] sm:$0xf]
          %v691 = vld [vmem:[%s687 + $0x14] sm:$0xff]
          %v692 = vld [vmem:[%s687 + $0x1c] sm:$0xff]
          %v693 = vld [vmem:[%s687 + $0x24] sm:$0xf]
          %v694 = vld [vmem:[%s687 + $0x28] sm:$0xff]
          %v695 = vld [vmem:[%s687 + $0x30] sm:$0xff]
          %v696 = vld [vmem:[%s687 + $0x38] sm:$0xf]
          %v697 = vld [vmem:[%s687 + $0x3c] sm:$0xff]
          %v698 = vld [vmem:[%s687 + $0x44] sm:$0xff]
          %v699 = vld [vmem:[%s687 + $0x4c] sm:$0xf]
          %v700 = vld [vmem:[%s687 + $0x50] sm:$0xff]
          %v701 = vld [vmem:[%s687 + $0x58] sm:$0xff]
          %v702 = vld [vmem:[%s687 + $0x60] sm:$0xf]
          %v703 = vld [vmem:[%s687 + $0x64] sm:$0xff]
          %v704 = vld [vmem:[%s687 + $0x6c] sm:$0xff]
          %v705 = vld [vmem:[%s687 + $0x74] sm:$0xf]
          %v706 = vld [vmem:[%s687 + $0x78] sm:$0xff]
          %v707 = vld [vmem:[%s687 + $0x80] sm:$0xff]
          %v708 = vld [vmem:[%s687 + $0x88] sm:$0xf]
          %v709 = vld [vmem:[%s687 + $0x8c] sm:$0xff]
          %v710 = vld [vmem:[%s687 + $0x94] sm:$0xff]
          %v711 = vld [vmem:[%s687 + $0x9c] sm:$0xf]
          %v712 = vld [vmem:[%s687 + $0xa0] sm:$0xff]
          %v713 = vld [vmem:[%s687 + $0xa8] sm:$0xff]
          %v714 = vld [vmem:[%s687 + $0xb0] sm:$0xf]
          %v715 = vld [vmem:[%s687 + $0xb4] sm:$0xff]
          %v716 = vld [vmem:[%s687 + $0xbc] sm:$0xff]
          %v717 = vld [vmem:[%s687 + $0xc4] sm:$0xf]
          %v718 = vld [vmem:[%s687 + $0xc8] sm:$0xff]
          %v719 = vld [vmem:[%s687 + $0xd0] sm:$0xff]
          %v720 = vld [vmem:[%s687 + $0xd8] sm:$0xf]
          %v721 = vld [vmem:[%s687 + $0xdc] sm:$0xff]
          %v722 = vld [vmem:[%s687 + $0xe4] sm:$0xff]
          %v723 = vld [vmem:[%s687 + $0xec] sm:$0xf]
          %v724 = vld [vmem:[%s687 + $0xf0] sm:$0xff]
          %v725 = vld [vmem:[%s687 + $0xf8] sm:$0xff]
          %v726 = vld [vmem:[%s687 + $0x100] sm:$0xf]
          %v727 = vld [vmem:[%s687 + $0x104] sm:$0xff]
          %v728 = vld [vmem:[%s687 + $0x10c] sm:$0xff]
          %v729 = vld [vmem:[%s687 + $0x114] sm:$0xf]
          %v730 = vld [vmem:[%s687 + $0x118] sm:$0xff]
          %v731 = vld [vmem:[%s687 + $0x120] sm:$0xff]
          %v732 = vld [vmem:[%s687 + $0x128] sm:$0xf]
          %v733 = vld [vmem:[%s687 + $0x12c] sm:$0xff]
          %v734 = vld [vmem:[%s687 + $0x134] sm:$0xff]
          %v735 = vld [vmem:[%s687 + $0x13c] sm:$0xf]
          %v784 = vunpack.c.l.b16 %v688
          %v785 = vunpack.c.h.b16 %v688
          %v786 = vunpack.c.l.b16 %v689
          %v787 = vunpack.c.h.b16 %v689
          %v788 = vunpack.c.l.b16 %v690
          %v789 = vunpack.c.l.b16 %v691
          %v790 = vunpack.c.h.b16 %v691
          %v791 = vunpack.c.l.b16 %v692
          %v792 = vunpack.c.h.b16 %v692
          %v793 = vunpack.c.l.b16 %v693
          %v794 = vunpack.c.l.b16 %v694
          %v795 = vunpack.c.h.b16 %v694
          %v796 = vunpack.c.l.b16 %v695
          %v797 = vunpack.c.h.b16 %v695
          %v798 = vunpack.c.l.b16 %v696
          %v799 = vunpack.c.l.b16 %v697
          %v800 = vunpack.c.h.b16 %v697
          %v801 = vunpack.c.l.b16 %v698
          %v802 = vunpack.c.h.b16 %v698
          %v803 = vunpack.c.l.b16 %v699
          %v804 = vunpack.c.l.b16 %v700
          %v805 = vunpack.c.h.b16 %v700
          %v806 = vunpack.c.l.b16 %v701
          %v807 = vunpack.c.h.b16 %v701
          %v808 = vunpack.c.l.b16 %v702
          %v809 = vunpack.c.l.b16 %v703
          %v810 = vunpack.c.h.b16 %v703
          %v811 = vunpack.c.l.b16 %v704
          %v812 = vunpack.c.h.b16 %v704
          %v813 = vunpack.c.l.b16 %v705
          %v814 = vunpack.c.l.b16 %v706
          %v815 = vunpack.c.h.b16 %v706
          %v816 = vunpack.c.l.b16 %v707
          %v817 = vunpack.c.h.b16 %v707
          %v818 = vunpack.c.l.b16 %v708
          %v819 = vunpack.c.l.b16 %v709
          %v820 = vunpack.c.h.b16 %v709
          %v821 = vunpack.c.l.b16 %v710
          %v822 = vunpack.c.h.b16 %v710
          %v823 = vunpack.c.l.b16 %v711
          %v824 = vunpack.c.l.b16 %v712
          %v825 = vunpack.c.h.b16 %v712
          %v826 = vunpack.c.l.b16 %v713
          %v827 = vunpack.c.h.b16 %v713
          %v828 = vunpack.c.l.b16 %v714
          %v829 = vunpack.c.l.b16 %v715
          %v830 = vunpack.c.h.b16 %v715
          %v831 = vunpack.c.l.b16 %v716
          %v832 = vunpack.c.h.b16 %v716
          %v833 = vunpack.c.l.b16 %v717
          %v834 = vunpack.c.l.b16 %v718
          %v835 = vunpack.c.h.b16 %v718
          %v836 = vunpack.c.l.b16 %v719
          %v837 = vunpack.c.h.b16 %v719
          %v838 = vunpack.c.l.b16 %v720
          %v839 = vunpack.c.l.b16 %v721
          %v840 = vunpack.c.h.b16 %v721
          %v841 = vunpack.c.l.b16 %v722
          %v842 = vunpack.c.h.b16 %v722
          %v843 = vunpack.c.l.b16 %v723
          %v844 = vunpack.c.l.b16 %v724
          %v845 = vunpack.c.h.b16 %v724
          %v846 = vunpack.c.l.b16 %v725
          %v847 = vunpack.c.h.b16 %v725
          %v848 = vunpack.c.l.b16 %v726
          %v849 = vunpack.c.l.b16 %v727
          %v850 = vunpack.c.h.b16 %v727
          %v851 = vunpack.c.l.b16 %v728
          %v852 = vunpack.c.h.b16 %v728
          %v853 = vunpack.c.l.b16 %v729
          %v854 = vunpack.c.l.b16 %v730
          %v855 = vunpack.c.h.b16 %v730
          %v856 = vunpack.c.l.b16 %v731
          %v857 = vunpack.c.h.b16 %v731
          %v858 = vunpack.c.l.b16 %v732
          %v859 = vunpack.c.l.b16 %v733
          %v860 = vunpack.c.h.b16 %v733
          %v861 = vunpack.c.l.b16 %v734
          %v862 = vunpack.c.h.b16 %v734
          %v863 = vunpack.c.l.b16 %v735
          %v864 = vpack.c.b16 %v789, %v784
          %v865 = vpack.c.b16 %v790, %v785
          %v866 = vpack.c.b16 %v791, %v786
          %v867 = vpack.c.b16 %v792, %v787
          %v868 = vpack.c.b16 %v793, %v788
          %v869 = vpack.c.b16 %v799, %v794
          %v870 = vpack.c.b16 %v800, %v795
          %v871 = vpack.c.b16 %v801, %v796
          %v872 = vpack.c.b16 %v802, %v797
          %v873 = vpack.c.b16 %v803, %v798
          %v874 = vpack.c.b16 %v809, %v804
          %v875 = vpack.c.b16 %v810, %v805
          %v876 = vpack.c.b16 %v811, %v806
          %v877 = vpack.c.b16 %v812, %v807
          %v878 = vpack.c.b16 %v813, %v808
          %v879 = vpack.c.b16 %v819, %v814
          %v880 = vpack.c.b16 %v820, %v815
          %v881 = vpack.c.b16 %v821, %v816
          %v882 = vpack.c.b16 %v822, %v817
          %v883 = vpack.c.b16 %v823, %v818
          %v884 = vpack.c.b16 %v829, %v824
          %v885 = vpack.c.b16 %v830, %v825
          %v886 = vpack.c.b16 %v831, %v826
          %v887 = vpack.c.b16 %v832, %v827
          %v888 = vpack.c.b16 %v833, %v828
          %v889 = vpack.c.b16 %v839, %v834
          %v890 = vpack.c.b16 %v840, %v835
          %v891 = vpack.c.b16 %v841, %v836
          %v892 = vpack.c.b16 %v842, %v837
          %v893 = vpack.c.b16 %v843, %v838
          %v894 = vpack.c.b16 %v849, %v844
          %v895 = vpack.c.b16 %v850, %v845
          %v896 = vpack.c.b16 %v851, %v846
          %v897 = vpack.c.b16 %v852, %v847
          %v898 = vpack.c.b16 %v853, %v848
          %v899 = vpack.c.b16 %v859, %v854
          %v900 = vpack.c.b16 %v860, %v855
          %v901 = vpack.c.b16 %v861, %v856
          %v902 = vpack.c.b16 %v862, %v857
          %v903 = vpack.c.b16 %v863, %v858
          %944 = vmatprep.subr.bf16.mxu0 %v865
          %945 = vmatpush1.bf16.msra.mxu0 %v864
          %946 = vmatprep.subr.bf16.mxu0 %v870
          %947 = vmatpush1.bf16.msra.mxu0 %v869
          %948 = vmatprep.subr.bf16.mxu0 %v875
          %949 = vmatpush1.bf16.msra.mxu0 %v874
          %950 = vmatprep.subr.bf16.mxu0 %v880
          %951 = vmatpush1.bf16.msra.mxu0 %v879
          %952 = vmatprep.subr.bf16.mxu0 %v885
          %953 = vmatpush1.bf16.msra.mxu0 %v884
          %954 = vmatprep.subr.bf16.mxu0 %v890
          %955 = vmatpush1.bf16.msra.mxu0 %v889
          %956 = vmatprep.subr.bf16.mxu0 %v895
          %957 = vmatpush1.bf16.msra.mxu0 %v894
          %958 = vmatprep.subr.bf16.mxu0 %v900
          %959 = vmatpush1.bf16.msra.mxu0 %v899
          %960 = vmatprep.subr.bf16.mxu0 0
          %961 = vmatpush1.bf16.msra.mxu0 0
          %962 = vmatprep.subr.bf16.mxu0 0
          %963 = vmatpush1.bf16.msra.mxu0 0
          %964 = vmatprep.subr.bf16.mxu0 0
          %965 = vmatpush1.bf16.msra.mxu0 0
          %966 = vmatprep.subr.bf16.mxu0 0
          %967 = vmatpush1.bf16.msra.mxu0 0
          %968 = vmatprep.subr.bf16.mxu0 0
          %969 = vmatpush1.bf16.msra.mxu0 0
          %970 = vmatprep.subr.bf16.mxu0 0
          %971 = vmatpush1.bf16.msra.mxu0 0
          %972 = vmatprep.subr.bf16.mxu0 0
          %973 = vmatpush1.bf16.msra.mxu0 0
          %974 = vmatprep.subr.bf16.mxu0 0
          %975 = vmatpush1.bf16.msra.mxu0 0
          %976 = vmatprep.mubr.bf16.mxu0 0
          %977 = vmatmul.mubr.bf16.gmra.mrb[0].mxu0 %v684
          %v978 = vpop.f32.mrb[0].mxu0
          %v979 = vadd.f32 0.0, %v978
          %v980 = vpop.f32.mrb[0].mxu0
          %v981 = vadd.f32 0.0, %v980
          %v982 = vpop.f32.mrb[0].mxu0
          %v983 = vpop.f32.mrb[0].mxu0
          %984 = vdwg.mxu0
          %985 = vmatprep.subr.bf16.mxu0 %v867
          %986 = vmatpush1.bf16.msra.mxu0 %v866
          %987 = vmatprep.subr.bf16.mxu0 %v872
          %988 = vmatpush1.bf16.msra.mxu0 %v871
          %989 = vmatprep.subr.bf16.mxu0 %v877
          %990 = vmatpush1.bf16.msra.mxu0 %v876
          %991 = vmatprep.subr.bf16.mxu0 %v882
          %992 = vmatpush1.bf16.msra.mxu0 %v881
          %993 = vmatprep.subr.bf16.mxu0 %v887
          %994 = vmatpush1.bf16.msra.mxu0 %v886
          %995 = vmatprep.subr.bf16.mxu0 %v892
          %996 = vmatpush1.bf16.msra.mxu0 %v891
          %997 = vmatprep.subr.bf16.mxu0 %v897
          %998 = vmatpush1.bf16.msra.mxu0 %v896
          %999 = vmatprep.subr.bf16.mxu0 %v902
          %1000 = vmatpush1.bf16.msra.mxu0 %v901
          %1001 = vmatprep.subr.bf16.mxu0 0
          %1002 = vmatpush1.bf16.msra.mxu0 0
          %1003 = vmatprep.subr.bf16.mxu0 0
          %1004 = vmatpush1.bf16.msra.mxu0 0
          %1005 = vmatprep.subr.bf16.mxu0 0
          %1006 = vmatpush1.bf16.msra.mxu0 0
          %1007 = vmatprep.subr.bf16.mxu0 0
          %1008 = vmatpush1.bf16.msra.mxu0 0
          %1009 = vmatprep.subr.bf16.mxu0 0
          %1010 = vmatpush1.bf16.msra.mxu0 0
          %1011 = vmatprep.subr.bf16.mxu0 0
          %1012 = vmatpush1.bf16.msra.mxu0 0
          %1013 = vmatprep.subr.bf16.mxu0 0
          %1014 = vmatpush1.bf16.msra.mxu0 0
          %1015 = vmatprep.subr.bf16.mxu0 0
          %1016 = vmatpush1.bf16.msra.mxu0 0
          %1017 = vmatprep.mubr.bf16.mxu0 0
          %1018 = vmatmul.mubr.bf16.gmra.mrb[0].mxu0 %v684
          %v1019 = vpop.f32.mrb[0].mxu0
          %v1020 = vadd.f32 0.0, %v1019
          %v1021 = vpop.f32.mrb[0].mxu0
          %v1022 = vadd.f32 0.0, %v1021
          %v1023 = vpop.f32.mrb[0].mxu0
          %v1024 = vpop.f32.mrb[0].mxu0
          %1025 = vdwg.mxu0
          %1026 = vmatprep.subr.bf16.mxu0 0
          %1027 = vmatpush1.bf16.msra.mxu0 %v868
          %1028 = vmatprep.subr.bf16.mxu0 0
          %1029 = vmatpush1.bf16.msra.mxu0 %v873
          %1030 = vmatprep.subr.bf16.mxu0 0
          %1031 = vmatpush1.bf16.msra.mxu0 %v878
          %1032 = vmatprep.subr.bf16.mxu0 0
          %1033 = vmatpush1.bf16.msra.mxu0 %v883
          %1034 = vmatprep.subr.bf16.mxu0 0
          %1035 = vmatpush1.bf16.msra.mxu0 %v888
          %1036 = vmatprep.subr.bf16.mxu0 0
          %1037 = vmatpush1.bf16.msra.mxu0 %v893
          %1038 = vmatprep.subr.bf16.mxu0 0
          %1039 = vmatpush1.bf16.msra.mxu0 %v898
          %1040 = vmatprep.subr.bf16.mxu0 0
          %1041 = vmatpush1.bf16.msra.mxu0 %v903
          %1042 = vmatprep.subr.bf16.mxu0 0
          %1043 = vmatpush1.bf16.msra.mxu0 0
          %1044 = vmatprep.subr.bf16.mxu0 0
          %1045 = vmatpush1.bf16.msra.mxu0 0
          %1046 = vmatprep.subr.bf16.mxu0 0
          %1047 = vmatpush1.bf16.msra.mxu0 0
          %1048 = vmatprep.subr.bf16.mxu0 0
          %1049 = vmatpush1.bf16.msra.mxu0 0
          %1050 = vmatprep.subr.bf16.mxu0 0
          %1051 = vmatpush1.bf16.msra.mxu0 0
          %1052 = vmatprep.subr.bf16.mxu0 0
          %1053 = vmatpush1.bf16.msra.mxu0 0
          %1054 = vmatprep.subr.bf16.mxu0 0
          %1055 = vmatpush1.bf16.msra.mxu0 0
          %1056 = vmatprep.subr.bf16.mxu0 0
          %1057 = vmatpush1.bf16.msra.mxu0 0
          %1058 = vmatprep.mubr.bf16.mxu0 0
          %1059 = vmatmul.mubr.bf16.gmra.mrb[0].mxu0 %v684
          %v1060 = vpop.f32.mrb[0].mxu0
          %v1061 = vadd.f32 0.0, %v1060
          %v1062 = vpop.f32.mrb[0].mxu0
          %v1063 = vpop.f32.mrb[0].mxu0
          %v1064 = vpop.f32.mrb[0].mxu0
          %1065 = vdwg.mxu0
          %v1066 = vmul.f32 %v979, %v644
          %v1067 = vmul.f32 %v981, %v645
          %v1068 = vadd.f32 %v1066, %v1067
          %v1069 = vpack.c.bf16 %v1068, %v1068
          %v1070 = vmul.f32 %v1020, %v644
          %v1071 = vmul.f32 %v1022, %v645
          %v1072 = vadd.f32 %v1070, %v1071
          %v1073 = vpack.c.bf16 %v1072, %v1072
          %v1074 = vpack.c.bf16 %v1061, %v1061
          %vm1075 = vcmask 261120
          %v1077 = vsel %vm1075, %v1069, 0
          %v1080 = vsel %vm1075, %v1073, 0
          %1082 = vmatprep.subr.bf16.mxu0 0
          %1083 = vmatpush1.bf16.xpose.msra.mxu0 %v1080
          %1084 = vmatprep.subr.bf16.mxu0 0
          %1085 = vmatpush1.bf16.xpose.msra.mxu0 0
          %1086 = vmatprep.subr.bf16.mxu0 0
          %1087 = vmatpush1.bf16.xpose.msra.mxu0 0
          %1088 = vmatprep.subr.bf16.mxu0 0
          %1089 = vmatpush1.bf16.xpose.msra.mxu0 0
          %1090 = vmatprep.subr.bf16.mxu0 0
          %1091 = vmatpush1.bf16.xpose.msra.mxu0 0
          %1092 = vmatprep.subr.bf16.mxu0 0
          %1093 = vmatpush1.bf16.xpose.msra.mxu0 0
          %1094 = vmatprep.subr.bf16.mxu0 0
          %1095 = vmatpush1.bf16.xpose.msra.mxu0 0
          %1096 = vmatprep.subr.bf16.mxu0 0
          %1097 = vmatpush1.bf16.xpose.msra.mxu0 0
          %1098 = vmatprep.subr.bf16.mxu0 0
          %1099 = vmatpush1.bf16.xpose.msra.mxu0 0
          %1100 = vmatprep.subr.bf16.mxu0 0
          %1101 = vmatpush1.bf16.xpose.msra.mxu0 0
          %1102 = vmatprep.subr.bf16.mxu0 0
          %1103 = vmatpush1.bf16.xpose.msra.mxu0 0
          %1104 = vmatprep.subr.bf16.mxu0 0
          %1105 = vmatpush1.bf16.xpose.msra.mxu0 0
          %1106 = vmatprep.subr.bf16.mxu0 0
          %1107 = vmatpush1.bf16.xpose.msra.mxu0 0
          %1108 = vmatprep.subr.bf16.mxu0 0
          %1109 = vmatpush1.bf16.xpose.msra.mxu0 0
          %1110 = vmatprep.subr.bf16.mxu0 0
          %1111 = vmatpush1.bf16.xpose.msra.mxu0 0
          %1112 = vmatprep.subr.bf16.mxu0 0
          %1113 = vmatpush1.bf16.xpose.msra.mxu0 0
          %1114 = vmatprep.mubr.bf16.mxu0 0
          %1115 = vmatmul.mubr.bf16.gmra.mrb[0].mxu0 %v1077
          %v1116 = vpop.f32.mrb[0].mxu0
          %v1117 = vadd.f32 %v646, %v1116
          %v1118 = vpop.f32.mrb[0].mxu0
          %v1119 = vpop.f32.mrb[0].mxu0
          %v1120 = vpop.f32.mrb[0].mxu0
          %1121 = vdwg.mxu0
          %vm1122 = vcmask 64512
          %v1123 = vsel %vm1122, %v1117, -inf
          %1124 = vmax.xlane.f32.xlu0 %v1123
          %v1125 = vpop.xlane.xlu0 %1124
          %v1126 = vsub.f32 %v1117, %v1125
          %v1127 = vmul.f32 %v1126, 1.442695
          %v1128 = vpow.pop %v1127
          %v1129 = vsel %vm1122, %v1128, 0.0
          %1130 = vadd.xlane.f32.xlu0 %v1129
          %v1131 = vpop.xlane.xlu0 %1130
          %v1132 = vrcp.pop %v1131
          %v1133 = vmul.f32 %v1128, %v1132
          %v1134 = vpack.c.bf16 %v1133, %v1133
          %v1136 = vsel %vm1122, %v1134, 0
          %vm1138 = vcmask 1043456
          %v1140 = vsel %vm1138, %v1074, 0
          %1142 = vmatprep.subr.bf16.mxu0 0
          %1143 = vmatpush1.bf16.msra.mxu0 %v1140
          %1144 = vmatprep.subr.bf16.mxu0 0
          %1145 = vmatpush1.bf16.msra.mxu0 0
          %1146 = vmatprep.subr.bf16.mxu0 0
          %1147 = vmatpush1.bf16.msra.mxu0 0
          %1148 = vmatprep.subr.bf16.mxu0 0
          %1149 = vmatpush1.bf16.msra.mxu0 0
          %1150 = vmatprep.subr.bf16.mxu0 0
          %1151 = vmatpush1.bf16.msra.mxu0 0
          %1152 = vmatprep.subr.bf16.mxu0 0
          %1153 = vmatpush1.bf16.msra.mxu0 0
          %1154 = vmatprep.subr.bf16.mxu0 0
          %1155 = vmatpush1.bf16.msra.mxu0 0
          %1156 = vmatprep.subr.bf16.mxu0 0
          %1157 = vmatpush1.bf16.msra.mxu0 0
          %1158 = vmatprep.subr.bf16.mxu0 0
          %1159 = vmatpush1.bf16.msra.mxu0 0
          %1160 = vmatprep.subr.bf16.mxu0 0
          %1161 = vmatpush1.bf16.msra.mxu0 0
          %1162 = vmatprep.subr.bf16.mxu0 0
          %1163 = vmatpush1.bf16.msra.mxu0 0
          %1164 = vmatprep.subr.bf16.mxu0 0
          %1165 = vmatpush1.bf16.msra.mxu0 0
          %1166 = vmatprep.subr.bf16.mxu0 0
          %1167 = vmatpush1.bf16.msra.mxu0 0
          %1168 = vmatprep.subr.bf16.mxu0 0
          %1169 = vmatpush1.bf16.msra.mxu0 0
          %1170 = vmatprep.subr.bf16.mxu0 0
          %1171 = vmatpush1.bf16.msra.mxu0 0
          %1172 = vmatprep.subr.bf16.mxu0 0
          %1173 = vmatpush1.bf16.msra.mxu0 0
          %1174 = vmatprep.mubr.bf16.mxu0 0
          %1175 = vmatmul.mubr.bf16.gmra.mrb[0].mxu0 %v1136
          %v1176 = vpop.f32.mrb[0].mxu0
          %v1177 = vadd.f32 0.0, %v1176
          %v1178 = vpop.f32.mrb[0].mxu0
          %v1179 = vpop.f32.mrb[0].mxu0
          %v1180 = vpop.f32.mrb[0].mxu0
          %1181 = vdwg.mxu0
          %1183 = vrot.lane.b32.xlu0 %v1069, 96
          %v1184 = vpop.permute.xlu0 %1183
          %1186 = vrot.lane.b32.xlu0 %v1073, 96
          %v1187 = vpop.permute.xlu0 %1186
          %v1189 = vsel %vm1075, %v1184, 0
          %v1192 = vsel %vm1075, %v1187, 0
          %1194 = vmatprep.subr.bf16.mxu0 0
          %1195 = vmatpush1.bf16.xpose.msra.mxu0 %v1192
          %1196 = vmatprep.subr.bf16.mxu0 0
          %1197 = vmatpush1.bf16.xpose.msra.mxu0 0
          %1198 = vmatprep.subr.bf16.mxu0 0
          %1199 = vmatpush1.bf16.xpose.msra.mxu0 0
          %1200 = vmatprep.subr.bf16.mxu0 0
          %1201 = vmatpush1.bf16.xpose.msra.mxu0 0
          %1202 = vmatprep.subr.bf16.mxu0 0
          %1203 = vmatpush1.bf16.xpose.msra.mxu0 0
          %1204 = vmatprep.subr.bf16.mxu0 0
          %1205 = vmatpush1.bf16.xpose.msra.mxu0 0
          %1206 = vmatprep.subr.bf16.mxu0 0
          %1207 = vmatpush1.bf16.xpose.msra.mxu0 0
          %1208 = vmatprep.subr.bf16.mxu0 0
          %1209 = vmatpush1.bf16.xpose.msra.mxu0 0
          %1210 = vmatprep.subr.bf16.mxu0 0
          %1211 = vmatpush1.bf16.xpose.msra.mxu0 0
          %1212 = vmatprep.subr.bf16.mxu0 0
          %1213 = vmatpush1.bf16.xpose.msra.mxu0 0
          %1214 = vmatprep.subr.bf16.mxu0 0
          %1215 = vmatpush1.bf16.xpose.msra.mxu0 0
          %1216 = vmatprep.subr.bf16.mxu0 0
          %1217 = vmatpush1.bf16.xpose.msra.mxu0 0
          %1218 = vmatprep.subr.bf16.mxu0 0
          %1219 = vmatpush1.bf16.xpose.msra.mxu0 0
          %1220 = vmatprep.subr.bf16.mxu0 0
          %1221 = vmatpush1.bf16.xpose.msra.mxu0 0
          %1222 = vmatprep.subr.bf16.mxu0 0
          %1223 = vmatpush1.bf16.xpose.msra.mxu0 0
          %1224 = vmatprep.subr.bf16.mxu0 0
          %1225 = vmatpush1.bf16.xpose.msra.mxu0 0
          %1226 = vmatprep.mubr.bf16.mxu0 0
          %1227 = vmatmul.mubr.bf16.gmra.mrb[0].mxu0 %v1189
          %v1228 = vpop.f32.mrb[0].mxu0
          %v1229 = vadd.f32 %v646, %v1228
          %v1230 = vpop.f32.mrb[0].mxu0
          %v1231 = vpop.f32.mrb[0].mxu0
          %v1232 = vpop.f32.mrb[0].mxu0
          %1233 = vdwg.mxu0
          %v1234 = vsel %vm1122, %v1229, -inf
          %1235 = vmax.xlane.f32.xlu0 %v1234
          %v1236 = vpop.xlane.xlu0 %1235
          %v1237 = vsub.f32 %v1229, %v1236
          %v1238 = vmul.f32 %v1237, 1.442695
          %v1239 = vpow.pop %v1238
          %v1240 = vsel %vm1122, %v1239, 0.0
          %1241 = vadd.xlane.f32.xlu0 %v1240
          %v1242 = vpop.xlane.xlu0 %1241
          %v1243 = vrcp.pop %v1242
          %v1244 = vmul.f32 %v1239, %v1243
          %v1245 = vpack.c.bf16 %v1244, %v1244
          %1247 = vrot.lane.b32.xlu0 %v1074, 96
          %v1248 = vpop.permute.xlu0 %1247
          %v1250 = vsel %vm1122, %v1245, 0
          %v1253 = vsel %vm1138, %v1248, 0
          %1255 = vmatprep.subr.bf16.mxu0 0
          %1256 = vmatpush1.bf16.msra.mxu0 %v1253
          %1257 = vmatprep.subr.bf16.mxu0 0
          %1258 = vmatpush1.bf16.msra.mxu0 0
          %1259 = vmatprep.subr.bf16.mxu0 0
          %1260 = vmatpush1.bf16.msra.mxu0 0
          %1261 = vmatprep.subr.bf16.mxu0 0
          %1262 = vmatpush1.bf16.msra.mxu0 0
          %1263 = vmatprep.subr.bf16.mxu0 0
          %1264 = vmatpush1.bf16.msra.mxu0 0
          %1265 = vmatprep.subr.bf16.mxu0 0
          %1266 = vmatpush1.bf16.msra.mxu0 0
          %1267 = vmatprep.subr.bf16.mxu0 0
          %1268 = vmatpush1.bf16.msra.mxu0 0
          %1269 = vmatprep.subr.bf16.mxu0 0
          %1270 = vmatpush1.bf16.msra.mxu0 0
          %1271 = vmatprep.subr.bf16.mxu0 0
          %1272 = vmatpush1.bf16.msra.mxu0 0
          %1273 = vmatprep.subr.bf16.mxu0 0
          %1274 = vmatpush1.bf16.msra.mxu0 0
          %1275 = vmatprep.subr.bf16.mxu0 0
          %1276 = vmatpush1.bf16.msra.mxu0 0
          %1277 = vmatprep.subr.bf16.mxu0 0
          %1278 = vmatpush1.bf16.msra.mxu0 0
          %1279 = vmatprep.subr.bf16.mxu0 0
          %1280 = vmatpush1.bf16.msra.mxu0 0
          %1281 = vmatprep.subr.bf16.mxu0 0
          %1282 = vmatpush1.bf16.msra.mxu0 0
          %1283 = vmatprep.subr.bf16.mxu0 0
          %1284 = vmatpush1.bf16.msra.mxu0 0
          %1285 = vmatprep.subr.bf16.mxu0 0
          %1286 = vmatpush1.bf16.msra.mxu0 0
          %1287 = vmatprep.mubr.bf16.mxu0 0
          %1288 = vmatmul.mubr.bf16.gmra.mrb[0].mxu0 %v1250
          %v1289 = vpop.f32.mrb[0].mxu0
          %v1290 = vadd.f32 0.0, %v1289
          %v1291 = vpop.f32.mrb[0].mxu0
          %v1292 = vpop.f32.mrb[0].mxu0
          %v1293 = vpop.f32.mrb[0].mxu0
          %1294 = vdwg.mxu0
          %1295 = vrot.lane.b32.xlu0 %v1069, 64
          %v1296 = vpop.permute.xlu0 %1295
          %1297 = vrot.lane.b32.xlu0 %v1073, 64
          %v1298 = vpop.permute.xlu0 %1297
          %v1300 = vsel %vm1075, %v1296, 0
          %v1303 = vsel %vm1075, %v1298, 0
          %1305 = vmatprep.subr.bf16.mxu0 0
          %1306 = vmatpush1.bf16.xpose.msra.mxu0 %v1303
          %1307 = vmatprep.subr.bf16.mxu0 0
          %1308 = vmatpush1.bf16.xpose.msra.mxu0 0
          %1309 = vmatprep.subr.bf16.mxu0 0
          %1310 = vmatpush1.bf16.xpose.msra.mxu0 0
          %1311 = vmatprep.subr.bf16.mxu0 0
          %1312 = vmatpush1.bf16.xpose.msra.mxu0 0
          %1313 = vmatprep.subr.bf16.mxu0 0
          %1314 = vmatpush1.bf16.xpose.msra.mxu0 0
          %1315 = vmatprep.subr.bf16.mxu0 0
          %1316 = vmatpush1.bf16.xpose.msra.mxu0 0
          %1317 = vmatprep.subr.bf16.mxu0 0
          %1318 = vmatpush1.bf16.xpose.msra.mxu0 0
          %1319 = vmatprep.subr.bf16.mxu0 0
          %1320 = vmatpush1.bf16.xpose.msra.mxu0 0
          %1321 = vmatprep.subr.bf16.mxu0 0
          %1322 = vmatpush1.bf16.xpose.msra.mxu0 0
          %1323 = vmatprep.subr.bf16.mxu0 0
          %1324 = vmatpush1.bf16.xpose.msra.mxu0 0
          %1325 = vmatprep.subr.bf16.mxu0 0
          %1326 = vmatpush1.bf16.xpose.msra.mxu0 0
          %1327 = vmatprep.subr.bf16.mxu0 0
          %1328 = vmatpush1.bf16.xpose.msra.mxu0 0
          %1329 = vmatprep.subr.bf16.mxu0 0
          %1330 = vmatpush1.bf16.xpose.msra.mxu0 0
          %1331 = vmatprep.subr.bf16.mxu0 0
          %1332 = vmatpush1.bf16.xpose.msra.mxu0 0
          %1333 = vmatprep.subr.bf16.mxu0 0
          %1334 = vmatpush1.bf16.xpose.msra.mxu0 0
          %1335 = vmatprep.subr.bf16.mxu0 0
          %1336 = vmatpush1.bf16.xpose.msra.mxu0 0
          %1337 = vmatprep.mubr.bf16.mxu0 0
          %1338 = vmatmul.mubr.bf16.gmra.mrb[0].mxu0 %v1300
          %v1339 = vpop.f32.mrb[0].mxu0
          %v1340 = vadd.f32 %v646, %v1339
          %v1341 = vpop.f32.mrb[0].mxu0
          %v1342 = vpop.f32.mrb[0].mxu0
          %v1343 = vpop.f32.mrb[0].mxu0
          %1344 = vdwg.mxu0
          %v1345 = vsel %vm1122, %v1340, -inf
          %1346 = vmax.xlane.f32.xlu0 %v1345
          %v1347 = vpop.xlane.xlu0 %1346
          %v1348 = vsub.f32 %v1340, %v1347
          %v1349 = vmul.f32 %v1348, 1.442695
          %v1350 = vpow.pop %v1349
          %v1351 = vsel %vm1122, %v1350, 0.0
          %1352 = vadd.xlane.f32.xlu0 %v1351
          %v1353 = vpop.xlane.xlu0 %1352
          %v1354 = vrcp.pop %v1353
          %v1355 = vmul.f32 %v1350, %v1354
          %v1356 = vpack.c.bf16 %v1355, %v1355
          %1357 = vrot.lane.b32.xlu0 %v1074, 64
          %v1358 = vpop.permute.xlu0 %1357
          %v1360 = vsel %vm1122, %v1356, 0
          %v1363 = vsel %vm1138, %v1358, 0
          %1365 = vmatprep.subr.bf16.mxu0 0
          %1366 = vmatpush1.bf16.msra.mxu0 %v1363
          %1367 = vmatprep.subr.bf16.mxu0 0
          %1368 = vmatpush1.bf16.msra.mxu0 0
          %1369 = vmatprep.subr.bf16.mxu0 0
          %1370 = vmatpush1.bf16.msra.mxu0 0
          %1371 = vmatprep.subr.bf16.mxu0 0
          %1372 = vmatpush1.bf16.msra.mxu0 0
          %1373 = vmatprep.subr.bf16.mxu0 0
          %1374 = vmatpush1.bf16.msra.mxu0 0
          %1375 = vmatprep.subr.bf16.mxu0 0
          %1376 = vmatpush1.bf16.msra.mxu0 0
          %1377 = vmatprep.subr.bf16.mxu0 0
          %1378 = vmatpush1.bf16.msra.mxu0 0
          %1379 = vmatprep.subr.bf16.mxu0 0
          %1380 = vmatpush1.bf16.msra.mxu0 0
          %1381 = vmatprep.subr.bf16.mxu0 0
          %1382 = vmatpush1.bf16.msra.mxu0 0
          %1383 = vmatprep.subr.bf16.mxu0 0
          %1384 = vmatpush1.bf16.msra.mxu0 0
          %1385 = vmatprep.subr.bf16.mxu0 0
          %1386 = vmatpush1.bf16.msra.mxu0 0
          %1387 = vmatprep.subr.bf16.mxu0 0
          %1388 = vmatpush1.bf16.msra.mxu0 0
          %1389 = vmatprep.subr.bf16.mxu0 0
          %1390 = vmatpush1.bf16.msra.mxu0 0
          %1391 = vmatprep.subr.bf16.mxu0 0
          %1392 = vmatpush1.bf16.msra.mxu0 0
          %1393 = vmatprep.subr.bf16.mxu0 0
          %1394 = vmatpush1.bf16.msra.mxu0 0
          %1395 = vmatprep.subr.bf16.mxu0 0
          %1396 = vmatpush1.bf16.msra.mxu0 0
          %1397 = vmatprep.mubr.bf16.mxu0 0
          %1398 = vmatmul.mubr.bf16.gmra.mrb[0].mxu0 %v1360
          %v1399 = vpop.f32.mrb[0].mxu0
          %v1400 = vadd.f32 0.0, %v1399
          %v1401 = vpop.f32.mrb[0].mxu0
          %v1402 = vpop.f32.mrb[0].mxu0
          %v1403 = vpop.f32.mrb[0].mxu0
          %1404 = vdwg.mxu0
          %1405 = vrot.lane.b32.xlu0 %v1069, 32
          %v1406 = vpop.permute.xlu0 %1405
          %1407 = vrot.lane.b32.xlu0 %v1073, 32
          %v1408 = vpop.permute.xlu0 %1407
          %v1410 = vsel %vm1075, %v1406, 0
          %v1413 = vsel %vm1075, %v1408, 0
          %1415 = vmatprep.subr.bf16.mxu0 0
          %1416 = vmatpush1.bf16.xpose.msra.mxu0 %v1413
          %1417 = vmatprep.subr.bf16.mxu0 0
          %1418 = vmatpush1.bf16.xpose.msra.mxu0 0
          %1419 = vmatprep.subr.bf16.mxu0 0
          %1420 = vmatpush1.bf16.xpose.msra.mxu0 0
          %1421 = vmatprep.subr.bf16.mxu0 0
          %1422 = vmatpush1.bf16.xpose.msra.mxu0 0
          %1423 = vmatprep.subr.bf16.mxu0 0
          %1424 = vmatpush1.bf16.xpose.msra.mxu0 0
          %1425 = vmatprep.subr.bf16.mxu0 0
          %1426 = vmatpush1.bf16.xpose.msra.mxu0 0
          %1427 = vmatprep.subr.bf16.mxu0 0
          %1428 = vmatpush1.bf16.xpose.msra.mxu0 0
          %1429 = vmatprep.subr.bf16.mxu0 0
          %1430 = vmatpush1.bf16.xpose.msra.mxu0 0
          %1431 = vmatprep.subr.bf16.mxu0 0
          %1432 = vmatpush1.bf16.xpose.msra.mxu0 0
          %1433 = vmatprep.subr.bf16.mxu0 0
          %1434 = vmatpush1.bf16.xpose.msra.mxu0 0
          %1435 = vmatprep.subr.bf16.mxu0 0
          %1436 = vmatpush1.bf16.xpose.msra.mxu0 0
          %1437 = vmatprep.subr.bf16.mxu0 0
          %1438 = vmatpush1.bf16.xpose.msra.mxu0 0
          %1439 = vmatprep.subr.bf16.mxu0 0
          %1440 = vmatpush1.bf16.xpose.msra.mxu0 0
          %1441 = vmatprep.subr.bf16.mxu0 0
          %1442 = vmatpush1.bf16.xpose.msra.mxu0 0
          %1443 = vmatprep.subr.bf16.mxu0 0
          %1444 = vmatpush1.bf16.xpose.msra.mxu0 0
          %1445 = vmatprep.subr.bf16.mxu0 0
          %1446 = vmatpush1.bf16.xpose.msra.mxu0 0
          %1447 = vmatprep.mubr.bf16.mxu0 0
          %1448 = vmatmul.mubr.bf16.gmra.mrb[0].mxu0 %v1410
          %v1449 = vpop.f32.mrb[0].mxu0
          %v1450 = vadd.f32 %v646, %v1449
          %v1451 = vpop.f32.mrb[0].mxu0
          %v1452 = vpop.f32.mrb[0].mxu0
          %v1453 = vpop.f32.mrb[0].mxu0
          %1454 = vdwg.mxu0
          %v1455 = vsel %vm1122, %v1450, -inf
          %1456 = vmax.xlane.f32.xlu0 %v1455
          %v1457 = vpop.xlane.xlu0 %1456
          %v1458 = vsub.f32 %v1450, %v1457
          %v1459 = vmul.f32 %v1458, 1.442695
          %v1460 = vpow.pop %v1459
          %v1461 = vsel %vm1122, %v1460, 0.0
          %1462 = vadd.xlane.f32.xlu0 %v1461
          %v1463 = vpop.xlane.xlu0 %1462
          %v1464 = vrcp.pop %v1463
          %v1465 = vmul.f32 %v1460, %v1464
          %v1466 = vpack.c.bf16 %v1465, %v1465
          %1467 = vrot.lane.b32.xlu0 %v1074, 32
          %v1468 = vpop.permute.xlu0 %1467
          %v1470 = vsel %vm1122, %v1466, 0
          %v1473 = vsel %vm1138, %v1468, 0
          %1475 = vmatprep.subr.bf16.mxu0 0
          %1476 = vmatpush1.bf16.msra.mxu0 %v1473
          %1477 = vmatprep.subr.bf16.mxu0 0
          %1478 = vmatpush1.bf16.msra.mxu0 0
          %1479 = vmatprep.subr.bf16.mxu0 0
          %1480 = vmatpush1.bf16.msra.mxu0 0
          %1481 = vmatprep.subr.bf16.mxu0 0
          %1482 = vmatpush1.bf16.msra.mxu0 0
          %1483 = vmatprep.subr.bf16.mxu0 0
          %1484 = vmatpush1.bf16.msra.mxu0 0
          %1485 = vmatprep.subr.bf16.mxu0 0
          %1486 = vmatpush1.bf16.msra.mxu0 0
          %1487 = vmatprep.subr.bf16.mxu0 0
          %1488 = vmatpush1.bf16.msra.mxu0 0
          %1489 = vmatprep.subr.bf16.mxu0 0
          %1490 = vmatpush1.bf16.msra.mxu0 0
          %1491 = vmatprep.subr.bf16.mxu0 0
          %1492 = vmatpush1.bf16.msra.mxu0 0
          %1493 = vmatprep.subr.bf16.mxu0 0
          %1494 = vmatpush1.bf16.msra.mxu0 0
          %1495 = vmatprep.subr.bf16.mxu0 0
          %1496 = vmatpush1.bf16.msra.mxu0 0
          %1497 = vmatprep.subr.bf16.mxu0 0
          %1498 = vmatpush1.bf16.msra.mxu0 0
          %1499 = vmatprep.subr.bf16.mxu0 0
          %1500 = vmatpush1.bf16.msra.mxu0 0
          %1501 = vmatprep.subr.bf16.mxu0 0
          %1502 = vmatpush1.bf16.msra.mxu0 0
          %1503 = vmatprep.subr.bf16.mxu0 0
          %1504 = vmatpush1.bf16.msra.mxu0 0
          %1505 = vmatprep.subr.bf16.mxu0 0
          %1506 = vmatpush1.bf16.msra.mxu0 0
          %1507 = vmatprep.mubr.bf16.mxu0 0
          %1508 = vmatmul.mubr.bf16.gmra.mrb[0].mxu0 %v1470
          %v1509 = vpop.f32.mrb[0].mxu0
          %v1510 = vadd.f32 0.0, %v1509
          %v1511 = vpop.f32.mrb[0].mxu0
          %v1512 = vpop.f32.mrb[0].mxu0
          %v1513 = vpop.f32.mrb[0].mxu0
          %1514 = vdwg.mxu0
          %1516 = vrot.lane.b32.xlu0 %v1290, 32
          %v1517 = vpop.permute.xlu0 %1516
          %1520 = vrot.lane.b32.xlu0 %v1400, 64
          %v1521 = vpop.permute.xlu0 %1520
          %1524 = vrot.lane.b32.xlu0 %v1510, 96
          %v1525 = vpop.permute.xlu0 %1524
          %v1527 = vsel %vm1075, %v1177, %v1517
          %vm1528 = vcmask 523264
          %v1529 = vsel %vm1528, %v1527, %v1521
          %vm1530 = vcmask 785408
          %v1531 = vsel %vm1530, %v1529, %v1525
          %v1532 = vpack.c.bf16 %v1531, %v1531
          %s1533 = smul.u32 %s648, 16
          %s1534 = smul.addr %s1533, 4
          %s1535 = scalar_lea.vmem %s5, %s1534
          %v1536 = vld [vmem:[%s1535] sm:$0xf]
          %v1537 = vld [vmem:[%s1535 + $0x4] sm:$0xf]
          %v1538 = vld [vmem:[%s1535 + $0x8] sm:$0xf]
          %v1539 = vld [vmem:[%s1535 + $0xc] sm:$0xf]
          %v1540 = vld [vmem:[%s1535 + $0x10] sm:$0xf]
          %v1541 = vld [vmem:[%s1535 + $0x14] sm:$0xf]
          %v1542 = vld [vmem:[%s1535 + $0x18] sm:$0xf]
          %v1543 = vld [vmem:[%s1535 + $0x1c] sm:$0xf]
          %v1544 = vld [vmem:[%s1535 + $0x20] sm:$0xf]
          %v1545 = vld [vmem:[%s1535 + $0x24] sm:$0xf]
          %v1546 = vld [vmem:[%s1535 + $0x28] sm:$0xf]
          %v1547 = vld [vmem:[%s1535 + $0x2c] sm:$0xf]
          %v1548 = vld [vmem:[%s1535 + $0x30] sm:$0xf]
          %v1549 = vld [vmem:[%s1535 + $0x34] sm:$0xf]
          %v1550 = vld [vmem:[%s1535 + $0x38] sm:$0xf]
          %v1551 = vld [vmem:[%s1535 + $0x3c] sm:$0xf]
          %s1552 = scalar_lea.vmem %s6, %s648
          %v1553 = vld [vmem:[%s1552] sm:$0x1]
          %v1555 = vlaneseq
          %v1556 = vshrl.u32 %v1555, 7
          %v1557 = vsub.s32 0, %v1556
          %v1558 = vrot.slane %v1553, %v1557
          %v1576 = vunpack.c.l.b16 %v1536
          %v1577 = vunpack.c.l.b16 %v1537
          %v1578 = vunpack.c.l.b16 %v1538
          %v1579 = vunpack.c.l.b16 %v1539
          %v1580 = vunpack.c.l.b16 %v1540
          %v1581 = vunpack.c.l.b16 %v1541
          %v1582 = vunpack.c.l.b16 %v1542
          %v1583 = vunpack.c.l.b16 %v1543
          %v1584 = vunpack.c.l.b16 %v1544
          %v1585 = vunpack.c.l.b16 %v1545
          %v1586 = vunpack.c.l.b16 %v1546
          %v1587 = vunpack.c.l.b16 %v1547
          %v1588 = vunpack.c.l.b16 %v1548
          %v1589 = vunpack.c.l.b16 %v1549
          %v1590 = vunpack.c.l.b16 %v1550
          %v1591 = vunpack.c.l.b16 %v1551
          %v1592 = vpack.c.b16 %v1577, %v1576
          %v1593 = vpack.c.b16 %v1579, %v1578
          %v1594 = vpack.c.b16 %v1581, %v1580
          %v1595 = vpack.c.b16 %v1583, %v1582
          %v1596 = vpack.c.b16 %v1585, %v1584
          %v1597 = vpack.c.b16 %v1587, %v1586
          %v1598 = vpack.c.b16 %v1589, %v1588
          %v1599 = vpack.c.b16 %v1591, %v1590
          %1608 = vmatprep.subr.bf16.mxu0 0
          %1609 = vmatpush1.bf16.msra.mxu0 %v1592
          %1610 = vmatprep.subr.bf16.mxu0 0
          %1611 = vmatpush1.bf16.msra.mxu0 %v1593
          %1612 = vmatprep.subr.bf16.mxu0 0
          %1613 = vmatpush1.bf16.msra.mxu0 %v1594
          %1614 = vmatprep.subr.bf16.mxu0 0
          %1615 = vmatpush1.bf16.msra.mxu0 %v1595
          %1616 = vmatprep.subr.bf16.mxu0 0
          %1617 = vmatpush1.bf16.msra.mxu0 %v1596
          %1618 = vmatprep.subr.bf16.mxu0 0
          %1619 = vmatpush1.bf16.msra.mxu0 %v1597
          %1620 = vmatprep.subr.bf16.mxu0 0
          %1621 = vmatpush1.bf16.msra.mxu0 %v1598
          %1622 = vmatprep.subr.bf16.mxu0 0
          %1623 = vmatpush1.bf16.msra.mxu0 %v1599
          %1624 = vmatprep.subr.bf16.mxu0 0
          %1625 = vmatpush1.bf16.msra.mxu0 0
          %1626 = vmatprep.subr.bf16.mxu0 0
          %1627 = vmatpush1.bf16.msra.mxu0 0
          %1628 = vmatprep.subr.bf16.mxu0 0
          %1629 = vmatpush1.bf16.msra.mxu0 0
          %1630 = vmatprep.subr.bf16.mxu0 0
          %1631 = vmatpush1.bf16.msra.mxu0 0
          %1632 = vmatprep.subr.bf16.mxu0 0
          %1633 = vmatpush1.bf16.msra.mxu0 0
          %1634 = vmatprep.subr.bf16.mxu0 0
          %1635 = vmatpush1.bf16.msra.mxu0 0
          %1636 = vmatprep.subr.bf16.mxu0 0
          %1637 = vmatpush1.bf16.msra.mxu0 0
          %1638 = vmatprep.subr.bf16.mxu0 0
          %1639 = vmatpush1.bf16.msra.mxu0 0
          %1640 = vmatprep.mubr.bf16.mxu0 0
          %1641 = vmatmul.mubr.bf16.gmra.mrb[0].mxu0 %v1532
          %v1642 = vpop.f32.mrb[0].mxu0
          %v1643 = vadd.f32 %v1558, %v1642
          %v1644 = vpop.f32.mrb[0].mxu0
          %v1645 = vpop.f32.mrb[0].mxu0
          %v1646 = vpop.f32.mrb[0].mxu0
          %1647 = vdwg.mxu0
          %v1648 = vadd.f32 %v653, %v1643
          %s1649 = scalar_lea.vmem %s9, %s648
          %v1650 = vld [vmem:[%s1649] sm:$0x1]
          %s1651 = scalar_lea.vmem %s10, %s648
          %v1652 = vld [vmem:[%s1651] sm:$0x1]
          %1653 = vadd.xlane.f32.xlu0 %v1648
          %v1654 = vpop.xlane.xlu0 %1653
          %v1655 = vmul.f32 %v1654, %v660
          %v1656 = vsub.f32 %v1648, %v1655
          %v1657 = vmul.f32 %v1656, %v1656
          %1658 = vadd.xlane.f32.xlu0 %v1657
          %v1659 = vpop.xlane.xlu0 %1658
          %v1660 = vmul.f32 %v1659, %v660
          %v1661 = vadd.f32 %v1660, 1e-05
          %v1662 = vrsqrt.pop %v1661
          %v1663 = vmul.f32 %v1656, %v1662
          %v1665 = vlaneseq
          %v1666 = vshrl.u32 %v1665, 7
          %v1667 = vsub.s32 0, %v1666
          %v1668 = vrot.slane %v1650, %v1667
          %v1670 = vmul.f32 %v1663, %v1668
          %v1672 = vlaneseq
          %v1673 = vshrl.u32 %v1672, 7
          %v1674 = vsub.s32 0, %v1673
          %v1675 = vrot.slane %v1652, %v1674
          %v1677 = vadd.f32 %v1670, %v1675
          %v1678 = vpack.c.bf16 %v1677, %v1677
          %s1679 = smul.u32 %s648, 64
          %s1680 = smul.addr %s1679, 4
          %s1681 = scalar_lea.vmem [#allocation5], %s1680
          %v1682 = vld [vmem:[%s1681] sm:$0xff]
          %v1683 = vld [vmem:[%s1681 + $0x8] sm:$0xff]
          %v1684 = vld [vmem:[%s1681 + $0x10] sm:$0xff]
          %v1685 = vld [vmem:[%s1681 + $0x18] sm:$0xff]
          %v1686 = vld [vmem:[%s1681 + $0x20] sm:$0xff]
          %v1687 = vld [vmem:[%s1681 + $0x28] sm:$0xff]
          %v1688 = vld [vmem:[%s1681 + $0x30] sm:$0xff]
          %v1689 = vld [vmem:[%s1681 + $0x38] sm:$0xff]
          %v1690 = vld [vmem:[%s1681 + $0x40] sm:$0xff]
          %v1691 = vld [vmem:[%s1681 + $0x48] sm:$0xff]
          %v1692 = vld [vmem:[%s1681 + $0x50] sm:$0xff]
          %v1693 = vld [vmem:[%s1681 + $0x58] sm:$0xff]
          %v1694 = vld [vmem:[%s1681 + $0x60] sm:$0xff]
          %v1695 = vld [vmem:[%s1681 + $0x68] sm:$0xff]
          %v1696 = vld [vmem:[%s1681 + $0x70] sm:$0xff]
          %v1697 = vld [vmem:[%s1681 + $0x78] sm:$0xff]
          %v1698 = vld [vmem:[%s1681 + $0x80] sm:$0xff]
          %v1699 = vld [vmem:[%s1681 + $0x88] sm:$0xff]
          %v1700 = vld [vmem:[%s1681 + $0x90] sm:$0xff]
          %v1701 = vld [vmem:[%s1681 + $0x98] sm:$0xff]
          %v1702 = vld [vmem:[%s1681 + $0xa0] sm:$0xff]
          %v1703 = vld [vmem:[%s1681 + $0xa8] sm:$0xff]
          %v1704 = vld [vmem:[%s1681 + $0xb0] sm:$0xff]
          %v1705 = vld [vmem:[%s1681 + $0xb8] sm:$0xff]
          %v1706 = vld [vmem:[%s1681 + $0xc0] sm:$0xff]
          %v1707 = vld [vmem:[%s1681 + $0xc8] sm:$0xff]
          %v1708 = vld [vmem:[%s1681 + $0xd0] sm:$0xff]
          %v1709 = vld [vmem:[%s1681 + $0xd8] sm:$0xff]
          %v1710 = vld [vmem:[%s1681 + $0xe0] sm:$0xff]
          %v1711 = vld [vmem:[%s1681 + $0xe8] sm:$0xff]
          %v1712 = vld [vmem:[%s1681 + $0xf0] sm:$0xff]
          %v1713 = vld [vmem:[%s1681 + $0xf8] sm:$0xff]
          %s1714 = smul.u32 %s648, 4
          %s1715 = scalar_lea.vmem %s12, %s1714
          %v1716 = vld [vmem:[%s1715] sm:$0xf]
          %v1718 = vlaneseq
          %v1719 = vshrl.u32 %v1718, 7
          %v1720 = vsub.s32 0, %v1719
          %v1721 = vrot.slane %v1716, %v1720
          %v1722 = vlaneseq
          %v1723 = vshrl.u32 %v1722, 7
          %v1724 = vsub.s32 1, %v1723
          %v1725 = vrot.slane %v1716, %v1724
          %v1726 = vlaneseq
          %v1727 = vshrl.u32 %v1726, 7
          %v1728 = vsub.s32 2, %v1727
          %v1729 = vrot.slane %v1716, %v1728
          %v1730 = vlaneseq
          %v1731 = vshrl.u32 %v1730, 7
          %v1732 = vsub.s32 3, %v1731
          %v1733 = vrot.slane %v1716, %v1732
          %v1770 = vunpack.c.l.b16 %v1682
          %v1771 = vunpack.c.h.b16 %v1682
          %v1772 = vunpack.c.l.b16 %v1683
          %v1773 = vunpack.c.h.b16 %v1683
          %v1774 = vunpack.c.l.b16 %v1684
          %v1775 = vunpack.c.h.b16 %v1684
          %v1776 = vunpack.c.l.b16 %v1685
          %v1777 = vunpack.c.h.b16 %v1685
          %v1778 = vunpack.c.l.b16 %v1686
          %v1779 = vunpack.c.h.b16 %v1686
          %v1780 = vunpack.c.l.b16 %v1687
          %v1781 = vunpack.c.h.b16 %v1687
          %v1782 = vunpack.c.l.b16 %v1688
          %v1783 = vunpack.c.h.b16 %v1688
          %v1784 = vunpack.c.l.b16 %v1689
          %v1785 = vunpack.c.h.b16 %v1689
          %v1786 = vunpack.c.l.b16 %v1690
          %v1787 = vunpack.c.h.b16 %v1690
          %v1788 = vunpack.c.l.b16 %v1691
          %v1789 = vunpack.c.h.b16 %v1691
          %v1790 = vunpack.c.l.b16 %v1692
          %v1791 = vunpack.c.h.b16 %v1692
          %v1792 = vunpack.c.l.b16 %v1693
          %v1793 = vunpack.c.h.b16 %v1693
          %v1794 = vunpack.c.l.b16 %v1694
          %v1795 = vunpack.c.h.b16 %v1694
          %v1796 = vunpack.c.l.b16 %v1695
          %v1797 = vunpack.c.h.b16 %v1695
          %v1798 = vunpack.c.l.b16 %v1696
          %v1799 = vunpack.c.h.b16 %v1696
          %v1800 = vunpack.c.l.b16 %v1697
          %v1801 = vunpack.c.h.b16 %v1697
          %v1802 = vunpack.c.l.b16 %v1698
          %v1803 = vunpack.c.h.b16 %v1698
          %v1804 = vunpack.c.l.b16 %v1699
          %v1805 = vunpack.c.h.b16 %v1699
          %v1806 = vunpack.c.l.b16 %v1700
          %v1807 = vunpack.c.h.b16 %v1700
          %v1808 = vunpack.c.l.b16 %v1701
          %v1809 = vunpack.c.h.b16 %v1701
          %v1810 = vunpack.c.l.b16 %v1702
          %v1811 = vunpack.c.h.b16 %v1702
          %v1812 = vunpack.c.l.b16 %v1703
          %v1813 = vunpack.c.h.b16 %v1703
          %v1814 = vunpack.c.l.b16 %v1704
          %v1815 = vunpack.c.h.b16 %v1704
          %v1816 = vunpack.c.l.b16 %v1705
          %v1817 = vunpack.c.h.b16 %v1705
          %v1818 = vunpack.c.l.b16 %v1706
          %v1819 = vunpack.c.h.b16 %v1706
          %v1820 = vunpack.c.l.b16 %v1707
          %v1821 = vunpack.c.h.b16 %v1707
          %v1822 = vunpack.c.l.b16 %v1708
          %v1823 = vunpack.c.h.b16 %v1708
          %v1824 = vunpack.c.l.b16 %v1709
          %v1825 = vunpack.c.h.b16 %v1709
          %v1826 = vunpack.c.l.b16 %v1710
          %v1827 = vunpack.c.h.b16 %v1710
          %v1828 = vunpack.c.l.b16 %v1711
          %v1829 = vunpack.c.h.b16 %v1711
          %v1830 = vunpack.c.l.b16 %v1712
          %v1831 = vunpack.c.h.b16 %v1712
          %v1832 = vunpack.c.l.b16 %v1713
          %v1833 = vunpack.c.h.b16 %v1713
          %v1834 = vpack.c.b16 %v1774, %v1770
          %v1835 = vpack.c.b16 %v1775, %v1771
          %v1836 = vpack.c.b16 %v1776, %v1772
          %v1837 = vpack.c.b16 %v1777, %v1773
          %v1838 = vpack.c.b16 %v1782, %v1778
          %v1839 = vpack.c.b16 %v1783, %v1779
          %v1840 = vpack.c.b16 %v1784, %v1780
          %v1841 = vpack.c.b16 %v1785, %v1781
          %v1842 = vpack.c.b16 %v1790, %v1786
          %v1843 = vpack.c.b16 %v1791, %v1787
          %v1844 = vpack.c.b16 %v1792, %v1788
          %v1845 = vpack.c.b16 %v1793, %v1789
          %v1846 = vpack.c.b16 %v1798, %v1794
          %v1847 = vpack.c.b16 %v1799, %v1795
          %v1848 = vpack.c.b16 %v1800, %v1796
          %v1849 = vpack.c.b16 %v1801, %v1797
          %v1850 = vpack.c.b16 %v1806, %v1802
          %v1851 = vpack.c.b16 %v1807, %v1803
          %v1852 = vpack.c.b16 %v1808, %v1804
          %v1853 = vpack.c.b16 %v1809, %v1805
          %v1854 = vpack.c.b16 %v1814, %v1810
          %v1855 = vpack.c.b16 %v1815, %v1811
          %v1856 = vpack.c.b16 %v1816, %v1812
          %v1857 = vpack.c.b16 %v1817, %v1813
          %v1858 = vpack.c.b16 %v1822, %v1818
          %v1859 = vpack.c.b16 %v1823, %v1819
          %v1860 = vpack.c.b16 %v1824, %v1820
          %v1861 = vpack.c.b16 %v1825, %v1821
          %v1862 = vpack.c.b16 %v1830, %v1826
          %v1863 = vpack.c.b16 %v1831, %v1827
          %v1864 = vpack.c.b16 %v1832, %v1828
          %v1865 = vpack.c.b16 %v1833, %v1829
          %1898 = vmatprep.subr.bf16.mxu0 %v1835
          %1899 = vmatpush1.bf16.msra.mxu0 %v1834
          %1900 = vmatprep.subr.bf16.mxu0 %v1839
          %1901 = vmatpush1.bf16.msra.mxu0 %v1838
          %1902 = vmatprep.subr.bf16.mxu0 %v1843
          %1903 = vmatpush1.bf16.msra.mxu0 %v1842
          %1904 = vmatprep.subr.bf16.mxu0 %v1847
          %1905 = vmatpush1.bf16.msra.mxu0 %v1846
          %1906 = vmatprep.subr.bf16.mxu0 %v1851
          %1907 = vmatpush1.bf16.msra.mxu0 %v1850
          %1908 = vmatprep.subr.bf16.mxu0 %v1855
          %1909 = vmatpush1.bf16.msra.mxu0 %v1854
          %1910 = vmatprep.subr.bf16.mxu0 %v1859
          %1911 = vmatpush1.bf16.msra.mxu0 %v1858
          %1912 = vmatprep.subr.bf16.mxu0 %v1863
          %1913 = vmatpush1.bf16.msra.mxu0 %v1862
          %1914 = vmatprep.subr.bf16.mxu0 0
          %1915 = vmatpush1.bf16.msra.mxu0 0
          %1916 = vmatprep.subr.bf16.mxu0 0
          %1917 = vmatpush1.bf16.msra.mxu0 0
          %1918 = vmatprep.subr.bf16.mxu0 0
          %1919 = vmatpush1.bf16.msra.mxu0 0
          %1920 = vmatprep.subr.bf16.mxu0 0
          %1921 = vmatpush1.bf16.msra.mxu0 0
          %1922 = vmatprep.subr.bf16.mxu0 0
          %1923 = vmatpush1.bf16.msra.mxu0 0
          %1924 = vmatprep.subr.bf16.mxu0 0
          %1925 = vmatpush1.bf16.msra.mxu0 0
          %1926 = vmatprep.subr.bf16.mxu0 0
          %1927 = vmatpush1.bf16.msra.mxu0 0
          %1928 = vmatprep.subr.bf16.mxu0 0
          %1929 = vmatpush1.bf16.msra.mxu0 0
          %1930 = vmatprep.mubr.bf16.mxu0 0
          %1931 = vmatmul.mubr.bf16.gmra.mrb[0].mxu0 %v1678
          %v1932 = vpop.f32.mrb[0].mxu0
          %v1933 = vadd.f32 %v1721, %v1932
          %v1934 = vpop.f32.mrb[0].mxu0
          %v1935 = vadd.f32 %v1725, %v1934
          %v1936 = vpop.f32.mrb[0].mxu0
          %v1937 = vpop.f32.mrb[0].mxu0
          %1938 = vdwg.mxu0
          %1939 = vmatprep.subr.bf16.mxu0 %v1837
          %1940 = vmatpush1.bf16.msra.mxu0 %v1836
          %1941 = vmatprep.subr.bf16.mxu0 %v1841
          %1942 = vmatpush1.bf16.msra.mxu0 %v1840
          %1943 = vmatprep.subr.bf16.mxu0 %v1845
          %1944 = vmatpush1.bf16.msra.mxu0 %v1844
          %1945 = vmatprep.subr.bf16.mxu0 %v1849
          %1946 = vmatpush1.bf16.msra.mxu0 %v1848
          %1947 = vmatprep.subr.bf16.mxu0 %v1853
          %1948 = vmatpush1.bf16.msra.mxu0 %v1852
          %1949 = vmatprep.subr.bf16.mxu0 %v1857
          %1950 = vmatpush1.bf16.msra.mxu0 %v1856
          %1951 = vmatprep.subr.bf16.mxu0 %v1861
          %1952 = vmatpush1.bf16.msra.mxu0 %v1860
          %1953 = vmatprep.subr.bf16.mxu0 %v1865
          %1954 = vmatpush1.bf16.msra.mxu0 %v1864
          %1955 = vmatprep.subr.bf16.mxu0 0
          %1956 = vmatpush1.bf16.msra.mxu0 0
          %1957 = vmatprep.subr.bf16.mxu0 0
          %1958 = vmatpush1.bf16.msra.mxu0 0
          %1959 = vmatprep.subr.bf16.mxu0 0
          %1960 = vmatpush1.bf16.msra.mxu0 0
          %1961 = vmatprep.subr.bf16.mxu0 0
          %1962 = vmatpush1.bf16.msra.mxu0 0
          %1963 = vmatprep.subr.bf16.mxu0 0
          %1964 = vmatpush1.bf16.msra.mxu0 0
          %1965 = vmatprep.subr.bf16.mxu0 0
          %1966 = vmatpush1.bf16.msra.mxu0 0
          %1967 = vmatprep.subr.bf16.mxu0 0
          %1968 = vmatpush1.bf16.msra.mxu0 0
          %1969 = vmatprep.subr.bf16.mxu0 0
          %1970 = vmatpush1.bf16.msra.mxu0 0
          %1971 = vmatprep.mubr.bf16.mxu0 0
          %1972 = vmatmul.mubr.bf16.gmra.mrb[0].mxu0 %v1678
          %v1973 = vpop.f32.mrb[0].mxu0
          %v1974 = vadd.f32 %v1729, %v1973
          %v1975 = vpop.f32.mrb[0].mxu0
          %v1976 = vadd.f32 %v1733, %v1975
          %v1977 = vpop.f32.mrb[0].mxu0
          %v1978 = vpop.f32.mrb[0].mxu0
          %1979 = vdwg.mxu0
          %v1980 = vmul.f32 %v1933, 0.5
          %v1981 = vmul.f32 %v1935, 0.5
          %v1982 = vmul.f32 %v1974, 0.5
          %v1983 = vmul.f32 %v1976, 0.5
          %v1984 = vmul.f32 %v1933, 0.70710677
          %v1985 = vmul.f32 %v1935, 0.70710677
          %v1986 = vmul.f32 %v1974, 0.70710677
          %v1987 = vmul.f32 %v1976, 0.70710677
          %vm1988 = vcmp.ge.f32.partialorder %v1984, 0.0
          %vm1989 = vcmp.ge.f32.partialorder %v1985, 0.0
          %vm1990 = vcmp.ge.f32.partialorder %v1986, 0.0
          %vm1991 = vcmp.ge.f32.partialorder %v1987, 0.0
          %v1992 = vsel %vm1988, 1.0, -1.0
          %v1993 = vsel %vm1989, 1.0, -1.0
          %v1994 = vsel %vm1990, 1.0, -1.0
          %v1995 = vsel %vm1991, 1.0, -1.0
          %v1996 = vand.u32 2147483647, %v1984
          %v1997 = vand.u32 2147483647, %v1985
          %v1998 = vand.u32 2147483647, %v1986
          %v1999 = vand.u32 2147483647, %v1987
          %v2000 = vmul.f32 %v1996, 0.3275911
          %v2001 = vmul.f32 %v1997, 0.3275911
          %v2002 = vmul.f32 %v1998, 0.3275911
          %v2003 = vmul.f32 %v1999, 0.3275911
          %v2004 = vadd.f32 %v2000, 1.0
          %v2005 = vadd.f32 %v2001, 1.0
          %v2006 = vadd.f32 %v2002, 1.0
          %v2007 = vadd.f32 %v2003, 1.0
          %v2008 = vrcp.pop %v2004
          %v2009 = vmul.f32 1.0, %v2008
          %v2010 = vrcp.pop %v2005
          %v2011 = vmul.f32 1.0, %v2010
          %v2012 = vrcp.pop %v2006
          %v2013 = vmul.f32 1.0, %v2012
          %v2014 = vrcp.pop %v2007
          %v2015 = vmul.f32 1.0, %v2014
          %v2016 = vmul.f32 %v2009, 1.0614054
          %v2017 = vmul.f32 %v2011, 1.0614054
          %v2018 = vmul.f32 %v2013, 1.0614054
          %v2019 = vmul.f32 %v2015, 1.0614054
          %v2020 = vadd.f32 %v2016, -1.4531521
          %v2021 = vadd.f32 %v2017, -1.4531521
          %v2022 = vadd.f32 %v2018, -1.4531521
          %v2023 = vadd.f32 %v2019, -1.4531521
          %v2024 = vmul.f32 %v2020, %v2009
          %v2025 = vmul.f32 %v2021, %v2011
          %v2026 = vmul.f32 %v2022, %v2013
          %v2027 = vmul.f32 %v2023, %v2015
          %v2028 = vadd.f32 %v2024, 1.4214138
          %v2029 = vadd.f32 %v2025, 1.4214138
          %v2030 = vadd.f32 %v2026, 1.4214138
          %v2031 = vadd.f32 %v2027, 1.4214138
          %v2032 = vmul.f32 %v2028, %v2009
          %v2033 = vmul.f32 %v2029, %v2011
          %v2034 = vmul.f32 %v2030, %v2013
          %v2035 = vmul.f32 %v2031, %v2015
          %v2036 = vadd.f32 %v2032, -0.28449672
          %v2037 = vadd.f32 %v2033, -0.28449672
          %v2038 = vadd.f32 %v2034, -0.28449672
          %v2039 = vadd.f32 %v2035, -0.28449672
          %v2040 = vmul.f32 %v2036, %v2009
          %v2041 = vmul.f32 %v2037, %v2011
          %v2042 = vmul.f32 %v2038, %v2013
          %v2043 = vmul.f32 %v2039, %v2015
          %v2044 = vadd.f32 %v2040, 0.2548296
          %v2045 = vadd.f32 %v2041, 0.2548296
          %v2046 = vadd.f32 %v2042, 0.2548296
          %v2047 = vadd.f32 %v2043, 0.2548296
          %v2048 = vmul.f32 %v2044, %v2009
          %v2049 = vmul.f32 %v2045, %v2011
          %v2050 = vmul.f32 %v2046, %v2013
          %v2051 = vmul.f32 %v2047, %v2015
          %v2052 = vsub.f32 0.0, %v1996
          %v2053 = vsub.f32 0.0, %v1997
          %v2054 = vsub.f32 0.0, %v1998
          %v2055 = vsub.f32 0.0, %v1999
          %v2056 = vmul.f32 %v2052, %v1996
          %v2057 = vmul.f32 %v2053, %v1997
          %v2058 = vmul.f32 %v2054, %v1998
          %v2059 = vmul.f32 %v2055, %v1999
          %v2060 = vmul.f32 %v2056, 1.442695
          %v2061 = vpow.pop %v2060
          %v2062 = vmul.f32 %v2057, 1.442695
          %v2063 = vpow.pop %v2062
          %v2064 = vmul.f32 %v2058, 1.442695
          %v2065 = vpow.pop %v2064
          %v2066 = vmul.f32 %v2059, 1.442695
          %v2067 = vpow.pop %v2066
          %v2068 = vmul.f32 %v2048, %v2061
          %v2069 = vmul.f32 %v2049, %v2063
          %v2070 = vmul.f32 %v2050, %v2065
          %v2071 = vmul.f32 %v2051, %v2067
          %v2072 = vsub.f32 1.0, %v2068
          %v2073 = vsub.f32 1.0, %v2069
          %v2074 = vsub.f32 1.0, %v2070
          %v2075 = vsub.f32 1.0, %v2071
          %v2076 = vmul.f32 %v1992, %v2072
          %v2077 = vmul.f32 %v1993, %v2073
          %v2078 = vmul.f32 %v1994, %v2074
          %v2079 = vmul.f32 %v1995, %v2075
          %v2080 = vadd.f32 %v2076, 1.0
          %v2081 = vadd.f32 %v2077, 1.0
          %v2082 = vadd.f32 %v2078, 1.0
          %v2083 = vadd.f32 %v2079, 1.0
          %v2084 = vmul.f32 %v1980, %v2080
          %v2085 = vmul.f32 %v1981, %v2081
          %v2086 = vmul.f32 %v1982, %v2082
          %v2087 = vmul.f32 %v1983, %v2083
          %v2088 = vpack.c.bf16 %v2084, %v2084
          %v2089 = vpack.c.bf16 %v2085, %v2085
          %v2090 = vpack.c.bf16 %v2086, %v2086
          %v2091 = vpack.c.bf16 %v2087, %v2087
          %s2092 = smul.addr %s1679, 4
          %s2093 = scalar_lea.vmem [#allocation7], %s2092
          %v2094 = vld [vmem:[%s2093] sm:$0xf]
          %v2095 = vld [vmem:[%s2093 + $0x4] sm:$0xf]
          %v2096 = vld [vmem:[%s2093 + $0x8] sm:$0xf]
          %v2097 = vld [vmem:[%s2093 + $0xc] sm:$0xf]
          %v2098 = vld [vmem:[%s2093 + $0x10] sm:$0xf]
          %v2099 = vld [vmem:[%s2093 + $0x14] sm:$0xf]
          %v2100 = vld [vmem:[%s2093 + $0x18] sm:$0xf]
          %v2101 = vld [vmem:[%s2093 + $0x1c] sm:$0xf]
          %v2102 = vld [vmem:[%s2093 + $0x20] sm:$0xf]
          %v2103 = vld [vmem:[%s2093 + $0x24] sm:$0xf]
          %v2104 = vld [vmem:[%s2093 + $0x28] sm:$0xf]
          %v2105 = vld [vmem:[%s2093 + $0x2c] sm:$0xf]
          %v2106 = vld [vmem:[%s2093 + $0x30] sm:$0xf]
          %v2107 = vld [vmem:[%s2093 + $0x34] sm:$0xf]
          %v2108 = vld [vmem:[%s2093 + $0x38] sm:$0xf]
          %v2109 = vld [vmem:[%s2093 + $0x3c] sm:$0xf]
          %v2110 = vld [vmem:[%s2093 + $0x40] sm:$0xf]
          %v2111 = vld [vmem:[%s2093 + $0x44] sm:$0xf]
          %v2112 = vld [vmem:[%s2093 + $0x48] sm:$0xf]
          %v2113 = vld [vmem:[%s2093 + $0x4c] sm:$0xf]
          %v2114 = vld [vmem:[%s2093 + $0x50] sm:$0xf]
          %v2115 = vld [vmem:[%s2093 + $0x54] sm:$0xf]
          %v2116 = vld [vmem:[%s2093 + $0x58] sm:$0xf]
          %v2117 = vld [vmem:[%s2093 + $0x5c] sm:$0xf]
          %v2118 = vld [vmem:[%s2093 + $0x60] sm:$0xf]
          %v2119 = vld [vmem:[%s2093 + $0x64] sm:$0xf]
          %v2120 = vld [vmem:[%s2093 + $0x68] sm:$0xf]
          %v2121 = vld [vmem:[%s2093 + $0x6c] sm:$0xf]
          %v2122 = vld [vmem:[%s2093 + $0x70] sm:$0xf]
          %v2123 = vld [vmem:[%s2093 + $0x74] sm:$0xf]
          %v2124 = vld [vmem:[%s2093 + $0x78] sm:$0xf]
          %v2125 = vld [vmem:[%s2093 + $0x7c] sm:$0xf]
          %v2126 = vld [vmem:[%s2093 + $0x80] sm:$0xf]
          %v2127 = vld [vmem:[%s2093 + $0x84] sm:$0xf]
          %v2128 = vld [vmem:[%s2093 + $0x88] sm:$0xf]
          %v2129 = vld [vmem:[%s2093 + $0x8c] sm:$0xf]
          %v2130 = vld [vmem:[%s2093 + $0x90] sm:$0xf]
          %v2131 = vld [vmem:[%s2093 + $0x94] sm:$0xf]
          %v2132 = vld [vmem:[%s2093 + $0x98] sm:$0xf]
          %v2133 = vld [vmem:[%s2093 + $0x9c] sm:$0xf]
          %v2134 = vld [vmem:[%s2093 + $0xa0] sm:$0xf]
          %v2135 = vld [vmem:[%s2093 + $0xa4] sm:$0xf]
          %v2136 = vld [vmem:[%s2093 + $0xa8] sm:$0xf]
          %v2137 = vld [vmem:[%s2093 + $0xac] sm:$0xf]
          %v2138 = vld [vmem:[%s2093 + $0xb0] sm:$0xf]
          %v2139 = vld [vmem:[%s2093 + $0xb4] sm:$0xf]
          %v2140 = vld [vmem:[%s2093 + $0xb8] sm:$0xf]
          %v2141 = vld [vmem:[%s2093 + $0xbc] sm:$0xf]
          %v2142 = vld [vmem:[%s2093 + $0xc0] sm:$0xf]
          %v2143 = vld [vmem:[%s2093 + $0xc4] sm:$0xf]
          %v2144 = vld [vmem:[%s2093 + $0xc8] sm:$0xf]
          %v2145 = vld [vmem:[%s2093 + $0xcc] sm:$0xf]
          %v2146 = vld [vmem:[%s2093 + $0xd0] sm:$0xf]
          %v2147 = vld [vmem:[%s2093 + $0xd4] sm:$0xf]
          %v2148 = vld [vmem:[%s2093 + $0xd8] sm:$0xf]
          %v2149 = vld [vmem:[%s2093 + $0xdc] sm:$0xf]
          %v2150 = vld [vmem:[%s2093 + $0xe0] sm:$0xf]
          %v2151 = vld [vmem:[%s2093 + $0xe4] sm:$0xf]
          %v2152 = vld [vmem:[%s2093 + $0xe8] sm:$0xf]
          %v2153 = vld [vmem:[%s2093 + $0xec] sm:$0xf]
          %v2154 = vld [vmem:[%s2093 + $0xf0] sm:$0xf]
          %v2155 = vld [vmem:[%s2093 + $0xf4] sm:$0xf]
          %v2156 = vld [vmem:[%s2093 + $0xf8] sm:$0xf]
          %v2157 = vld [vmem:[%s2093 + $0xfc] sm:$0xf]
          %s2158 = scalar_lea.vmem %s14, %s648
          %v2159 = vld [vmem:[%s2158] sm:$0x1]
          %v2161 = vlaneseq
          %v2162 = vshrl.u32 %v2161, 7
          %v2163 = vsub.s32 0, %v2162
          %v2164 = vrot.slane %v2159, %v2163
          %v2230 = vunpack.c.l.b16 %v2094
          %v2231 = vunpack.c.l.b16 %v2095
          %v2232 = vunpack.c.l.b16 %v2096
          %v2233 = vunpack.c.l.b16 %v2097
          %v2234 = vunpack.c.l.b16 %v2098
          %v2235 = vunpack.c.l.b16 %v2099
          %v2236 = vunpack.c.l.b16 %v2100
          %v2237 = vunpack.c.l.b16 %v2101
          %v2238 = vunpack.c.l.b16 %v2102
          %v2239 = vunpack.c.l.b16 %v2103
          %v2240 = vunpack.c.l.b16 %v2104
          %v2241 = vunpack.c.l.b16 %v2105
          %v2242 = vunpack.c.l.b16 %v2106
          %v2243 = vunpack.c.l.b16 %v2107
          %v2244 = vunpack.c.l.b16 %v2108
          %v2245 = vunpack.c.l.b16 %v2109
          %v2246 = vunpack.c.l.b16 %v2110
          %v2247 = vunpack.c.l.b16 %v2111
          %v2248 = vunpack.c.l.b16 %v2112
          %v2249 = vunpack.c.l.b16 %v2113
          %v2250 = vunpack.c.l.b16 %v2114
          %v2251 = vunpack.c.l.b16 %v2115
          %v2252 = vunpack.c.l.b16 %v2116
          %v2253 = vunpack.c.l.b16 %v2117
          %v2254 = vunpack.c.l.b16 %v2118
          %v2255 = vunpack.c.l.b16 %v2119
          %v2256 = vunpack.c.l.b16 %v2120
          %v2257 = vunpack.c.l.b16 %v2121
          %v2258 = vunpack.c.l.b16 %v2122
          %v2259 = vunpack.c.l.b16 %v2123
          %v2260 = vunpack.c.l.b16 %v2124
          %v2261 = vunpack.c.l.b16 %v2125
          %v2262 = vunpack.c.l.b16 %v2126
          %v2263 = vunpack.c.l.b16 %v2127
          %v2264 = vunpack.c.l.b16 %v2128
          %v2265 = vunpack.c.l.b16 %v2129
          %v2266 = vunpack.c.l.b16 %v2130
          %v2267 = vunpack.c.l.b16 %v2131
          %v2268 = vunpack.c.l.b16 %v2132
          %v2269 = vunpack.c.l.b16 %v2133
          %v2270 = vunpack.c.l.b16 %v2134
          %v2271 = vunpack.c.l.b16 %v2135
          %v2272 = vunpack.c.l.b16 %v2136
          %v2273 = vunpack.c.l.b16 %v2137
          %v2274 = vunpack.c.l.b16 %v2138
          %v2275 = vunpack.c.l.b16 %v2139
          %v2276 = vunpack.c.l.b16 %v2140
          %v2277 = vunpack.c.l.b16 %v2141
          %v2278 = vunpack.c.l.b16 %v2142
          %v2279 = vunpack.c.l.b16 %v2143
          %v2280 = vunpack.c.l.b16 %v2144
          %v2281 = vunpack.c.l.b16 %v2145
          %v2282 = vunpack.c.l.b16 %v2146
          %v2283 = vunpack.c.l.b16 %v2147
          %v2284 = vunpack.c.l.b16 %v2148
          %v2285 = vunpack.c.l.b16 %v2149
          %v2286 = vunpack.c.l.b16 %v2150
          %v2287 = vunpack.c.l.b16 %v2151
          %v2288 = vunpack.c.l.b16 %v2152
          %v2289 = vunpack.c.l.b16 %v2153
          %v2290 = vunpack.c.l.b16 %v2154
          %v2291 = vunpack.c.l.b16 %v2155
          %v2292 = vunpack.c.l.b16 %v2156
          %v2293 = vunpack.c.l.b16 %v2157
          %v2294 = vpack.c.b16 %v2231, %v2230
          %v2295 = vpack.c.b16 %v2233, %v2232
          %v2296 = vpack.c.b16 %v2235, %v2234
          %v2297 = vpack.c.b16 %v2237, %v2236
          %v2298 = vpack.c.b16 %v2239, %v2238
          %v2299 = vpack.c.b16 %v2241, %v2240
          %v2300 = vpack.c.b16 %v2243, %v2242
          %v2301 = vpack.c.b16 %v2245, %v2244
          %v2302 = vpack.c.b16 %v2247, %v2246
          %v2303 = vpack.c.b16 %v2249, %v2248
          %v2304 = vpack.c.b16 %v2251, %v2250
          %v2305 = vpack.c.b16 %v2253, %v2252
          %v2306 = vpack.c.b16 %v2255, %v2254
          %v2307 = vpack.c.b16 %v2257, %v2256
          %v2308 = vpack.c.b16 %v2259, %v2258
          %v2309 = vpack.c.b16 %v2261, %v2260
          %v2310 = vpack.c.b16 %v2263, %v2262
          %v2311 = vpack.c.b16 %v2265, %v2264
          %v2312 = vpack.c.b16 %v2267, %v2266
          %v2313 = vpack.c.b16 %v2269, %v2268
          %v2314 = vpack.c.b16 %v2271, %v2270
          %v2315 = vpack.c.b16 %v2273, %v2272
          %v2316 = vpack.c.b16 %v2275, %v2274
          %v2317 = vpack.c.b16 %v2277, %v2276
          %v2318 = vpack.c.b16 %v2279, %v2278
          %v2319 = vpack.c.b16 %v2281, %v2280
          %v2320 = vpack.c.b16 %v2283, %v2282
          %v2321 = vpack.c.b16 %v2285, %v2284
          %v2322 = vpack.c.b16 %v2287, %v2286
          %v2323 = vpack.c.b16 %v2289, %v2288
          %v2324 = vpack.c.b16 %v2291, %v2290
          %v2325 = vpack.c.b16 %v2293, %v2292
          %2358 = vmatprep.subr.bf16.mxu0 0
          %2359 = vmatpush1.bf16.msra.mxu0 %v2294
          %2360 = vmatprep.subr.bf16.mxu0 0
          %2361 = vmatpush1.bf16.msra.mxu0 %v2295
          %2362 = vmatprep.subr.bf16.mxu0 0
          %2363 = vmatpush1.bf16.msra.mxu0 %v2296
          %2364 = vmatprep.subr.bf16.mxu0 0
          %2365 = vmatpush1.bf16.msra.mxu0 %v2297
          %2366 = vmatprep.subr.bf16.mxu0 0
          %2367 = vmatpush1.bf16.msra.mxu0 %v2298
          %2368 = vmatprep.subr.bf16.mxu0 0
          %2369 = vmatpush1.bf16.msra.mxu0 %v2299
          %2370 = vmatprep.subr.bf16.mxu0 0
          %2371 = vmatpush1.bf16.msra.mxu0 %v2300
          %2372 = vmatprep.subr.bf16.mxu0 0
          %2373 = vmatpush1.bf16.msra.mxu0 %v2301
          %2374 = vmatprep.subr.bf16.mxu0 0
          %2375 = vmatpush1.bf16.msra.mxu0 %v2302
          %2376 = vmatprep.subr.bf16.mxu0 0
          %2377 = vmatpush1.bf16.msra.mxu0 %v2303
          %2378 = vmatprep.subr.bf16.mxu0 0
          %2379 = vmatpush1.bf16.msra.mxu0 %v2304
          %2380 = vmatprep.subr.bf16.mxu0 0
          %2381 = vmatpush1.bf16.msra.mxu0 %v2305
          %2382 = vmatprep.subr.bf16.mxu0 0
          %2383 = vmatpush1.bf16.msra.mxu0 %v2306
          %2384 = vmatprep.subr.bf16.mxu0 0
          %2385 = vmatpush1.bf16.msra.mxu0 %v2307
          %2386 = vmatprep.subr.bf16.mxu0 0
          %2387 = vmatpush1.bf16.msra.mxu0 %v2308
          %2388 = vmatprep.subr.bf16.mxu0 0
          %2389 = vmatpush1.bf16.msra.mxu0 %v2309
          %2390 = vmatprep.mubr.bf16.mxu0 %v2089
          %2391 = vmatmul.mubr.bf16.gmra.mrb[0].mxu0 %v2088
          %v2392 = vpop.f32.mrb[0].mxu0
          %v2393 = vadd.f32 %v2164, %v2392
          %v2394 = vpop.f32.mrb[0].mxu0
          %v2395 = vpop.f32.mrb[0].mxu0
          %v2396 = vpop.f32.mrb[0].mxu0
          %2397 = vdwg.mxu0
          %2398 = vmatprep.subr.bf16.mxu0 0
          %2399 = vmatpush1.bf16.msra.mxu0 %v2310
          %2400 = vmatprep.subr.bf16.mxu0 0
          %2401 = vmatpush1.bf16.msra.mxu0 %v2311
          %2402 = vmatprep.subr.bf16.mxu0 0
          %2403 = vmatpush1.bf16.msra.mxu0 %v2312
          %2404 = vmatprep.subr.bf16.mxu0 0
          %2405 = vmatpush1.bf16.msra.mxu0 %v2313
          %2406 = vmatprep.subr.bf16.mxu0 0
          %2407 = vmatpush1.bf16.msra.mxu0 %v2314
          %2408 = vmatprep.subr.bf16.mxu0 0
          %2409 = vmatpush1.bf16.msra.mxu0 %v2315
          %2410 = vmatprep.subr.bf16.mxu0 0
          %2411 = vmatpush1.bf16.msra.mxu0 %v2316
          %2412 = vmatprep.subr.bf16.mxu0 0
          %2413 = vmatpush1.bf16.msra.mxu0 %v2317
          %2414 = vmatprep.subr.bf16.mxu0 0
          %2415 = vmatpush1.bf16.msra.mxu0 %v2318
          %2416 = vmatprep.subr.bf16.mxu0 0
          %2417 = vmatpush1.bf16.msra.mxu0 %v2319
          %2418 = vmatprep.subr.bf16.mxu0 0
          %2419 = vmatpush1.bf16.msra.mxu0 %v2320
          %2420 = vmatprep.subr.bf16.mxu0 0
          %2421 = vmatpush1.bf16.msra.mxu0 %v2321
          %2422 = vmatprep.subr.bf16.mxu0 0
          %2423 = vmatpush1.bf16.msra.mxu0 %v2322
          %2424 = vmatprep.subr.bf16.mxu0 0
          %2425 = vmatpush1.bf16.msra.mxu0 %v2323
          %2426 = vmatprep.subr.bf16.mxu0 0
          %2427 = vmatpush1.bf16.msra.mxu0 %v2324
          %2428 = vmatprep.subr.bf16.mxu0 0
          %2429 = vmatpush1.bf16.msra.mxu0 %v2325
          %2430 = vmatprep.mubr.bf16.mxu0 %v2091
          %2431 = vmatmul.mubr.bf16.gmra.mrb[0].mxu0 %v2090
          %v2432 = vpop.f32.mrb[0].mxu0
          %v2433 = vadd.f32 %v2393, %v2432
          %v2434 = vpop.f32.mrb[0].mxu0
          %v2435 = vpop.f32.mrb[0].mxu0
          %v2436 = vpop.f32.mrb[0].mxu0
          %2437 = vdwg.mxu0
          %v2438 = vadd.f32 %v1648, %v2433
        $region113: #{transformer_lm_forward.1} parent=95 // loop_footer
          %s652 = sadd.s32 1, %s648
        $region114: #{transformer_lm_forward.1} parent=95 // loop_footer_branch
          %647 = sbr.rel target = $region110
        $region115: #{transformer_lm_forward.1} parent=95 // loop_exit
          _
        %v2439 = vld [vmem:[%s15] sm:$0x1]
        %v2440 = vld [vmem:[%s16] sm:$0x1]
        %2441 = vadd.xlane.f32.xlu0 %v653
        %v2442 = vpop.xlane.xlu0 %2441
        %v2443 = vrcp.pop 128.0
        %v2444 = vmul.f32 %v2442, %v2443
        %v2445 = vsub.f32 %v653, %v2444
        %v2446 = vmul.f32 %v2445, %v2445
        %2447 = vadd.xlane.f32.xlu0 %v2446
        %v2448 = vpop.xlane.xlu0 %2447
        %v2449 = vmul.f32 %v2448, %v2443
        %v2450 = vadd.f32 %v2449, 1e-05
        %v2451 = vrsqrt.pop %v2450
        %v2452 = vmul.f32 %v2445, %v2451
        %v2454 = vlaneseq
        %v2455 = vshrl.u32 %v2454, 7
        %v2456 = vsub.s32 0, %v2455
        %v2457 = vrot.slane %v2439, %v2456
        %v2459 = vmul.f32 %v2452, %v2457
        %v2461 = vlaneseq
        %v2462 = vshrl.u32 %v2461, 7
        %v2463 = vsub.s32 0, %v2462
        %v2464 = vrot.slane %v2440, %v2463
        %v2466 = vadd.f32 %v2459, %v2464
        %v2467 = vpack.c.bf16 %v2466, %v2466
        %v2468 = vld [vmem:[%s17] sm:$0xf]
        %v2469 = vld [vmem:[%s17 + $0x4] sm:$0xf]
        %v2470 = vld [vmem:[%s17 + $0x8] sm:$0xf]
        %v2471 = vld [vmem:[%s17 + $0xc] sm:$0xf]
        %v2472 = vld [vmem:[%s17 + $0x10] sm:$0xf]
        %v2473 = vld [vmem:[%s17 + $0x14] sm:$0xf]
        %v2474 = vld [vmem:[%s17 + $0x18] sm:$0xf]
        %v2475 = vld [vmem:[%s17 + $0x1c] sm:$0xf]
        %v2476 = vld [vmem:[%s17 + $0x20] sm:$0xf]
        %v2477 = vld [vmem:[%s17 + $0x24] sm:$0xf]
        %v2478 = vld [vmem:[%s17 + $0x28] sm:$0xf]
        %v2479 = vld [vmem:[%s17 + $0x2c] sm:$0xf]
        %v2480 = vld [vmem:[%s17 + $0x30] sm:$0xf]
        %v2481 = vld [vmem:[%s17 + $0x34] sm:$0xf]
        %v2482 = vld [vmem:[%s17 + $0x38] sm:$0xf]
        %v2483 = vld [vmem:[%s17 + $0x3c] sm:$0xf]
        %v2484 = vld [vmem:[%s18] sm:$0x1]
        %v2486 = vlaneseq
        %v2487 = vshrl.u32 %v2486, 7
        %v2488 = vsub.s32 0, %v2487
        %v2489 = vrot.slane %v2484, %v2488
        %v2507 = vunpack.c.l.b16 %v2468
        %v2508 = vunpack.c.l.b16 %v2469
        %v2509 = vunpack.c.l.b16 %v2470
        %v2510 = vunpack.c.l.b16 %v2471
        %v2511 = vunpack.c.l.b16 %v2472
        %v2512 = vunpack.c.l.b16 %v2473
        %v2513 = vunpack.c.l.b16 %v2474
        %v2514 = vunpack.c.l.b16 %v2475
        %v2515 = vunpack.c.l.b16 %v2476
        %v2516 = vunpack.c.l.b16 %v2477
        %v2517 = vunpack.c.l.b16 %v2478
        %v2518 = vunpack.c.l.b16 %v2479
        %v2519 = vunpack.c.l.b16 %v2480
        %v2520 = vunpack.c.l.b16 %v2481
        %v2521 = vunpack.c.l.b16 %v2482
        %v2522 = vunpack.c.l.b16 %v2483
        %v2523 = vpack.c.b16 %v2508, %v2507
        %v2524 = vpack.c.b16 %v2510, %v2509
        %v2525 = vpack.c.b16 %v2512, %v2511
        %v2526 = vpack.c.b16 %v2514, %v2513
        %v2527 = vpack.c.b16 %v2516, %v2515
        %v2528 = vpack.c.b16 %v2518, %v2517
        %v2529 = vpack.c.b16 %v2520, %v2519
        %v2530 = vpack.c.b16 %v2522, %v2521
        %2539 = vmatprep.subr.bf16.mxu0 0
        %2540 = vmatpush1.bf16.msra.mxu0 %v2523
        %2541 = vmatprep.subr.bf16.mxu0 0
        %2542 = vmatpush1.bf16.msra.mxu0 %v2524
        %2543 = vmatprep.subr.bf16.mxu0 0
        %2544 = vmatpush1.bf16.msra.mxu0 %v2525
        %2545 = vmatprep.subr.bf16.mxu0 0
        %2546 = vmatpush1.bf16.msra.mxu0 %v2526
        %2547 = vmatprep.subr.bf16.mxu0 0
        %2548 = vmatpush1.bf16.msra.mxu0 %v2527
        %2549 = vmatprep.subr.bf16.mxu0 0
        %2550 = vmatpush1.bf16.msra.mxu0 %v2528
        %2551 = vmatprep.subr.bf16.mxu0 0
        %2552 = vmatpush1.bf16.msra.mxu0 %v2529
        %2553 = vmatprep.subr.bf16.mxu0 0
        %2554 = vmatpush1.bf16.msra.mxu0 %v2530
        %2555 = vmatprep.subr.bf16.mxu0 0
        %2556 = vmatpush1.bf16.msra.mxu0 0
        %2557 = vmatprep.subr.bf16.mxu0 0
        %2558 = vmatpush1.bf16.msra.mxu0 0
        %2559 = vmatprep.subr.bf16.mxu0 0
        %2560 = vmatpush1.bf16.msra.mxu0 0
        %2561 = vmatprep.subr.bf16.mxu0 0
        %2562 = vmatpush1.bf16.msra.mxu0 0
        %2563 = vmatprep.subr.bf16.mxu0 0
        %2564 = vmatpush1.bf16.msra.mxu0 0
        %2565 = vmatprep.subr.bf16.mxu0 0
        %2566 = vmatpush1.bf16.msra.mxu0 0
        %2567 = vmatprep.subr.bf16.mxu0 0
        %2568 = vmatpush1.bf16.msra.mxu0 0
        %2569 = vmatprep.subr.bf16.mxu0 0
        %2570 = vmatpush1.bf16.msra.mxu0 0
        %2571 = vmatprep.mubr.bf16.mxu0 0
        %2572 = vmatmul.mubr.bf16.gmra.mrb[0].mxu0 %v2467
        %v2573 = vpop.f32.mrb[0].mxu0
        %v2574 = vadd.f32 %v2489, %v2573
        %v2575 = vpop.f32.mrb[0].mxu0
        %v2576 = vpop.f32.mrb[0].mxu0
        %v2577 = vpop.f32.mrb[0].mxu0
        %2578 = vdwg.mxu0
        %2579 = vst [vmem:[%s637] sm:$0xff] %v2574
        %s2580 = sand.u32 %s447, 1
        %s2581 = scalar_lea.sflag [#allocation4], %s2580
        %s2582 = sand.u32 %s447, 1
        %s2583 = smul.addr %s2582, 8
        %s2584 = scalar_lea.vmem [#allocation8], %s2583
        // Predicated region
        $region116: #{transformer_lm_forward.1} parent=95 // pred_check
          %p2585 = pneg %p457
        $region117: #{transformer_lm_forward.1} parent=95 // pred_check_branch
          %2587 = sbr.rel (%p2585) target = $region119
        $region118: #{transformer_lm_forward.1} parent=95 // pred_region
          %s2589 = ssub.s32 128, 128
          %2590 = vsyncadd %s2581, %s2589
          %s2591 = smul.addr %s35, 128
          %s2592 = scalar_lea.hbm %s19, %s2591
          %s2594 = sshll.u32 %s2584, 4
          %s2595 = int_to_ptr.vmem [resolvable:$true] %s2594
          %2597 = dma.vmem_to_hbm [thread:$0]  %s2595, 128, %s2592, %s2581
        $region119: #{transformer_lm_forward.1} parent=95 // pred_fallthru
          _
      $region96: #{transformer_lm_forward.1} parent=5 // pred_fallthru
        _
      %p2598 = scmp.le.s32.totalorder 2, %s30
      // Predicated region
      $region120: #{transformer_lm_forward.1} parent=5 // pred_check
        %p2599 = pneg %p2598
      $region121: #{transformer_lm_forward.1} parent=5 // pred_check_branch
        %2601 = sbr.rel (%p2599) target = $region123
      $region122: #{transformer_lm_forward.1} parent=5 // pred_region
        %s2602 = ssub.s32 %s30, 2
        // Predicated region
        $region124: #{transformer_lm_forward.1} parent=122 // pred_check
          %p2603 = pneg %p463
        $region125: #{transformer_lm_forward.1} parent=122 // pred_check_branch
          %2605 = sbr.rel (%p2603) target = $region127
        $region126: #{transformer_lm_forward.1} parent=122 // pred_region
          %s2606 = sand.u32 %s448, 1
          %s2607 = scalar_lea.sflag [#allocation4], %s2606
          %s2608 = sand.u32 %s448, 1
          %s2609 = smul.addr %s2608, 8
          %s2610 = scalar_lea.vmem [#allocation8], %s2609
          %2611 = dma.done %s2607, 128
        $region127: #{transformer_lm_forward.1} parent=122 // pred_fallthru
          _
      $region123: #{transformer_lm_forward.1} parent=5 // pred_fallthru
        _
    $region6: #{transformer_lm_forward.1} parent=1 // loop_footer
      %s34 = sadd.s32 1, %s30
    $region7: #{transformer_lm_forward.1} parent=1 // loop_footer_branch
      %29 = sbr.rel target = $region3
    $region8: #{transformer_lm_forward.1} parent=1 // loop_exit
      _
    %2612 = vsyncpa [#allocation3], 1
    %s2613 = scalar_lea.sflag [#allocation3], 1
    %2614 = vsyncpa %s2613, 1
    %2615 = vsyncpa [#allocation6], 1
    %2616 = vsyncpa [#allocation4], 1
    %s2617 = scalar_lea.sflag [#allocation4], 1
    %2618 = vsyncpa %s2617, 1

</llo_original>
